<compile_context>
chip_gen: v5e
topology: v5e:2x2
jax: 0.10.0
libtpu: 0.0.40
codegen_flags: <defaults>
</compile_context>

<pallas_src>
import jax
import jax.numpy as jnp
from jax.experimental import pallas as pl
from jax.experimental.pallas import tpu as pltpu

# ---------------------------------------------------------------------------
# Model definition (feature sizes of the 7 Linear layers)
# ---------------------------------------------------------------------------
LAYER_SIZES = [2, 512, 256, 128, 64, 32, 16, 1]
NEG_SLOPE = 0.01  # nn.LeakyReLU default


def _leaky_relu(x):
    return jnp.where(x > 0, x, NEG_SLOPE * x)


def _round_up(n, m):
    return ((n + m - 1) // m) * m


# ---------------------------------------------------------------------------
# Kernel: entire MLP for one batch tile.
# ---------------------------------------------------------------------------
def discriminator_kernel(x_ref,
                         w1, b1, w2, b2, w3, b3, w4, b4, w5, b5, w6, b6,
                         w7, b7,
                         out_ref):
    """One batch tile of the full MLP.

    x_ref:   (bt, 2)    f32
    w1:      (2, 512)   f32   (single K=2 MXU pass)
    w2..w6:  (in, out)  bf16  (MXU path, f32 accumulation)
    w7:      (16, 1)    f32   (VPU/XLU path)
    b*:      (1, out)   f32
    out_ref: (1, bt)    f32   lane-dense row of probabilities
    """
    x = x_ref[...].astype(jnp.float32)                       # (bt, 2)

    # ---- Layer 1: Linear(2, 512). One underfilled K=2 MXU pass; negligible
    # at batch_tile >= 1024 and avoids a width-1 lane-broadcast on the VPU.
    h = jnp.dot(x, w1[...], preferred_element_type=jnp.float32) + b1[...]
    h = _leaky_relu(h)
    # Dropout(0.3): identity in eval mode.
    # TODO(synk): training-mode dropout (pltpu.prng_seed + stateful_bernoulli
    # + 1/(1-p) scale) omitted; PyTorch RNG bit-exactness is not reproducible.

    # ---- Layers 2..6: bf16 MXU matmuls, f32 accumulation, f32 activations.
    for w_ref, b_ref in ((w2, b2), (w3, b3), (w4, b4), (w5, b5), (w6, b6)):
        h = jnp.dot(h.astype(jnp.bfloat16), w_ref[...],
                    preferred_element_type=jnp.float32) + b_ref[...]
        h = _leaky_relu(h)
    # TODO(synk): on v6e/v7x the bias+LeakyReLU epilogue could run in bf16
    # (bf16 VALU) for a minor VALU/VMEM saving; kept f32 for portability (v5e).

    # ---- Layer 7: Linear(16, 1) + Sigmoid on VPU/XLU (avoid an N=1 MXU
    # matmul) emitted directly as a lane-dense (1, bt) row.
    ht = jnp.transpose(h)                                            # (16, bt)
    logit = jnp.sum(ht * w7[...], axis=0, keepdims=True) + b7[...]   # (1, bt)
    out_ref[...] = jax.nn.sigmoid(logit).astype(out_ref.dtype)


# ---------------------------------------------------------------------------
# Parameter preparation (hoists per-call dtype casts out of the forward path)
# ---------------------------------------------------------------------------
def prepare_params(params):
    """params: list of 7 (W (in,out) f32, b (1,out) f32) -> flat tuple of 14
    arrays in their final kernel dtypes (cast once, reuse across calls)."""
    assert len(params) == len(LAYER_SIZES) - 1
    flat = []
    for li, (w, b) in enumerate(params):
        if 1 <= li <= 5:
            w = w.astype(jnp.bfloat16)          # middle layers -> MXU bf16
        else:
            w = w.astype(jnp.float32)           # layer 1 (MXU f32) / layer 7 (VPU)
        flat.extend([w, jnp.asarray(b, jnp.float32).reshape(1, -1)])
    return tuple(flat)


def _vmem_limit_bytes(batch_tile, flat_params):
    """Conservative scoped-VMEM budget so large tiles don't hit v5e's 16 MiB
    default; capped at 48 MiB to stay inside v7x's 64 MiB physical VMEM."""
    param_bytes = sum(p.size * p.dtype.itemsize for p in flat_params)
    per_row = sum(fout * (4 + 2) for fout in LAYER_SIZES[1:])   # f32 act + bf16 copy
    act_bytes = batch_tile * per_row
    io_bytes = 2 * (batch_tile * LAYER_SIZES[0] * 4) + 2 * (batch_tile * 4)
    est = 2 * param_bytes + act_bytes + io_bytes                # params double-buffered
    return int(min(48 << 20, max(32 << 20, (3 * est) // 2)))


# ---------------------------------------------------------------------------
# Wrapper
# ---------------------------------------------------------------------------
def discriminator_forward(x, flat_params, *, batch_tile=1024):
    """x: (B, 2) float32.  flat_params: output of prepare_params().

    batch_tile: 1024-2048 recommended on v6e/v7x, 512-1024 on v5e; must be a
    multiple of 128.  The effective tile is clamped so the grid stays >= 2
    (even) when B allows it, keeping both v7x TensorCores busy.
    """
    B, f_in = x.shape
    assert f_in == LAYER_SIZES[0]
    assert len(flat_params) == 2 * (len(LAYER_SIZES) - 1)
    assert batch_tile % 128 == 0, "batch_tile must be a multiple of 128"

    # Largest tile that still leaves an even, >=2 grid (megacore sharding),
    # but never larger than the requested batch_tile.
    eff_tile = min(batch_tile, max(128, _round_up(pl.cdiv(B, 2), 128)))
    num_tiles = pl.cdiv(B, eff_tile)
    b_pad = num_tiles * eff_tile
    if b_pad != B:
        x = jnp.pad(x, ((0, b_pad - B), (0, 0)))

    in_specs = [pl.BlockSpec((eff_tile, f_in), lambda i: (i, 0))]
    for p in flat_params:
        # Whole parameter resident in VMEM with a constant block index, so the
        # pipeline does not re-DMA it between grid steps.  (pl.Buffered(1)
        # would drop the unused second buffer, ~0.35 MiB; left at the default
        # for lowering robustness.)
        in_specs.append(pl.BlockSpec(p.shape, lambda i: (0, 0)))

    out_row = pl.pallas_call(
        discriminator_kernel,
        out_shape=jax.ShapeDtypeStruct((1, b_pad), jnp.float32),
        grid_spec=pltpu.PrefetchScalarGridSpec(
            num_scalar_prefetch=0,
            grid=(num_tiles,),
            in_specs=in_specs,
            out_specs=pl.BlockSpec((1, eff_tile), lambda i: (0, i)),
        ),
        compiler_params=pltpu.CompilerParams(
            dimension_semantics=("parallel",),
            vmem_limit_bytes=_vmem_limit_bytes(eff_tile, flat_params),
        ),
    )(x, *flat_params)

    return out_row.reshape(b_pad, 1)[:B]


# ---------------------------------------------------------------------------
# Deterministic parameter init (PyTorch nn.Linear default: U(-k, k),
# k = 1/sqrt(fan_in), for both weight and bias).
# ---------------------------------------------------------------------------
def init_params(key):
    params = []
    for fin, fout in zip(LAYER_SIZES[:-1], LAYER_SIZES[1:]):
        key, kw, kb = jax.random.split(key, 3)
        bound = 1.0 / jnp.sqrt(jnp.float32(fin))
        w = jax.random.uniform(kw, (fin, fout), jnp.float32, -bound, bound)
        b = jax.random.uniform(kb, (1, fout), jnp.float32, -bound, bound)
        params.append((w, b))
    return params


# ---------------------------------------------------------------------------
# Pure-JAX f32 reference.
# ---------------------------------------------------------------------------
def reference_forward(x, params):
    h = x
    for li, (w, b) in enumerate(params):
        h = h @ w + b
        if li < len(params) - 1:
            h = _leaky_relu(h)
    return jax.nn.sigmoid(h)


if __name__ == "__main__":
    key = jax.random.PRNGKey(0)
    key, kx = jax.random.split(key)

    B = 512  # small demo batch -> two 256-row tiles (grid of 2, both v7x TCs)
    x = jax.random.normal(kx, (B, LAYER_SIZES[0]), jnp.float32)
    params = init_params(key)
    flat_params = prepare_params(params)   # cast once, outside the call path

    out = discriminator_forward(x, flat_params, batch_tile=1024)
    out = jax.block_until_ready(out)

    ref = reference_forward(x, params)
    assert out.shape == (B, 1)
    assert bool(jnp.all((out >= 0.0) & (out <= 1.0))), "sigmoid range violated"
    # Loose tolerance: middle layers use bf16 MXU inputs (f32 accumulation).
    assert jnp.allclose(out, ref, atol=2e-2, rtol=0.0), "mismatch vs reference"

    print("KERNEL_OK")
</pallas_src>

<mosaic_0001>
module attributes {stable_mosaic.version = 11 : i64} {
  func.func @discriminator_kernel(%arg0: i32, %arg1: memref<256x2xf32, #tpu.memory_space<vmem>>, %arg2: memref<2x512xf32, #tpu.memory_space<vmem>>, %arg3: memref<1x512xf32, #tpu.memory_space<vmem>>, %arg4: memref<512x256xbf16, #tpu.memory_space<vmem>>, %arg5: memref<1x256xf32, #tpu.memory_space<vmem>>, %arg6: memref<256x128xbf16, #tpu.memory_space<vmem>>, %arg7: memref<1x128xf32, #tpu.memory_space<vmem>>, %arg8: memref<128x64xbf16, #tpu.memory_space<vmem>>, %arg9: memref<1x64xf32, #tpu.memory_space<vmem>>, %arg10: memref<64x32xbf16, #tpu.memory_space<vmem>>, %arg11: memref<1x32xf32, #tpu.memory_space<vmem>>, %arg12: memref<32x16xbf16, #tpu.memory_space<vmem>>, %arg13: memref<1x16xf32, #tpu.memory_space<vmem>>, %arg14: memref<16x1xf32, #tpu.memory_space<vmem>>, %arg15: memref<1x1xf32, #tpu.memory_space<vmem>>, %arg16: memref<1x256xf32, #tpu.memory_space<vmem>>) attributes {dimension_semantics = [#tpu.dimension_semantics<parallel>], iteration_bounds = array<i64: 2>, scalar_prefetch = 0 : i64, scratch_operands = 0 : i64, tpu.core_type = #tpu.core_type<tc>, window_params = [{transform_indices = @transform_0, window_bounds = array<i64: 256, 2>}, {pipeline_mode = #tpu.pipeline_mode<synchronous>, transform_indices = @transform_1, window_bounds = array<i64: 2, 512>}, {pipeline_mode = #tpu.pipeline_mode<synchronous>, transform_indices = @transform_2, window_bounds = array<i64: 1, 512>}, {pipeline_mode = #tpu.pipeline_mode<synchronous>, transform_indices = @transform_3, window_bounds = array<i64: 512, 256>}, {pipeline_mode = #tpu.pipeline_mode<synchronous>, transform_indices = @transform_4, window_bounds = array<i64: 1, 256>}, {pipeline_mode = #tpu.pipeline_mode<synchronous>, transform_indices = @transform_5, window_bounds = array<i64: 256, 128>}, {pipeline_mode = #tpu.pipeline_mode<synchronous>, transform_indices = @transform_6, window_bounds = array<i64: 1, 128>}, {pipeline_mode = #tpu.pipeline_mode<synchronous>, transform_indices = @transform_7, window_bounds = array<i64: 128, 64>}, {pipeline_mode = #tpu.pipeline_mode<synchronous>, transform_indices = @transform_8, window_bounds = array<i64: 1, 64>}, {pipeline_mode = #tpu.pipeline_mode<synchronous>, transform_indices = @transform_9, window_bounds = array<i64: 64, 32>}, {pipeline_mode = #tpu.pipeline_mode<synchronous>, transform_indices = @transform_10, window_bounds = array<i64: 1, 32>}, {pipeline_mode = #tpu.pipeline_mode<synchronous>, transform_indices = @transform_11, window_bounds = array<i64: 32, 16>}, {pipeline_mode = #tpu.pipeline_mode<synchronous>, transform_indices = @transform_12, window_bounds = array<i64: 1, 16>}, {pipeline_mode = #tpu.pipeline_mode<synchronous>, transform_indices = @transform_13, window_bounds = array<i64: 16, 1>}, {pipeline_mode = #tpu.pipeline_mode<synchronous>, transform_indices = @transform_14, window_bounds = array<i64: 1, 1>}, {transform_indices = @transform_15, window_bounds = array<i64: 1, 256>}]} {
    %c0 = arith.constant 0 : index
    %c0_0 = arith.constant 0 : index
    %0 = vector.load %arg1[%c0, %c0_0] : memref<256x2xf32, #tpu.memory_space<vmem>>, vector<256x2xf32>
    %c0_1 = arith.constant 0 : index
    %c0_2 = arith.constant 0 : index
    %1 = vector.load %arg2[%c0_1, %c0_2] : memref<2x512xf32, #tpu.memory_space<vmem>>, vector<2x512xf32>
    %cst = arith.constant dense<0.000000e+00> : vector<256x512xf32>
    %2 = tpu.matmul %0, %1, %cst {dimension_numbers = #tpu.dot_dimension_numbers<[1], [0], [0], [1], [0, 0, 1, 1], [], []>} : vector<256x2xf32>, vector<2x512xf32>, vector<256x512xf32> -> vector<256x512xf32>
    %c0_3 = arith.constant 0 : index
    %c0_4 = arith.constant 0 : index
    %3 = vector.load %arg3[%c0_3, %c0_4] : memref<1x512xf32, #tpu.memory_space<vmem>>, vector<1x512xf32>
    %4 = vector.broadcast %3 : vector<1x512xf32> to vector<256x512xf32>
    %5 = arith.addf %2, %4 : vector<256x512xf32>
    %cst_5 = arith.constant 0.000000e+00 : f32
    %6 = vector.broadcast %cst_5 : f32 to vector<256x512xf32>
    %7 = arith.cmpf ogt, %5, %6 : vector<256x512xf32>
    %cst_6 = arith.constant 0.00999999977 : f32
    %8 = vector.broadcast %cst_6 : f32 to vector<256x512xf32>
    %9 = arith.mulf %8, %5 : vector<256x512xf32>
    %10 = arith.select %7, %5, %9 : vector<256x512xi1>, vector<256x512xf32>
    %11 = arith.truncf %10 : vector<256x512xf32> to vector<256x512xbf16>
    %c0_7 = arith.constant 0 : index
    %c0_8 = arith.constant 0 : index
    %12 = vector.load %arg4[%c0_7, %c0_8] : memref<512x256xbf16, #tpu.memory_space<vmem>>, vector<512x256xbf16>
    %cst_9 = arith.constant dense<0.000000e+00> : vector<256x256xf32>
    %13 = tpu.matmul %11, %12, %cst_9 {dimension_numbers = #tpu.dot_dimension_numbers<[1], [0], [0], [1], [0, 0, 1, 1], [], []>} : vector<256x512xbf16>, vector<512x256xbf16>, vector<256x256xf32> -> vector<256x256xf32>
    %c0_10 = arith.constant 0 : index
    %c0_11 = arith.constant 0 : index
    %14 = vector.load %arg5[%c0_10, %c0_11] : memref<1x256xf32, #tpu.memory_space<vmem>>, vector<1x256xf32>
    %15 = vector.broadcast %14 : vector<1x256xf32> to vector<256x256xf32>
    %16 = arith.addf %13, %15 : vector<256x256xf32>
    %cst_12 = arith.constant 0.000000e+00 : f32
    %17 = vector.broadcast %cst_12 : f32 to vector<256x256xf32>
    %18 = arith.cmpf ogt, %16, %17 : vector<256x256xf32>
    %cst_13 = arith.constant 0.00999999977 : f32
    %19 = vector.broadcast %cst_13 : f32 to vector<256x256xf32>
    %20 = arith.mulf %19, %16 : vector<256x256xf32>
    %21 = arith.select %18, %16, %20 : vector<256x256xi1>, vector<256x256xf32>
    %22 = arith.truncf %21 : vector<256x256xf32> to vector<256x256xbf16>
    %c0_14 = arith.constant 0 : index
    %c0_15 = arith.constant 0 : index
    %23 = vector.load %arg6[%c0_14, %c0_15] : memref<256x128xbf16, #tpu.memory_space<vmem>>, vector<256x128xbf16>
    %cst_16 = arith.constant dense<0.000000e+00> : vector<256x128xf32>
    %24 = tpu.matmul %22, %23, %cst_16 {dimension_numbers = #tpu.dot_dimension_numbers<[1], [0], [0], [1], [0, 0, 1, 1], [], []>} : vector<256x256xbf16>, vector<256x128xbf16>, vector<256x128xf32> -> vector<256x128xf32>
    %c0_17 = arith.constant 0 : index
    %c0_18 = arith.constant 0 : index
    %25 = vector.load %arg7[%c0_17, %c0_18] : memref<1x128xf32, #tpu.memory_space<vmem>>, vector<1x128xf32>
    %26 = vector.broadcast %25 : vector<1x128xf32> to vector<256x128xf32>
    %27 = arith.addf %24, %26 : vector<256x128xf32>
    %cst_19 = arith.constant 0.000000e+00 : f32
    %28 = vector.broadcast %cst_19 : f32 to vector<256x128xf32>
    %29 = arith.cmpf ogt, %27, %28 : vector<256x128xf32>
    %cst_20 = arith.constant 0.00999999977 : f32
    %30 = vector.broadcast %cst_20 : f32 to vector<256x128xf32>
    %31 = arith.mulf %30, %27 : vector<256x128xf32>
    %32 = arith.select %29, %27, %31 : vector<256x128xi1>, vector<256x128xf32>
    %33 = arith.truncf %32 : vector<256x128xf32> to vector<256x128xbf16>
    %c0_21 = arith.constant 0 : index
    %c0_22 = arith.constant 0 : index
    %34 = vector.load %arg8[%c0_21, %c0_22] : memref<128x64xbf16, #tpu.memory_space<vmem>>, vector<128x64xbf16>
    %cst_23 = arith.constant dense<0.000000e+00> : vector<256x64xf32>
    %35 = tpu.matmul %33, %34, %cst_23 {dimension_numbers = #tpu.dot_dimension_numbers<[1], [0], [0], [1], [0, 0, 1, 1], [], []>} : vector<256x128xbf16>, vector<128x64xbf16>, vector<256x64xf32> -> vector<256x64xf32>
    %c0_24 = arith.constant 0 : index
    %c0_25 = arith.constant 0 : index
    %36 = vector.load %arg9[%c0_24, %c0_25] : memref<1x64xf32, #tpu.memory_space<vmem>>, vector<1x64xf32>
    %37 = vector.broadcast %36 : vector<1x64xf32> to vector<256x64xf32>
    %38 = arith.addf %35, %37 : vector<256x64xf32>
    %cst_26 = arith.constant 0.000000e+00 : f32
    %39 = vector.broadcast %cst_26 : f32 to vector<256x64xf32>
    %40 = arith.cmpf ogt, %38, %39 : vector<256x64xf32>
    %cst_27 = arith.constant 0.00999999977 : f32
    %41 = vector.broadcast %cst_27 : f32 to vector<256x64xf32>
    %42 = arith.mulf %41, %38 : vector<256x64xf32>
    %43 = arith.select %40, %38, %42 : vector<256x64xi1>, vector<256x64xf32>
    %44 = arith.truncf %43 : vector<256x64xf32> to vector<256x64xbf16>
    %c0_28 = arith.constant 0 : index
    %c0_29 = arith.constant 0 : index
    %45 = vector.load %arg10[%c0_28, %c0_29] : memref<64x32xbf16, #tpu.memory_space<vmem>>, vector<64x32xbf16>
    %cst_30 = arith.constant dense<0.000000e+00> : vector<256x32xf32>
    %46 = tpu.matmul %44, %45, %cst_30 {dimension_numbers = #tpu.dot_dimension_numbers<[1], [0], [0], [1], [0, 0, 1, 1], [], []>} : vector<256x64xbf16>, vector<64x32xbf16>, vector<256x32xf32> -> vector<256x32xf32>
    %c0_31 = arith.constant 0 : index
    %c0_32 = arith.constant 0 : index
    %47 = vector.load %arg11[%c0_31, %c0_32] : memref<1x32xf32, #tpu.memory_space<vmem>>, vector<1x32xf32>
    %48 = vector.broadcast %47 : vector<1x32xf32> to vector<256x32xf32>
    %49 = arith.addf %46, %48 : vector<256x32xf32>
    %cst_33 = arith.constant 0.000000e+00 : f32
    %50 = vector.broadcast %cst_33 : f32 to vector<256x32xf32>
    %51 = arith.cmpf ogt, %49, %50 : vector<256x32xf32>
    %cst_34 = arith.constant 0.00999999977 : f32
    %52 = vector.broadcast %cst_34 : f32 to vector<256x32xf32>
    %53 = arith.mulf %52, %49 : vector<256x32xf32>
    %54 = arith.select %51, %49, %53 : vector<256x32xi1>, vector<256x32xf32>
    %55 = arith.truncf %54 : vector<256x32xf32> to vector<256x32xbf16>
    %c0_35 = arith.constant 0 : index
    %c0_36 = arith.constant 0 : index
    %56 = vector.load %arg12[%c0_35, %c0_36] : memref<32x16xbf16, #tpu.memory_space<vmem>>, vector<32x16xbf16>
    %cst_37 = arith.constant dense<0.000000e+00> : vector<256x16xf32>
    %57 = tpu.matmul %55, %56, %cst_37 {dimension_numbers = #tpu.dot_dimension_numbers<[1], [0], [0], [1], [0, 0, 1, 1], [], []>} : vector<256x32xbf16>, vector<32x16xbf16>, vector<256x16xf32> -> vector<256x16xf32>
    %c0_38 = arith.constant 0 : index
    %c0_39 = arith.constant 0 : index
    %58 = vector.load %arg13[%c0_38, %c0_39] : memref<1x16xf32, #tpu.memory_space<vmem>>, vector<1x16xf32>
    %59 = vector.broadcast %58 : vector<1x16xf32> to vector<256x16xf32>
    %60 = arith.addf %57, %59 : vector<256x16xf32>
    %cst_40 = arith.constant 0.000000e+00 : f32
    %61 = vector.broadcast %cst_40 : f32 to vector<256x16xf32>
    %62 = arith.cmpf ogt, %60, %61 : vector<256x16xf32>
    %cst_41 = arith.constant 0.00999999977 : f32
    %63 = vector.broadcast %cst_41 : f32 to vector<256x16xf32>
    %64 = arith.mulf %63, %60 : vector<256x16xf32>
    %65 = arith.select %62, %60, %64 : vector<256x16xi1>, vector<256x16xf32>
    %66 = tpu.transpose %65, [1, 0] : vector<256x16xf32> -> vector<16x256xf32>
    %c0_42 = arith.constant 0 : index
    %c0_43 = arith.constant 0 : index
    %67 = vector.load %arg14[%c0_42, %c0_43] : memref<16x1xf32, #tpu.memory_space<vmem>>, vector<16x1xf32>
    %68 = vector.broadcast %67 : vector<16x1xf32> to vector<16x256xf32>
    %69 = arith.mulf %66, %68 : vector<16x256xf32>
    %cst_44 = arith.constant dense<0.000000e+00> : vector<256xf32>
    %70 = vector.multi_reduction <add>, %69, %cst_44 [0] : vector<16x256xf32> to vector<256xf32>
    %71 = vector.shape_cast %70 : vector<256xf32> to vector<1x256xf32>
    %c0_45 = arith.constant 0 : index
    %c0_46 = arith.constant 0 : index
    %72 = vector.load %arg15[%c0_45, %c0_46] : memref<1x1xf32, #tpu.memory_space<vmem>>, vector<1x1xf32>
    %73 = vector.broadcast %72 : vector<1x1xf32> to vector<1x256xf32>
    %74 = arith.addf %71, %73 : vector<1x256xf32>
    %75 = arith.negf %74 : vector<1x256xf32>
    %76 = math.exp %75 : vector<1x256xf32>
    %cst_47 = arith.constant 1.000000e+00 : f32
    %77 = vector.broadcast %cst_47 : f32 to vector<1x256xf32>
    %78 = arith.addf %77, %76 : vector<1x256xf32>
    %79 = arith.divf %77, %78 : vector<1x256xf32>
    %c0_48 = arith.constant 0 : index
    %c0_49 = arith.constant 0 : index
    %80 = vector.load %arg16[%c0_48, %c0_49] : memref<1x256xf32, #tpu.memory_space<vmem>>, vector<1x256xf32>
    tpu.vector_store %arg16[%c0_48, %c0_49], %79 {strides = array<i32>} : memref<1x256xf32, #tpu.memory_space<vmem>>, vector<1x256xf32>,
    return
  }
  func.func @transform_0(%arg0: i32) -> (i32, i32) {
    %c0_i32 = arith.constant 0 : i32
    %c0_i32_0 = arith.constant 0 : i32
    return %arg0, %c0_i32 : i32, i32
  }
  func.func @transform_1(%arg0: i32) -> (i32, i32) {
    %c0_i32 = arith.constant 0 : i32
    %c0_i32_0 = arith.constant 0 : i32
    %c0_i32_1 = arith.constant 0 : i32
    return %c0_i32, %c0_i32_0 : i32, i32
  }
  func.func @transform_2(%arg0: i32) -> (i32, i32) {
    %c0_i32 = arith.constant 0 : i32
    %c0_i32_0 = arith.constant 0 : i32
    %c0_i32_1 = arith.constant 0 : i32
    return %c0_i32, %c0_i32_0 : i32, i32
  }
  func.func @transform_3(%arg0: i32) -> (i32, i32) {
    %c0_i32 = arith.constant 0 : i32
    %c0_i32_0 = arith.constant 0 : i32
    %c0_i32_1 = arith.constant 0 : i32
    return %c0_i32, %c0_i32_0 : i32, i32
  }
  func.func @transform_4(%arg0: i32) -> (i32, i32) {
    %c0_i32 = arith.constant 0 : i32
    %c0_i32_0 = arith.constant 0 : i32
    %c0_i32_1 = arith.constant 0 : i32
    return %c0_i32, %c0_i32_0 : i32, i32
  }
  func.func @transform_5(%arg0: i32) -> (i32, i32) {
    %c0_i32 = arith.constant 0 : i32
    %c0_i32_0 = arith.constant 0 : i32
    %c0_i32_1 = arith.constant 0 : i32
    return %c0_i32, %c0_i32_0 : i32, i32
  }
  func.func @transform_6(%arg0: i32) -> (i32, i32) {
    %c0_i32 = arith.constant 0 : i32
    %c0_i32_0 = arith.constant 0 : i32
    %c0_i32_1 = arith.constant 0 : i32
    return %c0_i32, %c0_i32_0 : i32, i32
  }
  func.func @transform_7(%arg0: i32) -> (i32, i32) {
    %c0_i32 = arith.constant 0 : i32
    %c0_i32_0 = arith.constant 0 : i32
    %c0_i32_1 = arith.constant 0 : i32
    return %c0_i32, %c0_i32_0 : i32, i32
  }
  func.func @transform_8(%arg0: i32) -> (i32, i32) {
    %c0_i32 = arith.constant 0 : i32
    %c0_i32_0 = arith.constant 0 : i32
    %c0_i32_1 = arith.constant 0 : i32
    return %c0_i32, %c0_i32_0 : i32, i32
  }
  func.func @transform_9(%arg0: i32) -> (i32, i32) {
    %c0_i32 = arith.constant 0 : i32
    %c0_i32_0 = arith.constant 0 : i32
    %c0_i32_1 = arith.constant 0 : i32
    return %c0_i32, %c0_i32_0 : i32, i32
  }
  func.func @transform_10(%arg0: i32) -> (i32, i32) {
    %c0_i32 = arith.constant 0 : i32
    %c0_i32_0 = arith.constant 0 : i32
    %c0_i32_1 = arith.constant 0 : i32
    return %c0_i32, %c0_i32_0 : i32, i32
  }
  func.func @transform_11(%arg0: i32) -> (i32, i32) {
    %c0_i32 = arith.constant 0 : i32
    %c0_i32_0 = arith.constant 0 : i32
    %c0_i32_1 = arith.constant 0 : i32
    return %c0_i32, %c0_i32_0 : i32, i32
  }
  func.func @transform_12(%arg0: i32) -> (i32, i32) {
    %c0_i32 = arith.constant 0 : i32
    %c0_i32_0 = arith.constant 0 : i32
    %c0_i32_1 = arith.constant 0 : i32
    return %c0_i32, %c0_i32_0 : i32, i32
  }
  func.func @transform_13(%arg0: i32) -> (i32, i32) {
    %c0_i32 = arith.constant 0 : i32
    %c0_i32_0 = arith.constant 0 : i32
    %c0_i32_1 = arith.constant 0 : i32
    return %c0_i32, %c0_i32_0 : i32, i32
  }
  func.func @transform_14(%arg0: i32) -> (i32, i32) {
    %c0_i32 = arith.constant 0 : i32
    %c0_i32_0 = arith.constant 0 : i32
    %c0_i32_1 = arith.constant 0 : i32
    return %c0_i32, %c0_i32_0 : i32, i32
  }
  func.func @transform_15(%arg0: i32) -> (i32, i32) {
    %c0_i32 = arith.constant 0 : i32
    %c0_i32_0 = arith.constant 0 : i32
    return %c0_i32, %arg0 : i32, i32
  }
}

</mosaic_0001>

<llo_original>
// kernel: tpu_custom_call.1
$region0: #{tpu_custom_call.1}
  #allocation0 [shape = 'u32[]', space=smem, size = 0x4, offset = 0x4, fixed_abs, tag = 'smem constant byte address 0x4 - core index']
  #allocation1 [shape = 'u32[72,128]{1,0:T(1,128)}', space=vmem, size = 0x9000, scoped, tag = 'internal scratch']
  #allocation2 [shape = 'f32[1,1]{1,0:T(1,128)S(1)}', space=vmem, size = 0x200, scoped, tag = 'scoped memory for tpu_custom_call.1']
  %s0 = inlined_call_operand.vmem [shape: f32[512,2], index: 0, kind: input, shape index: {}]
  %s1 = inlined_call_operand.vmem [shape: f32[2,512], index: 1, kind: input, shape index: {}]
  %s2 = inlined_call_operand.vmem [shape: f32[1,512], index: 2, kind: input, shape index: {}]
  %s3 = inlined_call_operand.vmem [shape: bf16[512,256], index: 3, kind: input, shape index: {}]
  %s4 = inlined_call_operand.vmem [shape: f32[1,256], index: 4, kind: input, shape index: {}]
  %s5 = inlined_call_operand.hbm [shape: bf16[256,128], index: 5, kind: input, shape index: {}]
  %s6 = inlined_call_operand.vmem [shape: f32[1,128], index: 6, kind: input, shape index: {}]
  %s7 = inlined_call_operand.vmem [shape: bf16[128,64], index: 7, kind: input, shape index: {}]
  %s8 = inlined_call_operand.vmem [shape: f32[1,64], index: 8, kind: input, shape index: {}]
  %s9 = inlined_call_operand.vmem [shape: bf16[64,32], index: 9, kind: input, shape index: {}]
  %s10 = inlined_call_operand.vmem [shape: f32[1,32], index: 10, kind: input, shape index: {}]
  %s11 = inlined_call_operand.vmem [shape: bf16[32,16], index: 11, kind: input, shape index: {}]
  %s12 = inlined_call_operand.vmem [shape: f32[1,16], index: 12, kind: input, shape index: {}]
  %s13 = inlined_call_operand.vmem [shape: f32[16,1], index: 13, kind: input, shape index: {}]
  %s14 = inlined_call_operand.<no memory space> [shape: f32[1,1], index: 14, kind: input, shape index: {}]
  %s15 = inlined_call_operand.hbm [shape: f32[1,512], index: 15, kind: output, shape index: {}]
  %s16 = sld [smem:[#allocation0]]
  $region97: #{tpu_custom_call.1} parent=0
    _
  %s18 = ssub.s32 1, %s16
  %s19 = scalar_select 0, %s18, %s16
  %v20 = vstv %s14
  %21 = vst [vmem:[#allocation2] sm:$0x1] %v20
  $region1: #{tpu_custom_call.1} parent=0
    #allocation3 [shape = 'u8[65536]{0}', space=vmem, size = 0x10000, scoped, tag = 'input window, operand 5, single buffered']
    #allocation4 [shape = 's32[2]{0}', space=sflag, size = 0x8, scoped, tag = 'scoped memory for tpu_custom_call.1']
    #allocation5 [shape = 's32[2]{0}', space=sflag, size = 0x8, scoped, tag = 'scoped memory for tpu_custom_call.1']
    #allocation6 [shape = 'u8[2048]{0}', space=vmem, size = 0x800, scoped, tag = 'output window, operand 0']
    %22 = vsyncpa [#allocation4], 0
    %23 = vsyncpa [#allocation5], 0
    %s24 = scalar_lea.sflag [#allocation5], 1
    %25 = vsyncpa %s24, 0
    loop: start=0, step=1, limit=4
    $region2: #{tpu_custom_call.1} parent=1 // loop_pre_header
      _
    $region3: #{tpu_custom_call.1} parent=1 // loop_header
      %s27 = sphi 0, %s31
      %p28 = scmp.ge.s32.totalorder %s27, 4
      %s37 = sphi 0, %s39
      %s40 = sphi 0, %s37
      %s41 = sphi 0, %s40
      %s57 = sphi 0, %s41
      %s61 = sphi 0, %s61
      %s63 = sphi 0, %s61
      %s64 = sphi 0, %s63
      %s78 = sphi 0, %s64
      %s82 = sphi 0, %s82
      %s84 = sphi 0, %s82
      %s85 = sphi 0, %s84
      %s99 = sphi 0, %s85
      %s103 = sphi 0, %s103
      %s105 = sphi 0, %s103
      %s106 = sphi 0, %s105
      %s120 = sphi 0, %s106
      %s124 = sphi 0, %s124
      %s126 = sphi 0, %s124
      %s127 = sphi 0, %s126
      %s141 = sphi 0, %s127
      %s145 = sphi 0, %s145
      %s147 = sphi 0, %s145
      %s148 = sphi 0, %s147
      %s162 = sphi 0, %s148
      %s166 = sphi 0, %s166
      %s168 = sphi 0, %s166
      %s169 = sphi 0, %s168
      %s183 = sphi 0, %s169
      %s187 = sphi 0, %s187
      %s189 = sphi 0, %s187
      %s190 = sphi 0, %s189
      %s204 = sphi 0, %s190
      %s208 = sphi 0, %s208
      %s210 = sphi 0, %s208
      %s211 = sphi 0, %s210
      %s225 = sphi 0, %s211
      %s229 = sphi 0, %s229
      %s231 = sphi 0, %s229
      %s232 = sphi 0, %s231
      %s246 = sphi 0, %s232
      %s250 = sphi 0, %s250
      %s252 = sphi 0, %s250
      %s253 = sphi 0, %s252
      %s267 = sphi 0, %s253
      %s271 = sphi 0, %s271
      %s273 = sphi 0, %s271
      %s274 = sphi 0, %s273
      %s288 = sphi 0, %s274
      %s292 = sphi 0, %s292
      %s294 = sphi 0, %s292
      %s295 = sphi 0, %s294
      %s309 = sphi 0, %s295
      %s313 = sphi 0, %s313
      %s315 = sphi 0, %s313
      %s316 = sphi 0, %s315
      %s330 = sphi 0, %s316
      %s334 = sphi 0, %s334
      %s336 = sphi 0, %s334
      %s337 = sphi 0, %s336
      %s351 = sphi 0, %s337
      %s357 = sphi 0, %s359
      %s360 = sphi 0, %s357
      %s361 = sphi 0, %s360
      %s377 = sphi 0, %s361
    $region4: #{tpu_custom_call.1} parent=1 // loop_header_branch
      %30 = sbr.rel (%p28) target = $region8
    $region5: #{tpu_custom_call.1} parent=1 // loop_body
      %s32 = ssub.s32 %s27, 1
      %s33 = ssub.s32 %s27, 2
      %s34 = sadd.s32 %s27, 1
      %s35 = ssub.s32 %s27, %s34
      %p36 = scmp.eq.s32.totalorder %s35, 0
      %s38 = sadd.s32 %s37, 1
      %s39 = scalar_select %p36, %s37, %s38
      %p42 = pneg %p36
      %p43 = scmp.eq.s32.totalorder %s27, 1
      %p44 = por %p42, %p43
      %p45 = scmp.ne.s32.totalorder %s37, %s40
      %p46 = scmp.eq.s32.totalorder %s27, 0
      %p47 = por %p45, %p46
      %p48 = scmp.ne.s32.totalorder %s37, %s40
      %p49 = scmp.eq.s32.totalorder %s32, 1
      %p50 = por %p48, %p49
      %p51 = scmp.ne.s32.totalorder %s40, %s41
      %p52 = scmp.eq.s32.totalorder %s32, 0
      %p53 = por %p51, %p52
      %p54 = scmp.ne.s32.totalorder %s40, %s41
      %p55 = scmp.eq.s32.totalorder %s33, 1
      %p56 = por %p54, %p55
      %p58 = scmp.ne.s32.totalorder %s41, %s57
      %p59 = scmp.eq.s32.totalorder %s33, 0
      %p60 = por %p58, %p59
      %s62 = sadd.s32 %s61, 1
      %p65 = scmp.eq.s32.totalorder %s27, 1
      %p66 = scmp.ne.s32.totalorder %s61, %s63
      %p67 = scmp.eq.s32.totalorder %s27, 0
      %p68 = por %p66, %p67
      %p69 = scmp.ne.s32.totalorder %s61, %s63
      %p70 = scmp.eq.s32.totalorder %s32, 1
      %p71 = por %p69, %p70
      %p72 = scmp.ne.s32.totalorder %s63, %s64
      %p73 = scmp.eq.s32.totalorder %s32, 0
      %p74 = por %p72, %p73
      %p75 = scmp.ne.s32.totalorder %s63, %s64
      %p76 = scmp.eq.s32.totalorder %s33, 1
      %p77 = por %p75, %p76
      %p79 = scmp.ne.s32.totalorder %s64, %s78
      %p80 = scmp.eq.s32.totalorder %s33, 0
      %p81 = por %p79, %p80
      %s83 = sadd.s32 %s82, 1
      %p86 = scmp.eq.s32.totalorder %s27, 1
      %p87 = scmp.ne.s32.totalorder %s82, %s84
      %p88 = scmp.eq.s32.totalorder %s27, 0
      %p89 = por %p87, %p88
      %p90 = scmp.ne.s32.totalorder %s82, %s84
      %p91 = scmp.eq.s32.totalorder %s32, 1
      %p92 = por %p90, %p91
      %p93 = scmp.ne.s32.totalorder %s84, %s85
      %p94 = scmp.eq.s32.totalorder %s32, 0
      %p95 = por %p93, %p94
      %p96 = scmp.ne.s32.totalorder %s84, %s85
      %p97 = scmp.eq.s32.totalorder %s33, 1
      %p98 = por %p96, %p97
      %p100 = scmp.ne.s32.totalorder %s85, %s99
      %p101 = scmp.eq.s32.totalorder %s33, 0
      %p102 = por %p100, %p101
      %s104 = sadd.s32 %s103, 1
      %p107 = scmp.eq.s32.totalorder %s27, 1
      %p108 = scmp.ne.s32.totalorder %s103, %s105
      %p109 = scmp.eq.s32.totalorder %s27, 0
      %p110 = por %p108, %p109
      %p111 = scmp.ne.s32.totalorder %s103, %s105
      %p112 = scmp.eq.s32.totalorder %s32, 1
      %p113 = por %p111, %p112
      %p114 = scmp.ne.s32.totalorder %s105, %s106
      %p115 = scmp.eq.s32.totalorder %s32, 0
      %p116 = por %p114, %p115
      %p117 = scmp.ne.s32.totalorder %s105, %s106
      %p118 = scmp.eq.s32.totalorder %s33, 1
      %p119 = por %p117, %p118
      %p121 = scmp.ne.s32.totalorder %s106, %s120
      %p122 = scmp.eq.s32.totalorder %s33, 0
      %p123 = por %p121, %p122
      %s125 = sadd.s32 %s124, 1
      %p128 = scmp.eq.s32.totalorder %s27, 1
      %p129 = scmp.ne.s32.totalorder %s124, %s126
      %p130 = scmp.eq.s32.totalorder %s27, 0
      %p131 = por %p129, %p130
      %p132 = scmp.ne.s32.totalorder %s124, %s126
      %p133 = scmp.eq.s32.totalorder %s32, 1
      %p134 = por %p132, %p133
      %p135 = scmp.ne.s32.totalorder %s126, %s127
      %p136 = scmp.eq.s32.totalorder %s32, 0
      %p137 = por %p135, %p136
      %p138 = scmp.ne.s32.totalorder %s126, %s127
      %p139 = scmp.eq.s32.totalorder %s33, 1
      %p140 = por %p138, %p139
      %p142 = scmp.ne.s32.totalorder %s127, %s141
      %p143 = scmp.eq.s32.totalorder %s33, 0
      %p144 = por %p142, %p143
      %s146 = sadd.s32 %s145, 1
      %p149 = scmp.eq.s32.totalorder %s27, 1
      %p150 = scmp.ne.s32.totalorder %s145, %s147
      %p151 = scmp.eq.s32.totalorder %s27, 0
      %p152 = por %p150, %p151
      %p153 = scmp.ne.s32.totalorder %s145, %s147
      %p154 = scmp.eq.s32.totalorder %s32, 1
      %p155 = por %p153, %p154
      %p156 = scmp.ne.s32.totalorder %s147, %s148
      %p157 = scmp.eq.s32.totalorder %s32, 0
      %p158 = por %p156, %p157
      %p159 = scmp.ne.s32.totalorder %s147, %s148
      %p160 = scmp.eq.s32.totalorder %s33, 1
      %p161 = por %p159, %p160
      %p163 = scmp.ne.s32.totalorder %s148, %s162
      %p164 = scmp.eq.s32.totalorder %s33, 0
      %p165 = por %p163, %p164
      %s167 = sadd.s32 %s166, 1
      %p170 = scmp.eq.s32.totalorder %s27, 1
      %p171 = scmp.ne.s32.totalorder %s166, %s168
      %p172 = scmp.eq.s32.totalorder %s27, 0
      %p173 = por %p171, %p172
      %p174 = scmp.ne.s32.totalorder %s166, %s168
      %p175 = scmp.eq.s32.totalorder %s32, 1
      %p176 = por %p174, %p175
      %p177 = scmp.ne.s32.totalorder %s168, %s169
      %p178 = scmp.eq.s32.totalorder %s32, 0
      %p179 = por %p177, %p178
      %p180 = scmp.ne.s32.totalorder %s168, %s169
      %p181 = scmp.eq.s32.totalorder %s33, 1
      %p182 = por %p180, %p181
      %p184 = scmp.ne.s32.totalorder %s169, %s183
      %p185 = scmp.eq.s32.totalorder %s33, 0
      %p186 = por %p184, %p185
      %s188 = sadd.s32 %s187, 1
      %p191 = scmp.eq.s32.totalorder %s27, 1
      %p192 = scmp.ne.s32.totalorder %s187, %s189
      %p193 = scmp.eq.s32.totalorder %s27, 0
      %p194 = por %p192, %p193
      %p195 = scmp.ne.s32.totalorder %s187, %s189
      %p196 = scmp.eq.s32.totalorder %s32, 1
      %p197 = por %p195, %p196
      %p198 = scmp.ne.s32.totalorder %s189, %s190
      %p199 = scmp.eq.s32.totalorder %s32, 0
      %p200 = por %p198, %p199
      %p201 = scmp.ne.s32.totalorder %s189, %s190
      %p202 = scmp.eq.s32.totalorder %s33, 1
      %p203 = por %p201, %p202
      %p205 = scmp.ne.s32.totalorder %s190, %s204
      %p206 = scmp.eq.s32.totalorder %s33, 0
      %p207 = por %p205, %p206
      %s209 = sadd.s32 %s208, 1
      %p212 = scmp.eq.s32.totalorder %s27, 1
      %p213 = scmp.ne.s32.totalorder %s208, %s210
      %p214 = scmp.eq.s32.totalorder %s27, 0
      %p215 = por %p213, %p214
      %p216 = scmp.ne.s32.totalorder %s208, %s210
      %p217 = scmp.eq.s32.totalorder %s32, 1
      %p218 = por %p216, %p217
      %p219 = scmp.ne.s32.totalorder %s210, %s211
      %p220 = scmp.eq.s32.totalorder %s32, 0
      %p221 = por %p219, %p220
      %p222 = scmp.ne.s32.totalorder %s210, %s211
      %p223 = scmp.eq.s32.totalorder %s33, 1
      %p224 = por %p222, %p223
      %p226 = scmp.ne.s32.totalorder %s211, %s225
      %p227 = scmp.eq.s32.totalorder %s33, 0
      %p228 = por %p226, %p227
      %s230 = sadd.s32 %s229, 1
      %p233 = scmp.eq.s32.totalorder %s27, 1
      %p234 = scmp.ne.s32.totalorder %s229, %s231
      %p235 = scmp.eq.s32.totalorder %s27, 0
      %p236 = por %p234, %p235
      %p237 = scmp.ne.s32.totalorder %s229, %s231
      %p238 = scmp.eq.s32.totalorder %s32, 1
      %p239 = por %p237, %p238
      %p240 = scmp.ne.s32.totalorder %s231, %s232
      %p241 = scmp.eq.s32.totalorder %s32, 0
      %p242 = por %p240, %p241
      %p243 = scmp.ne.s32.totalorder %s231, %s232
      %p244 = scmp.eq.s32.totalorder %s33, 1
      %p245 = por %p243, %p244
      %p247 = scmp.ne.s32.totalorder %s232, %s246
      %p248 = scmp.eq.s32.totalorder %s33, 0
      %p249 = por %p247, %p248
      %s251 = sadd.s32 %s250, 1
      %p254 = scmp.eq.s32.totalorder %s27, 1
      %p255 = scmp.ne.s32.totalorder %s250, %s252
      %p256 = scmp.eq.s32.totalorder %s27, 0
      %p257 = por %p255, %p256
      %p258 = scmp.ne.s32.totalorder %s250, %s252
      %p259 = scmp.eq.s32.totalorder %s32, 1
      %p260 = por %p258, %p259
      %p261 = scmp.ne.s32.totalorder %s252, %s253
      %p262 = scmp.eq.s32.totalorder %s32, 0
      %p263 = por %p261, %p262
      %p264 = scmp.ne.s32.totalorder %s252, %s253
      %p265 = scmp.eq.s32.totalorder %s33, 1
      %p266 = por %p264, %p265
      %p268 = scmp.ne.s32.totalorder %s253, %s267
      %p269 = scmp.eq.s32.totalorder %s33, 0
      %p270 = por %p268, %p269
      %s272 = sadd.s32 %s271, 1
      %p275 = scmp.eq.s32.totalorder %s27, 1
      %p276 = scmp.ne.s32.totalorder %s271, %s273
      %p277 = scmp.eq.s32.totalorder %s27, 0
      %p278 = por %p276, %p277
      %p279 = scmp.ne.s32.totalorder %s271, %s273
      %p280 = scmp.eq.s32.totalorder %s32, 1
      %p281 = por %p279, %p280
      %p282 = scmp.ne.s32.totalorder %s273, %s274
      %p283 = scmp.eq.s32.totalorder %s32, 0
      %p284 = por %p282, %p283
      %p285 = scmp.ne.s32.totalorder %s273, %s274
      %p286 = scmp.eq.s32.totalorder %s33, 1
      %p287 = por %p285, %p286
      %p289 = scmp.ne.s32.totalorder %s274, %s288
      %p290 = scmp.eq.s32.totalorder %s33, 0
      %p291 = por %p289, %p290
      %s293 = sadd.s32 %s292, 1
      %p296 = scmp.eq.s32.totalorder %s27, 1
      %p297 = scmp.ne.s32.totalorder %s292, %s294
      %p298 = scmp.eq.s32.totalorder %s27, 0
      %p299 = por %p297, %p298
      %p300 = scmp.ne.s32.totalorder %s292, %s294
      %p301 = scmp.eq.s32.totalorder %s32, 1
      %p302 = por %p300, %p301
      %p303 = scmp.ne.s32.totalorder %s294, %s295
      %p304 = scmp.eq.s32.totalorder %s32, 0
      %p305 = por %p303, %p304
      %p306 = scmp.ne.s32.totalorder %s294, %s295
      %p307 = scmp.eq.s32.totalorder %s33, 1
      %p308 = por %p306, %p307
      %p310 = scmp.ne.s32.totalorder %s295, %s309
      %p311 = scmp.eq.s32.totalorder %s33, 0
      %p312 = por %p310, %p311
      %s314 = sadd.s32 %s313, 1
      %p317 = scmp.eq.s32.totalorder %s27, 1
      %p318 = scmp.ne.s32.totalorder %s313, %s315
      %p319 = scmp.eq.s32.totalorder %s27, 0
      %p320 = por %p318, %p319
      %p321 = scmp.ne.s32.totalorder %s313, %s315
      %p322 = scmp.eq.s32.totalorder %s32, 1
      %p323 = por %p321, %p322
      %p324 = scmp.ne.s32.totalorder %s315, %s316
      %p325 = scmp.eq.s32.totalorder %s32, 0
      %p326 = por %p324, %p325
      %p327 = scmp.ne.s32.totalorder %s315, %s316
      %p328 = scmp.eq.s32.totalorder %s33, 1
      %p329 = por %p327, %p328
      %p331 = scmp.ne.s32.totalorder %s316, %s330
      %p332 = scmp.eq.s32.totalorder %s33, 0
      %p333 = por %p331, %p332
      %s335 = sadd.s32 %s334, 1
      %p338 = scmp.eq.s32.totalorder %s27, 1
      %p339 = scmp.ne.s32.totalorder %s334, %s336
      %p340 = scmp.eq.s32.totalorder %s27, 0
      %p341 = por %p339, %p340
      %p342 = scmp.ne.s32.totalorder %s334, %s336
      %p343 = scmp.eq.s32.totalorder %s32, 1
      %p344 = por %p342, %p343
      %p345 = scmp.ne.s32.totalorder %s336, %s337
      %p346 = scmp.eq.s32.totalorder %s32, 0
      %p347 = por %p345, %p346
      %p348 = scmp.ne.s32.totalorder %s336, %s337
      %p349 = scmp.eq.s32.totalorder %s33, 1
      %p350 = por %p348, %p349
      %p352 = scmp.ne.s32.totalorder %s337, %s351
      %p353 = scmp.eq.s32.totalorder %s33, 0
      %p354 = por %p352, %p353
      %s355 = ssub.s32 %s27, %s34
      %p356 = scmp.eq.s32.totalorder %s355, 0
      %s358 = sadd.s32 %s357, 1
      %s359 = scalar_select %p356, %s357, %s358
      %p362 = pneg %p356
      %p363 = scmp.eq.s32.totalorder %s27, 1
      %p364 = por %p362, %p363
      %p365 = scmp.ne.s32.totalorder %s357, %s360
      %p366 = scmp.eq.s32.totalorder %s27, 0
      %p367 = por %p365, %p366
      %p368 = scmp.ne.s32.totalorder %s357, %s360
      %p369 = scmp.eq.s32.totalorder %s32, 1
      %p370 = por %p368, %p369
      %p371 = scmp.ne.s32.totalorder %s360, %s361
      %p372 = scmp.eq.s32.totalorder %s32, 0
      %p373 = por %p371, %p372
      %p374 = scmp.ne.s32.totalorder %s360, %s361
      %p375 = scmp.eq.s32.totalorder %s33, 1
      %p376 = por %p374, %p375
      %p378 = scmp.ne.s32.totalorder %s361, %s377
      %p379 = scmp.eq.s32.totalorder %s33, 0
      %p380 = por %p378, %p379
      %p381 = scmp.le.s32.totalorder 1, %s27
      %p382 = scmp.lt.s32.totalorder %s27, 3
      %p383 = pnand %p381, %p382
      %p384 = pneg %p383
      // Predicated region
      $region9: #{tpu_custom_call.1} parent=5 // pred_check
        _
      $region10: #{tpu_custom_call.1} parent=5 // pred_check_branch
        %386 = sbr.rel (%p383) target = $region12
      $region11: #{tpu_custom_call.1} parent=5 // pred_region
        %s387 = ssub.s32 %s27, 1
        // Predicated region
        $region13: #{tpu_custom_call.1} parent=11 // pred_check
          %p388 = pneg %p74
        $region14: #{tpu_custom_call.1} parent=11 // pred_check_branch
          %390 = sbr.rel (%p388) target = $region16
        $region15: #{tpu_custom_call.1} parent=11 // pred_region
          _
        $region16: #{tpu_custom_call.1} parent=11 // pred_fallthru
          _
        // Predicated region
        $region17: #{tpu_custom_call.1} parent=11 // pred_check
          %p391 = pneg %p95
        $region18: #{tpu_custom_call.1} parent=11 // pred_check_branch
          %393 = sbr.rel (%p391) target = $region20
        $region19: #{tpu_custom_call.1} parent=11 // pred_region
          _
        $region20: #{tpu_custom_call.1} parent=11 // pred_fallthru
          _
        // Predicated region
        $region21: #{tpu_custom_call.1} parent=11 // pred_check
          %p394 = pneg %p116
        $region22: #{tpu_custom_call.1} parent=11 // pred_check_branch
          %396 = sbr.rel (%p394) target = $region24
        $region23: #{tpu_custom_call.1} parent=11 // pred_region
          _
        $region24: #{tpu_custom_call.1} parent=11 // pred_fallthru
          _
        // Predicated region
        $region25: #{tpu_custom_call.1} parent=11 // pred_check
          %p397 = pneg %p137
        $region26: #{tpu_custom_call.1} parent=11 // pred_check_branch
          %399 = sbr.rel (%p397) target = $region28
        $region27: #{tpu_custom_call.1} parent=11 // pred_region
          _
        $region28: #{tpu_custom_call.1} parent=11 // pred_fallthru
          _
        // Predicated region
        $region29: #{tpu_custom_call.1} parent=11 // pred_check
          %p400 = pneg %p158
        $region30: #{tpu_custom_call.1} parent=11 // pred_check_branch
          %402 = sbr.rel (%p400) target = $region32
        $region31: #{tpu_custom_call.1} parent=11 // pred_region
          %404 = vsyncadd [#allocation4], 0
          %s405 = sshll.u32 %s5, 4
          %s406 = int_to_ptr.hbm [resolvable:$true] %s405
          %s407 = sshll.u32 [#allocation3], 4
          %s408 = int_to_ptr.vmem [resolvable:$true] %s407
          %413 = dma.hbm_to_vmem [thread:$0]  %s406, 2048, %s408, [#allocation4], 64, 64, 4
        $region32: #{tpu_custom_call.1} parent=11 // pred_fallthru
          _
        // Predicated region
        $region33: #{tpu_custom_call.1} parent=11 // pred_check
          %p414 = pneg %p179
        $region34: #{tpu_custom_call.1} parent=11 // pred_check_branch
          %416 = sbr.rel (%p414) target = $region36
        $region35: #{tpu_custom_call.1} parent=11 // pred_region
          _
        $region36: #{tpu_custom_call.1} parent=11 // pred_fallthru
          _
        // Predicated region
        $region37: #{tpu_custom_call.1} parent=11 // pred_check
          %p417 = pneg %p200
        $region38: #{tpu_custom_call.1} parent=11 // pred_check_branch
          %419 = sbr.rel (%p417) target = $region40
        $region39: #{tpu_custom_call.1} parent=11 // pred_region
          _
        $region40: #{tpu_custom_call.1} parent=11 // pred_fallthru
          _
        // Predicated region
        $region41: #{tpu_custom_call.1} parent=11 // pred_check
          %p420 = pneg %p221
        $region42: #{tpu_custom_call.1} parent=11 // pred_check_branch
          %422 = sbr.rel (%p420) target = $region44
        $region43: #{tpu_custom_call.1} parent=11 // pred_region
          _
        $region44: #{tpu_custom_call.1} parent=11 // pred_fallthru
          _
        // Predicated region
        $region45: #{tpu_custom_call.1} parent=11 // pred_check
          %p423 = pneg %p242
        $region46: #{tpu_custom_call.1} parent=11 // pred_check_branch
          %425 = sbr.rel (%p423) target = $region48
        $region47: #{tpu_custom_call.1} parent=11 // pred_region
          _
        $region48: #{tpu_custom_call.1} parent=11 // pred_fallthru
          _
        // Predicated region
        $region49: #{tpu_custom_call.1} parent=11 // pred_check
          %p426 = pneg %p263
        $region50: #{tpu_custom_call.1} parent=11 // pred_check_branch
          %428 = sbr.rel (%p426) target = $region52
        $region51: #{tpu_custom_call.1} parent=11 // pred_region
          _
        $region52: #{tpu_custom_call.1} parent=11 // pred_fallthru
          _
        // Predicated region
        $region53: #{tpu_custom_call.1} parent=11 // pred_check
          %p429 = pneg %p284
        $region54: #{tpu_custom_call.1} parent=11 // pred_check_branch
          %431 = sbr.rel (%p429) target = $region56
        $region55: #{tpu_custom_call.1} parent=11 // pred_region
          _
        $region56: #{tpu_custom_call.1} parent=11 // pred_fallthru
          _
        // Predicated region
        $region57: #{tpu_custom_call.1} parent=11 // pred_check
          %p432 = pneg %p305
        $region58: #{tpu_custom_call.1} parent=11 // pred_check_branch
          %434 = sbr.rel (%p432) target = $region60
        $region59: #{tpu_custom_call.1} parent=11 // pred_region
          _
        $region60: #{tpu_custom_call.1} parent=11 // pred_fallthru
          _
        // Predicated region
        $region61: #{tpu_custom_call.1} parent=11 // pred_check
          %p435 = pneg %p326
        $region62: #{tpu_custom_call.1} parent=11 // pred_check_branch
          %437 = sbr.rel (%p435) target = $region64
        $region63: #{tpu_custom_call.1} parent=11 // pred_region
          _
        $region64: #{tpu_custom_call.1} parent=11 // pred_fallthru
          _
        // Predicated region
        $region65: #{tpu_custom_call.1} parent=11 // pred_check
          %p438 = pneg %p347
        $region66: #{tpu_custom_call.1} parent=11 // pred_check_branch
          %440 = sbr.rel (%p438) target = $region68
        $region67: #{tpu_custom_call.1} parent=11 // pred_region
          _
        $region68: #{tpu_custom_call.1} parent=11 // pred_fallthru
          _
      $region12: #{tpu_custom_call.1} parent=5 // pred_fallthru
        _
      %p441 = scmp.lt.s32.totalorder %s27, 2
      // Predicated region
      $region69: #{tpu_custom_call.1} parent=5 // pred_check
        %p442 = pneg %p441
      $region70: #{tpu_custom_call.1} parent=5 // pred_check_branch
        %444 = sbr.rel (%p442) target = $region72
      $region71: #{tpu_custom_call.1} parent=5 // pred_region
        // Predicated region
        $region73: #{tpu_custom_call.1} parent=71 // pred_check
          %p445 = pneg %p47
        $region74: #{tpu_custom_call.1} parent=71 // pred_check_branch
          %447 = sbr.rel (%p445) target = $region76
        $region75: #{tpu_custom_call.1} parent=71 // pred_region
          %s448 = smul.u32 32, %s27
          %p449 = scmp.lt.s32.totalorder %s448, 63
          %s450 = scalar_select %p449, %s448, 63
          %s451 = smul.addr %s450, 8
          %s452 = scalar_lea.vmem %s0, %s451
          %s453 = smul.u32 32, %s27
        $region76: #{tpu_custom_call.1} parent=71 // pred_fallthru
          _
      $region72: #{tpu_custom_call.1} parent=5 // pred_fallthru
        _
      %p454 = scmp.le.s32.totalorder 1, %s27
      %p455 = scmp.lt.s32.totalorder %s27, 3
      %p456 = pnand %p454, %p455
      %p457 = pneg %p456
      // Predicated region
      $region77: #{tpu_custom_call.1} parent=5 // pred_check
        _
      $region78: #{tpu_custom_call.1} parent=5 // pred_check_branch
        %459 = sbr.rel (%p456) target = $region80
      $region79: #{tpu_custom_call.1} parent=5 // pred_region
        %s460 = ssub.s32 %s27, 1
        // Predicated region
        $region81: #{tpu_custom_call.1} parent=79 // pred_check
          %p461 = pneg %p158
        $region82: #{tpu_custom_call.1} parent=79 // pred_check_branch
          %463 = sbr.rel (%p461) target = $region84
        $region83: #{tpu_custom_call.1} parent=79 // pred_region
          %465 = dma.done [#allocation4], 2048
        $region84: #{tpu_custom_call.1} parent=79 // pred_fallthru
          _
        %s466 = smul.u32 32, %s32
        %p467 = scmp.lt.s32.totalorder %s466, 63
        %s468 = scalar_select %p467, %s466, 63
        %s469 = smul.addr %s468, 8
        %s470 = scalar_lea.vmem %s0, %s469
        %p471 = pneg %p53
        %p472 = pneg %p50
        %p473 = pneg %p74
        %p474 = pneg %p71
        %p475 = pneg %p95
        %p476 = pneg %p92
        %p477 = pneg %p116
        %p478 = pneg %p113
        %p479 = pneg %p137
        %p480 = pneg %p134
        %p481 = pneg %p158
        %p482 = pneg %p155
        %p483 = pneg %p179
        %p484 = pneg %p176
        %p485 = pneg %p200
        %p486 = pneg %p197
        %p487 = pneg %p221
        %p488 = pneg %p218
        %p489 = pneg %p242
        %p490 = pneg %p239
        %p491 = pneg %p263
        %p492 = pneg %p260
        %p493 = pneg %p284
        %p494 = pneg %p281
        %p495 = pneg %p305
        %p496 = pneg %p302
        %p497 = pneg %p326
        %p498 = pneg %p323
        %p499 = pneg %p347
        %p500 = pneg %p344
        %p501 = pneg %p373
        %p502 = pneg %p370
        %s503 = sand.u32 %s360, 1
        %s504 = scalar_lea.sflag [#allocation5], %s503
        %s505 = sand.u32 %s360, 1
        %s506 = smul.addr %s505, 2
        %s507 = scalar_lea.vmem [#allocation6], %s506
        %s508 = smul.u32 32, %s32
        %p509 = scmp.lt.s32.totalorder %s508, 63
        %s510 = scalar_select %p509, %s508, 63
        %s511 = smul.addr %s510, 8
        %s512 = scalar_lea.vmem %s0, %s511
        %s513 = smul.u32 32, %s32
        %s514 = smul.u32 2, %s32
        %v516 = vld [vmem:[%s512] sm:$0xff]
        %v517 = vld [vmem:[%s512 + $0x8] sm:$0xff]
        %v518 = vld [vmem:[%s512 + $0x10] sm:$0xff]
        %v519 = vld [vmem:[%s512 + $0x18] sm:$0xff]
        %v520 = vld [vmem:[%s512 + $0x20] sm:$0xff]
        %v521 = vld [vmem:[%s512 + $0x28] sm:$0xff]
        %v522 = vld [vmem:[%s512 + $0x30] sm:$0xff]
        %v523 = vld [vmem:[%s512 + $0x38] sm:$0xff]
        %v524 = vld [vmem:[%s512 + $0x40] sm:$0xff]
        %v525 = vld [vmem:[%s512 + $0x48] sm:$0xff]
        %v526 = vld [vmem:[%s512 + $0x50] sm:$0xff]
        %v527 = vld [vmem:[%s512 + $0x58] sm:$0xff]
        %v528 = vld [vmem:[%s512 + $0x60] sm:$0xff]
        %v529 = vld [vmem:[%s512 + $0x68] sm:$0xff]
        %v530 = vld [vmem:[%s512 + $0x70] sm:$0xff]
        %v531 = vld [vmem:[%s512 + $0x78] sm:$0xff]
        %v532 = vld [vmem:[%s512 + $0x80] sm:$0xff]
        %v533 = vld [vmem:[%s512 + $0x88] sm:$0xff]
        %v534 = vld [vmem:[%s512 + $0x90] sm:$0xff]
        %v535 = vld [vmem:[%s512 + $0x98] sm:$0xff]
        %v536 = vld [vmem:[%s512 + $0xa0] sm:$0xff]
        %v537 = vld [vmem:[%s512 + $0xa8] sm:$0xff]
        %v538 = vld [vmem:[%s512 + $0xb0] sm:$0xff]
        %v539 = vld [vmem:[%s512 + $0xb8] sm:$0xff]
        %v540 = vld [vmem:[%s512 + $0xc0] sm:$0xff]
        %v541 = vld [vmem:[%s512 + $0xc8] sm:$0xff]
        %v542 = vld [vmem:[%s512 + $0xd0] sm:$0xff]
        %v543 = vld [vmem:[%s512 + $0xd8] sm:$0xff]
        %v544 = vld [vmem:[%s512 + $0xe0] sm:$0xff]
        %v545 = vld [vmem:[%s512 + $0xe8] sm:$0xff]
        %v546 = vld [vmem:[%s512 + $0xf0] sm:$0xff]
        %v547 = vld [vmem:[%s512 + $0xf8] sm:$0xff]
        %v548 = vld [vmem:[%s1] sm:$0xff]
        %v549 = vld [vmem:[%s2] sm:$0xf]
        %v551 = vperm.slane %v549, 0
        %v552 = vperm.slane %v549, 1
        %v553 = vperm.slane %v549, 2
        %v554 = vperm.slane %v549, 3
        %560 = vst [vmem:[#allocation1] ss:$4 sm:$0xff] %v548
        %v561 = vld.sshfl [vmem:[#allocation1] sm:$0xff pattern:$0x73625140]
        %v562 = vld.sshfl [vmem:[#allocation1 + $0x8] sm:$0xff pattern:$0x73625140]
        %v563 = vld.sshfl [vmem:[#allocation1 + $0x10] sm:$0xff pattern:$0x73625140]
        %v564 = vld.sshfl [vmem:[#allocation1 + $0x18] sm:$0xff pattern:$0x73625140]
        %vm565 = vcmask 15360
        %v567 = vsel %vm565, %v516, 0
        %v570 = vsel %vm565, %v517, 0
        %v573 = vsel %vm565, %v518, 0
        %v576 = vsel %vm565, %v519, 0
        %v579 = vsel %vm565, %v520, 0
        %v582 = vsel %vm565, %v521, 0
        %v585 = vsel %vm565, %v522, 0
        %v588 = vsel %vm565, %v523, 0
        %v591 = vsel %vm565, %v524, 0
        %v594 = vsel %vm565, %v525, 0
        %v597 = vsel %vm565, %v526, 0
        %v600 = vsel %vm565, %v527, 0
        %v603 = vsel %vm565, %v528, 0
        %v606 = vsel %vm565, %v529, 0
        %v609 = vsel %vm565, %v530, 0
        %v612 = vsel %vm565, %v531, 0
        %v615 = vsel %vm565, %v532, 0
        %v618 = vsel %vm565, %v533, 0
        %v621 = vsel %vm565, %v534, 0
        %v624 = vsel %vm565, %v535, 0
        %v627 = vsel %vm565, %v536, 0
        %v630 = vsel %vm565, %v537, 0
        %v633 = vsel %vm565, %v538, 0
        %v636 = vsel %vm565, %v539, 0
        %v639 = vsel %vm565, %v540, 0
        %v642 = vsel %vm565, %v541, 0
        %v645 = vsel %vm565, %v542, 0
        %v648 = vsel %vm565, %v543, 0
        %v651 = vsel %vm565, %v544, 0
        %v654 = vsel %vm565, %v545, 0
        %v657 = vsel %vm565, %v546, 0
        %v660 = vsel %vm565, %v547, 0
        %vm662 = vcmask 1041408
        %v663 = vsel %vm662, %v561, 0
        %v665 = vsel %vm662, %v562, 0
        %v667 = vsel %vm662, %v563, 0
        %v669 = vsel %vm662, %v564, 0
        %671 = vmatpush.msra.mxu0 0.0
        %672 = vmatpush.msra.mxu0 0.0
        %673 = vmatpush.msra.mxu0 0.0
        %674 = vmatpush.msra.mxu0 0.0
        %675 = vmatpush.msra.mxu0 0.0
        %676 = vmatpush.msra.mxu0 0.0
        %677 = vmatpush.msra.mxu0 0.0
        %678 = vmatpush.msra.mxu0 0.0
        %679 = vmatpush.msra.mxu0 0.0
        %680 = vmatpush.msra.mxu0 0.0
        %681 = vmatpush.msra.mxu0 0.0
        %682 = vmatpush.msra.mxu0 0.0
        %683 = vmatpush.msra.mxu0 0.0
        %684 = vmatpush.msra.mxu0 0.0
        %685 = vmatpush.msra.mxu0 0.0
        %686 = vmatpush.msra.mxu0 %v663
        %687 = vmatmul.f32.gmra.mxu0 %v567
        %v688 = vpop.f32.mrf.mxu0
        %v689 = vadd.f32 %v551, %v688
        %690 = vmatmul.f32.gmra.mxu0 %v570
        %v691 = vpop.f32.mrf.mxu0
        %v692 = vadd.f32 %v551, %v691
        %693 = vmatmul.f32.gmra.mxu0 %v573
        %v694 = vpop.f32.mrf.mxu0
        %v695 = vadd.f32 %v551, %v694
        %696 = vmatmul.f32.gmra.mxu0 %v576
        %v697 = vpop.f32.mrf.mxu0
        %v698 = vadd.f32 %v551, %v697
        %699 = vmatmul.f32.gmra.mxu0 %v579
        %v700 = vpop.f32.mrf.mxu0
        %v701 = vadd.f32 %v551, %v700
        %702 = vmatmul.f32.gmra.mxu0 %v582
        %v703 = vpop.f32.mrf.mxu0
        %v704 = vadd.f32 %v551, %v703
        %705 = vmatmul.f32.gmra.mxu0 %v585
        %v706 = vpop.f32.mrf.mxu0
        %v707 = vadd.f32 %v551, %v706
        %708 = vmatmul.f32.gmra.mxu0 %v588
        %v709 = vpop.f32.mrf.mxu0
        %v710 = vadd.f32 %v551, %v709
        %711 = vmatmul.f32.gmra.mxu0 %v591
        %v712 = vpop.f32.mrf.mxu0
        %v713 = vadd.f32 %v551, %v712
        %714 = vmatmul.f32.gmra.mxu0 %v594
        %v715 = vpop.f32.mrf.mxu0
        %v716 = vadd.f32 %v551, %v715
        %717 = vmatmul.f32.gmra.mxu0 %v597
        %v718 = vpop.f32.mrf.mxu0
        %v719 = vadd.f32 %v551, %v718
        %720 = vmatmul.f32.gmra.mxu0 %v600
        %v721 = vpop.f32.mrf.mxu0
        %v722 = vadd.f32 %v551, %v721
        %723 = vmatmul.f32.gmra.mxu0 %v603
        %v724 = vpop.f32.mrf.mxu0
        %v725 = vadd.f32 %v551, %v724
        %726 = vmatmul.f32.gmra.mxu0 %v606
        %v727 = vpop.f32.mrf.mxu0
        %v728 = vadd.f32 %v551, %v727
        %729 = vmatmul.f32.gmra.mxu0 %v609
        %v730 = vpop.f32.mrf.mxu0
        %v731 = vadd.f32 %v551, %v730
        %732 = vmatmul.f32.gmra.mxu0 %v612
        %v733 = vpop.f32.mrf.mxu0
        %v734 = vadd.f32 %v551, %v733
        %735 = vmatmul.f32.gmra.mxu0 %v615
        %v736 = vpop.f32.mrf.mxu0
        %v737 = vadd.f32 %v551, %v736
        %738 = vmatmul.f32.gmra.mxu0 %v618
        %v739 = vpop.f32.mrf.mxu0
        %v740 = vadd.f32 %v551, %v739
        %741 = vmatmul.f32.gmra.mxu0 %v621
        %v742 = vpop.f32.mrf.mxu0
        %v743 = vadd.f32 %v551, %v742
        %744 = vmatmul.f32.gmra.mxu0 %v624
        %v745 = vpop.f32.mrf.mxu0
        %v746 = vadd.f32 %v551, %v745
        %747 = vmatmul.f32.gmra.mxu0 %v627
        %v748 = vpop.f32.mrf.mxu0
        %v749 = vadd.f32 %v551, %v748
        %750 = vmatmul.f32.gmra.mxu0 %v630
        %v751 = vpop.f32.mrf.mxu0
        %v752 = vadd.f32 %v551, %v751
        %753 = vmatmul.f32.gmra.mxu0 %v633
        %v754 = vpop.f32.mrf.mxu0
        %v755 = vadd.f32 %v551, %v754
        %756 = vmatmul.f32.gmra.mxu0 %v636
        %v757 = vpop.f32.mrf.mxu0
        %v758 = vadd.f32 %v551, %v757
        %759 = vmatmul.f32.gmra.mxu0 %v639
        %v760 = vpop.f32.mrf.mxu0
        %v761 = vadd.f32 %v551, %v760
        %762 = vmatmul.f32.gmra.mxu0 %v642
        %v763 = vpop.f32.mrf.mxu0
        %v764 = vadd.f32 %v551, %v763
        %765 = vmatmul.f32.gmra.mxu0 %v645
        %v766 = vpop.f32.mrf.mxu0
        %v767 = vadd.f32 %v551, %v766
        %768 = vmatmul.f32.gmra.mxu0 %v648
        %v769 = vpop.f32.mrf.mxu0
        %v770 = vadd.f32 %v551, %v769
        %771 = vmatmul.f32.gmra.mxu0 %v651
        %v772 = vpop.f32.mrf.mxu0
        %v773 = vadd.f32 %v551, %v772
        %774 = vmatmul.f32.gmra.mxu0 %v654
        %v775 = vpop.f32.mrf.mxu0
        %v776 = vadd.f32 %v551, %v775
        %777 = vmatmul.f32.gmra.mxu0 %v657
        %v778 = vpop.f32.mrf.mxu0
        %v779 = vadd.f32 %v551, %v778
        %780 = vmatmul.f32.gmra.mxu0 %v660
        %v781 = vpop.f32.mrf.mxu0
        %v782 = vadd.f32 %v551, %v781
        %783 = vdwg.mxu0
        %784 = vmatpush.msra.mxu0 0.0
        %785 = vmatpush.msra.mxu0 0.0
        %786 = vmatpush.msra.mxu0 0.0
        %787 = vmatpush.msra.mxu0 0.0
        %788 = vmatpush.msra.mxu0 0.0
        %789 = vmatpush.msra.mxu0 0.0
        %790 = vmatpush.msra.mxu0 0.0
        %791 = vmatpush.msra.mxu0 0.0
        %792 = vmatpush.msra.mxu0 0.0
        %793 = vmatpush.msra.mxu0 0.0
        %794 = vmatpush.msra.mxu0 0.0
        %795 = vmatpush.msra.mxu0 0.0
        %796 = vmatpush.msra.mxu0 0.0
        %797 = vmatpush.msra.mxu0 0.0
        %798 = vmatpush.msra.mxu0 0.0
        %799 = vmatpush.msra.mxu0 %v665
        %800 = vmatmul.f32.gmra.mxu0 %v567
        %v801 = vpop.f32.mrf.mxu0
        %v802 = vadd.f32 %v552, %v801
        %803 = vmatmul.f32.gmra.mxu0 %v570
        %v804 = vpop.f32.mrf.mxu0
        %v805 = vadd.f32 %v552, %v804
        %806 = vmatmul.f32.gmra.mxu0 %v573
        %v807 = vpop.f32.mrf.mxu0
        %v808 = vadd.f32 %v552, %v807
        %809 = vmatmul.f32.gmra.mxu0 %v576
        %v810 = vpop.f32.mrf.mxu0
        %v811 = vadd.f32 %v552, %v810
        %812 = vmatmul.f32.gmra.mxu0 %v579
        %v813 = vpop.f32.mrf.mxu0
        %v814 = vadd.f32 %v552, %v813
        %815 = vmatmul.f32.gmra.mxu0 %v582
        %v816 = vpop.f32.mrf.mxu0
        %v817 = vadd.f32 %v552, %v816
        %818 = vmatmul.f32.gmra.mxu0 %v585
        %v819 = vpop.f32.mrf.mxu0
        %v820 = vadd.f32 %v552, %v819
        %821 = vmatmul.f32.gmra.mxu0 %v588
        %v822 = vpop.f32.mrf.mxu0
        %v823 = vadd.f32 %v552, %v822
        %824 = vmatmul.f32.gmra.mxu0 %v591
        %v825 = vpop.f32.mrf.mxu0
        %v826 = vadd.f32 %v552, %v825
        %827 = vmatmul.f32.gmra.mxu0 %v594
        %v828 = vpop.f32.mrf.mxu0
        %v829 = vadd.f32 %v552, %v828
        %830 = vmatmul.f32.gmra.mxu0 %v597
        %v831 = vpop.f32.mrf.mxu0
        %v832 = vadd.f32 %v552, %v831
        %833 = vmatmul.f32.gmra.mxu0 %v600
        %v834 = vpop.f32.mrf.mxu0
        %v835 = vadd.f32 %v552, %v834
        %836 = vmatmul.f32.gmra.mxu0 %v603
        %v837 = vpop.f32.mrf.mxu0
        %v838 = vadd.f32 %v552, %v837
        %839 = vmatmul.f32.gmra.mxu0 %v606
        %v840 = vpop.f32.mrf.mxu0
        %v841 = vadd.f32 %v552, %v840
        %842 = vmatmul.f32.gmra.mxu0 %v609
        %v843 = vpop.f32.mrf.mxu0
        %v844 = vadd.f32 %v552, %v843
        %845 = vmatmul.f32.gmra.mxu0 %v612
        %v846 = vpop.f32.mrf.mxu0
        %v847 = vadd.f32 %v552, %v846
        %848 = vmatmul.f32.gmra.mxu0 %v615
        %v849 = vpop.f32.mrf.mxu0
        %v850 = vadd.f32 %v552, %v849
        %851 = vmatmul.f32.gmra.mxu0 %v618
        %v852 = vpop.f32.mrf.mxu0
        %v853 = vadd.f32 %v552, %v852
        %854 = vmatmul.f32.gmra.mxu0 %v621
        %v855 = vpop.f32.mrf.mxu0
        %v856 = vadd.f32 %v552, %v855
        %857 = vmatmul.f32.gmra.mxu0 %v624
        %v858 = vpop.f32.mrf.mxu0
        %v859 = vadd.f32 %v552, %v858
        %860 = vmatmul.f32.gmra.mxu0 %v627
        %v861 = vpop.f32.mrf.mxu0
        %v862 = vadd.f32 %v552, %v861
        %863 = vmatmul.f32.gmra.mxu0 %v630
        %v864 = vpop.f32.mrf.mxu0
        %v865 = vadd.f32 %v552, %v864
        %866 = vmatmul.f32.gmra.mxu0 %v633
        %v867 = vpop.f32.mrf.mxu0
        %v868 = vadd.f32 %v552, %v867
        %869 = vmatmul.f32.gmra.mxu0 %v636
        %v870 = vpop.f32.mrf.mxu0
        %v871 = vadd.f32 %v552, %v870
        %872 = vmatmul.f32.gmra.mxu0 %v639
        %v873 = vpop.f32.mrf.mxu0
        %v874 = vadd.f32 %v552, %v873
        %875 = vmatmul.f32.gmra.mxu0 %v642
        %v876 = vpop.f32.mrf.mxu0
        %v877 = vadd.f32 %v552, %v876
        %878 = vmatmul.f32.gmra.mxu0 %v645
        %v879 = vpop.f32.mrf.mxu0
        %v880 = vadd.f32 %v552, %v879
        %881 = vmatmul.f32.gmra.mxu0 %v648
        %v882 = vpop.f32.mrf.mxu0
        %v883 = vadd.f32 %v552, %v882
        %884 = vmatmul.f32.gmra.mxu0 %v651
        %v885 = vpop.f32.mrf.mxu0
        %v886 = vadd.f32 %v552, %v885
        %887 = vmatmul.f32.gmra.mxu0 %v654
        %v888 = vpop.f32.mrf.mxu0
        %v889 = vadd.f32 %v552, %v888
        %890 = vmatmul.f32.gmra.mxu0 %v657
        %v891 = vpop.f32.mrf.mxu0
        %v892 = vadd.f32 %v552, %v891
        %893 = vmatmul.f32.gmra.mxu0 %v660
        %v894 = vpop.f32.mrf.mxu0
        %v895 = vadd.f32 %v552, %v894
        %896 = vdwg.mxu0
        %897 = vmatpush.msra.mxu0 0.0
        %898 = vmatpush.msra.mxu0 0.0
        %899 = vmatpush.msra.mxu0 0.0
        %900 = vmatpush.msra.mxu0 0.0
        %901 = vmatpush.msra.mxu0 0.0
        %902 = vmatpush.msra.mxu0 0.0
        %903 = vmatpush.msra.mxu0 0.0
        %904 = vmatpush.msra.mxu0 0.0
        %905 = vmatpush.msra.mxu0 0.0
        %906 = vmatpush.msra.mxu0 0.0
        %907 = vmatpush.msra.mxu0 0.0
        %908 = vmatpush.msra.mxu0 0.0
        %909 = vmatpush.msra.mxu0 0.0
        %910 = vmatpush.msra.mxu0 0.0
        %911 = vmatpush.msra.mxu0 0.0
        %912 = vmatpush.msra.mxu0 %v667
        %913 = vmatmul.f32.gmra.mxu0 %v567
        %v914 = vpop.f32.mrf.mxu0
        %v915 = vadd.f32 %v553, %v914
        %916 = vmatmul.f32.gmra.mxu0 %v570
        %v917 = vpop.f32.mrf.mxu0
        %v918 = vadd.f32 %v553, %v917
        %919 = vmatmul.f32.gmra.mxu0 %v573
        %v920 = vpop.f32.mrf.mxu0
        %v921 = vadd.f32 %v553, %v920
        %922 = vmatmul.f32.gmra.mxu0 %v576
        %v923 = vpop.f32.mrf.mxu0
        %v924 = vadd.f32 %v553, %v923
        %925 = vmatmul.f32.gmra.mxu0 %v579
        %v926 = vpop.f32.mrf.mxu0
        %v927 = vadd.f32 %v553, %v926
        %928 = vmatmul.f32.gmra.mxu0 %v582
        %v929 = vpop.f32.mrf.mxu0
        %v930 = vadd.f32 %v553, %v929
        %931 = vmatmul.f32.gmra.mxu0 %v585
        %v932 = vpop.f32.mrf.mxu0
        %v933 = vadd.f32 %v553, %v932
        %934 = vmatmul.f32.gmra.mxu0 %v588
        %v935 = vpop.f32.mrf.mxu0
        %v936 = vadd.f32 %v553, %v935
        %937 = vmatmul.f32.gmra.mxu0 %v591
        %v938 = vpop.f32.mrf.mxu0
        %v939 = vadd.f32 %v553, %v938
        %940 = vmatmul.f32.gmra.mxu0 %v594
        %v941 = vpop.f32.mrf.mxu0
        %v942 = vadd.f32 %v553, %v941
        %943 = vmatmul.f32.gmra.mxu0 %v597
        %v944 = vpop.f32.mrf.mxu0
        %v945 = vadd.f32 %v553, %v944
        %946 = vmatmul.f32.gmra.mxu0 %v600
        %v947 = vpop.f32.mrf.mxu0
        %v948 = vadd.f32 %v553, %v947
        %949 = vmatmul.f32.gmra.mxu0 %v603
        %v950 = vpop.f32.mrf.mxu0
        %v951 = vadd.f32 %v553, %v950
        %952 = vmatmul.f32.gmra.mxu0 %v606
        %v953 = vpop.f32.mrf.mxu0
        %v954 = vadd.f32 %v553, %v953
        %955 = vmatmul.f32.gmra.mxu0 %v609
        %v956 = vpop.f32.mrf.mxu0
        %v957 = vadd.f32 %v553, %v956
        %958 = vmatmul.f32.gmra.mxu0 %v612
        %v959 = vpop.f32.mrf.mxu0
        %v960 = vadd.f32 %v553, %v959
        %961 = vmatmul.f32.gmra.mxu0 %v615
        %v962 = vpop.f32.mrf.mxu0
        %v963 = vadd.f32 %v553, %v962
        %964 = vmatmul.f32.gmra.mxu0 %v618
        %v965 = vpop.f32.mrf.mxu0
        %v966 = vadd.f32 %v553, %v965
        %967 = vmatmul.f32.gmra.mxu0 %v621
        %v968 = vpop.f32.mrf.mxu0
        %v969 = vadd.f32 %v553, %v968
        %970 = vmatmul.f32.gmra.mxu0 %v624
        %v971 = vpop.f32.mrf.mxu0
        %v972 = vadd.f32 %v553, %v971
        %973 = vmatmul.f32.gmra.mxu0 %v627
        %v974 = vpop.f32.mrf.mxu0
        %v975 = vadd.f32 %v553, %v974
        %976 = vmatmul.f32.gmra.mxu0 %v630
        %v977 = vpop.f32.mrf.mxu0
        %v978 = vadd.f32 %v553, %v977
        %979 = vmatmul.f32.gmra.mxu0 %v633
        %v980 = vpop.f32.mrf.mxu0
        %v981 = vadd.f32 %v553, %v980
        %982 = vmatmul.f32.gmra.mxu0 %v636
        %v983 = vpop.f32.mrf.mxu0
        %v984 = vadd.f32 %v553, %v983
        %985 = vmatmul.f32.gmra.mxu0 %v639
        %v986 = vpop.f32.mrf.mxu0
        %v987 = vadd.f32 %v553, %v986
        %988 = vmatmul.f32.gmra.mxu0 %v642
        %v989 = vpop.f32.mrf.mxu0
        %v990 = vadd.f32 %v553, %v989
        %991 = vmatmul.f32.gmra.mxu0 %v645
        %v992 = vpop.f32.mrf.mxu0
        %v993 = vadd.f32 %v553, %v992
        %994 = vmatmul.f32.gmra.mxu0 %v648
        %v995 = vpop.f32.mrf.mxu0
        %v996 = vadd.f32 %v553, %v995
        %997 = vmatmul.f32.gmra.mxu0 %v651
        %v998 = vpop.f32.mrf.mxu0
        %v999 = vadd.f32 %v553, %v998
        %1000 = vmatmul.f32.gmra.mxu0 %v654
        %v1001 = vpop.f32.mrf.mxu0
        %v1002 = vadd.f32 %v553, %v1001
        %1003 = vmatmul.f32.gmra.mxu0 %v657
        %v1004 = vpop.f32.mrf.mxu0
        %v1005 = vadd.f32 %v553, %v1004
        %1006 = vmatmul.f32.gmra.mxu0 %v660
        %v1007 = vpop.f32.mrf.mxu0
        %v1008 = vadd.f32 %v553, %v1007
        %1009 = vdwg.mxu0
        %1010 = vmatpush.msra.mxu0 0.0
        %1011 = vmatpush.msra.mxu0 0.0
        %1012 = vmatpush.msra.mxu0 0.0
        %1013 = vmatpush.msra.mxu0 0.0
        %1014 = vmatpush.msra.mxu0 0.0
        %1015 = vmatpush.msra.mxu0 0.0
        %1016 = vmatpush.msra.mxu0 0.0
        %1017 = vmatpush.msra.mxu0 0.0
        %1018 = vmatpush.msra.mxu0 0.0
        %1019 = vmatpush.msra.mxu0 0.0
        %1020 = vmatpush.msra.mxu0 0.0
        %1021 = vmatpush.msra.mxu0 0.0
        %1022 = vmatpush.msra.mxu0 0.0
        %1023 = vmatpush.msra.mxu0 0.0
        %1024 = vmatpush.msra.mxu0 0.0
        %1025 = vmatpush.msra.mxu0 %v669
        %1026 = vmatmul.f32.gmra.mxu0 %v567
        %v1027 = vpop.f32.mrf.mxu0
        %v1028 = vadd.f32 %v554, %v1027
        %1029 = vmatmul.f32.gmra.mxu0 %v570
        %v1030 = vpop.f32.mrf.mxu0
        %v1031 = vadd.f32 %v554, %v1030
        %1032 = vmatmul.f32.gmra.mxu0 %v573
        %v1033 = vpop.f32.mrf.mxu0
        %v1034 = vadd.f32 %v554, %v1033
        %1035 = vmatmul.f32.gmra.mxu0 %v576
        %v1036 = vpop.f32.mrf.mxu0
        %v1037 = vadd.f32 %v554, %v1036
        %1038 = vmatmul.f32.gmra.mxu0 %v579
        %v1039 = vpop.f32.mrf.mxu0
        %v1040 = vadd.f32 %v554, %v1039
        %1041 = vmatmul.f32.gmra.mxu0 %v582
        %v1042 = vpop.f32.mrf.mxu0
        %v1043 = vadd.f32 %v554, %v1042
        %1044 = vmatmul.f32.gmra.mxu0 %v585
        %v1045 = vpop.f32.mrf.mxu0
        %v1046 = vadd.f32 %v554, %v1045
        %1047 = vmatmul.f32.gmra.mxu0 %v588
        %v1048 = vpop.f32.mrf.mxu0
        %v1049 = vadd.f32 %v554, %v1048
        %1050 = vmatmul.f32.gmra.mxu0 %v591
        %v1051 = vpop.f32.mrf.mxu0
        %v1052 = vadd.f32 %v554, %v1051
        %1053 = vmatmul.f32.gmra.mxu0 %v594
        %v1054 = vpop.f32.mrf.mxu0
        %v1055 = vadd.f32 %v554, %v1054
        %1056 = vmatmul.f32.gmra.mxu0 %v597
        %v1057 = vpop.f32.mrf.mxu0
        %v1058 = vadd.f32 %v554, %v1057
        %1059 = vmatmul.f32.gmra.mxu0 %v600
        %v1060 = vpop.f32.mrf.mxu0
        %v1061 = vadd.f32 %v554, %v1060
        %1062 = vmatmul.f32.gmra.mxu0 %v603
        %v1063 = vpop.f32.mrf.mxu0
        %v1064 = vadd.f32 %v554, %v1063
        %1065 = vmatmul.f32.gmra.mxu0 %v606
        %v1066 = vpop.f32.mrf.mxu0
        %v1067 = vadd.f32 %v554, %v1066
        %1068 = vmatmul.f32.gmra.mxu0 %v609
        %v1069 = vpop.f32.mrf.mxu0
        %v1070 = vadd.f32 %v554, %v1069
        %1071 = vmatmul.f32.gmra.mxu0 %v612
        %v1072 = vpop.f32.mrf.mxu0
        %v1073 = vadd.f32 %v554, %v1072
        %1074 = vmatmul.f32.gmra.mxu0 %v615
        %v1075 = vpop.f32.mrf.mxu0
        %v1076 = vadd.f32 %v554, %v1075
        %1077 = vmatmul.f32.gmra.mxu0 %v618
        %v1078 = vpop.f32.mrf.mxu0
        %v1079 = vadd.f32 %v554, %v1078
        %1080 = vmatmul.f32.gmra.mxu0 %v621
        %v1081 = vpop.f32.mrf.mxu0
        %v1082 = vadd.f32 %v554, %v1081
        %1083 = vmatmul.f32.gmra.mxu0 %v624
        %v1084 = vpop.f32.mrf.mxu0
        %v1085 = vadd.f32 %v554, %v1084
        %1086 = vmatmul.f32.gmra.mxu0 %v627
        %v1087 = vpop.f32.mrf.mxu0
        %v1088 = vadd.f32 %v554, %v1087
        %1089 = vmatmul.f32.gmra.mxu0 %v630
        %v1090 = vpop.f32.mrf.mxu0
        %v1091 = vadd.f32 %v554, %v1090
        %1092 = vmatmul.f32.gmra.mxu0 %v633
        %v1093 = vpop.f32.mrf.mxu0
        %v1094 = vadd.f32 %v554, %v1093
        %1095 = vmatmul.f32.gmra.mxu0 %v636
        %v1096 = vpop.f32.mrf.mxu0
        %v1097 = vadd.f32 %v554, %v1096
        %1098 = vmatmul.f32.gmra.mxu0 %v639
        %v1099 = vpop.f32.mrf.mxu0
        %v1100 = vadd.f32 %v554, %v1099
        %1101 = vmatmul.f32.gmra.mxu0 %v642
        %v1102 = vpop.f32.mrf.mxu0
        %v1103 = vadd.f32 %v554, %v1102
        %1104 = vmatmul.f32.gmra.mxu0 %v645
        %v1105 = vpop.f32.mrf.mxu0
        %v1106 = vadd.f32 %v554, %v1105
        %1107 = vmatmul.f32.gmra.mxu0 %v648
        %v1108 = vpop.f32.mrf.mxu0
        %v1109 = vadd.f32 %v554, %v1108
        %1110 = vmatmul.f32.gmra.mxu0 %v651
        %v1111 = vpop.f32.mrf.mxu0
        %v1112 = vadd.f32 %v554, %v1111
        %1113 = vmatmul.f32.gmra.mxu0 %v654
        %v1114 = vpop.f32.mrf.mxu0
        %v1115 = vadd.f32 %v554, %v1114
        %1116 = vmatmul.f32.gmra.mxu0 %v657
        %v1117 = vpop.f32.mrf.mxu0
        %v1118 = vadd.f32 %v554, %v1117
        %1119 = vmatmul.f32.gmra.mxu0 %v660
        %v1120 = vpop.f32.mrf.mxu0
        %v1121 = vadd.f32 %v554, %v1120
        %1122 = vdwg.mxu0
        %vm1123 = vcmp.gt.f32.partialorder %v689, 0.0
        %vm1124 = vcmp.gt.f32.partialorder %v802, 0.0
        %vm1125 = vcmp.gt.f32.partialorder %v915, 0.0
        %vm1126 = vcmp.gt.f32.partialorder %v1028, 0.0
        %vm1127 = vcmp.gt.f32.partialorder %v692, 0.0
        %vm1128 = vcmp.gt.f32.partialorder %v805, 0.0
        %vm1129 = vcmp.gt.f32.partialorder %v918, 0.0
        %vm1130 = vcmp.gt.f32.partialorder %v1031, 0.0
        %vm1131 = vcmp.gt.f32.partialorder %v695, 0.0
        %vm1132 = vcmp.gt.f32.partialorder %v808, 0.0
        %vm1133 = vcmp.gt.f32.partialorder %v921, 0.0
        %vm1134 = vcmp.gt.f32.partialorder %v1034, 0.0
        %vm1135 = vcmp.gt.f32.partialorder %v698, 0.0
        %vm1136 = vcmp.gt.f32.partialorder %v811, 0.0
        %vm1137 = vcmp.gt.f32.partialorder %v924, 0.0
        %vm1138 = vcmp.gt.f32.partialorder %v1037, 0.0
        %vm1139 = vcmp.gt.f32.partialorder %v701, 0.0
        %vm1140 = vcmp.gt.f32.partialorder %v814, 0.0
        %vm1141 = vcmp.gt.f32.partialorder %v927, 0.0
        %vm1142 = vcmp.gt.f32.partialorder %v1040, 0.0
        %vm1143 = vcmp.gt.f32.partialorder %v704, 0.0
        %vm1144 = vcmp.gt.f32.partialorder %v817, 0.0
        %vm1145 = vcmp.gt.f32.partialorder %v930, 0.0
        %vm1146 = vcmp.gt.f32.partialorder %v1043, 0.0
        %vm1147 = vcmp.gt.f32.partialorder %v707, 0.0
        %vm1148 = vcmp.gt.f32.partialorder %v820, 0.0
        %vm1149 = vcmp.gt.f32.partialorder %v933, 0.0
        %vm1150 = vcmp.gt.f32.partialorder %v1046, 0.0
        %vm1151 = vcmp.gt.f32.partialorder %v710, 0.0
        %vm1152 = vcmp.gt.f32.partialorder %v823, 0.0
        %vm1153 = vcmp.gt.f32.partialorder %v936, 0.0
        %vm1154 = vcmp.gt.f32.partialorder %v1049, 0.0
        %vm1155 = vcmp.gt.f32.partialorder %v713, 0.0
        %vm1156 = vcmp.gt.f32.partialorder %v826, 0.0
        %vm1157 = vcmp.gt.f32.partialorder %v939, 0.0
        %vm1158 = vcmp.gt.f32.partialorder %v1052, 0.0
        %vm1159 = vcmp.gt.f32.partialorder %v716, 0.0
        %vm1160 = vcmp.gt.f32.partialorder %v829, 0.0
        %vm1161 = vcmp.gt.f32.partialorder %v942, 0.0
        %vm1162 = vcmp.gt.f32.partialorder %v1055, 0.0
        %vm1163 = vcmp.gt.f32.partialorder %v719, 0.0
        %vm1164 = vcmp.gt.f32.partialorder %v832, 0.0
        %vm1165 = vcmp.gt.f32.partialorder %v945, 0.0
        %vm1166 = vcmp.gt.f32.partialorder %v1058, 0.0
        %vm1167 = vcmp.gt.f32.partialorder %v722, 0.0
        %vm1168 = vcmp.gt.f32.partialorder %v835, 0.0
        %vm1169 = vcmp.gt.f32.partialorder %v948, 0.0
        %vm1170 = vcmp.gt.f32.partialorder %v1061, 0.0
        %vm1171 = vcmp.gt.f32.partialorder %v725, 0.0
        %vm1172 = vcmp.gt.f32.partialorder %v838, 0.0
        %vm1173 = vcmp.gt.f32.partialorder %v951, 0.0
        %vm1174 = vcmp.gt.f32.partialorder %v1064, 0.0
        %vm1175 = vcmp.gt.f32.partialorder %v728, 0.0
        %vm1176 = vcmp.gt.f32.partialorder %v841, 0.0
        %vm1177 = vcmp.gt.f32.partialorder %v954, 0.0
        %vm1178 = vcmp.gt.f32.partialorder %v1067, 0.0
        %vm1179 = vcmp.gt.f32.partialorder %v731, 0.0
        %vm1180 = vcmp.gt.f32.partialorder %v844, 0.0
        %vm1181 = vcmp.gt.f32.partialorder %v957, 0.0
        %vm1182 = vcmp.gt.f32.partialorder %v1070, 0.0
        %vm1183 = vcmp.gt.f32.partialorder %v734, 0.0
        %vm1184 = vcmp.gt.f32.partialorder %v847, 0.0
        %vm1185 = vcmp.gt.f32.partialorder %v960, 0.0
        %vm1186 = vcmp.gt.f32.partialorder %v1073, 0.0
        %vm1187 = vcmp.gt.f32.partialorder %v737, 0.0
        %vm1188 = vcmp.gt.f32.partialorder %v850, 0.0
        %vm1189 = vcmp.gt.f32.partialorder %v963, 0.0
        %vm1190 = vcmp.gt.f32.partialorder %v1076, 0.0
        %vm1191 = vcmp.gt.f32.partialorder %v740, 0.0
        %vm1192 = vcmp.gt.f32.partialorder %v853, 0.0
        %vm1193 = vcmp.gt.f32.partialorder %v966, 0.0
        %vm1194 = vcmp.gt.f32.partialorder %v1079, 0.0
        %vm1195 = vcmp.gt.f32.partialorder %v743, 0.0
        %vm1196 = vcmp.gt.f32.partialorder %v856, 0.0
        %vm1197 = vcmp.gt.f32.partialorder %v969, 0.0
        %vm1198 = vcmp.gt.f32.partialorder %v1082, 0.0
        %vm1199 = vcmp.gt.f32.partialorder %v746, 0.0
        %vm1200 = vcmp.gt.f32.partialorder %v859, 0.0
        %vm1201 = vcmp.gt.f32.partialorder %v972, 0.0
        %vm1202 = vcmp.gt.f32.partialorder %v1085, 0.0
        %vm1203 = vcmp.gt.f32.partialorder %v749, 0.0
        %vm1204 = vcmp.gt.f32.partialorder %v862, 0.0
        %vm1205 = vcmp.gt.f32.partialorder %v975, 0.0
        %vm1206 = vcmp.gt.f32.partialorder %v1088, 0.0
        %vm1207 = vcmp.gt.f32.partialorder %v752, 0.0
        %vm1208 = vcmp.gt.f32.partialorder %v865, 0.0
        %vm1209 = vcmp.gt.f32.partialorder %v978, 0.0
        %vm1210 = vcmp.gt.f32.partialorder %v1091, 0.0
        %vm1211 = vcmp.gt.f32.partialorder %v755, 0.0
        %vm1212 = vcmp.gt.f32.partialorder %v868, 0.0
        %vm1213 = vcmp.gt.f32.partialorder %v981, 0.0
        %vm1214 = vcmp.gt.f32.partialorder %v1094, 0.0
        %vm1215 = vcmp.gt.f32.partialorder %v758, 0.0
        %vm1216 = vcmp.gt.f32.partialorder %v871, 0.0
        %vm1217 = vcmp.gt.f32.partialorder %v984, 0.0
        %vm1218 = vcmp.gt.f32.partialorder %v1097, 0.0
        %vm1219 = vcmp.gt.f32.partialorder %v761, 0.0
        %vm1220 = vcmp.gt.f32.partialorder %v874, 0.0
        %vm1221 = vcmp.gt.f32.partialorder %v987, 0.0
        %vm1222 = vcmp.gt.f32.partialorder %v1100, 0.0
        %vm1223 = vcmp.gt.f32.partialorder %v764, 0.0
        %vm1224 = vcmp.gt.f32.partialorder %v877, 0.0
        %vm1225 = vcmp.gt.f32.partialorder %v990, 0.0
        %vm1226 = vcmp.gt.f32.partialorder %v1103, 0.0
        %vm1227 = vcmp.gt.f32.partialorder %v767, 0.0
        %vm1228 = vcmp.gt.f32.partialorder %v880, 0.0
        %vm1229 = vcmp.gt.f32.partialorder %v993, 0.0
        %vm1230 = vcmp.gt.f32.partialorder %v1106, 0.0
        %vm1231 = vcmp.gt.f32.partialorder %v770, 0.0
        %vm1232 = vcmp.gt.f32.partialorder %v883, 0.0
        %vm1233 = vcmp.gt.f32.partialorder %v996, 0.0
        %vm1234 = vcmp.gt.f32.partialorder %v1109, 0.0
        %vm1235 = vcmp.gt.f32.partialorder %v773, 0.0
        %vm1236 = vcmp.gt.f32.partialorder %v886, 0.0
        %vm1237 = vcmp.gt.f32.partialorder %v999, 0.0
        %vm1238 = vcmp.gt.f32.partialorder %v1112, 0.0
        %vm1239 = vcmp.gt.f32.partialorder %v776, 0.0
        %vm1240 = vcmp.gt.f32.partialorder %v889, 0.0
        %vm1241 = vcmp.gt.f32.partialorder %v1002, 0.0
        %vm1242 = vcmp.gt.f32.partialorder %v1115, 0.0
        %vm1243 = vcmp.gt.f32.partialorder %v779, 0.0
        %vm1244 = vcmp.gt.f32.partialorder %v892, 0.0
        %vm1245 = vcmp.gt.f32.partialorder %v1005, 0.0
        %vm1246 = vcmp.gt.f32.partialorder %v1118, 0.0
        %vm1247 = vcmp.gt.f32.partialorder %v782, 0.0
        %vm1248 = vcmp.gt.f32.partialorder %v895, 0.0
        %vm1249 = vcmp.gt.f32.partialorder %v1008, 0.0
        %vm1250 = vcmp.gt.f32.partialorder %v1121, 0.0
        %v1251 = vmul.f32 %v689, 0.01
        %v1252 = vmul.f32 %v802, 0.01
        %v1253 = vmul.f32 %v915, 0.01
        %v1254 = vmul.f32 %v1028, 0.01
        %v1255 = vmul.f32 %v692, 0.01
        %v1256 = vmul.f32 %v805, 0.01
        %v1257 = vmul.f32 %v918, 0.01
        %v1258 = vmul.f32 %v1031, 0.01
        %v1259 = vmul.f32 %v695, 0.01
        %v1260 = vmul.f32 %v808, 0.01
        %v1261 = vmul.f32 %v921, 0.01
        %v1262 = vmul.f32 %v1034, 0.01
        %v1263 = vmul.f32 %v698, 0.01
        %v1264 = vmul.f32 %v811, 0.01
        %v1265 = vmul.f32 %v924, 0.01
        %v1266 = vmul.f32 %v1037, 0.01
        %v1267 = vmul.f32 %v701, 0.01
        %v1268 = vmul.f32 %v814, 0.01
        %v1269 = vmul.f32 %v927, 0.01
        %v1270 = vmul.f32 %v1040, 0.01
        %v1271 = vmul.f32 %v704, 0.01
        %v1272 = vmul.f32 %v817, 0.01
        %v1273 = vmul.f32 %v930, 0.01
        %v1274 = vmul.f32 %v1043, 0.01
        %v1275 = vmul.f32 %v707, 0.01
        %v1276 = vmul.f32 %v820, 0.01
        %v1277 = vmul.f32 %v933, 0.01
        %v1278 = vmul.f32 %v1046, 0.01
        %v1279 = vmul.f32 %v710, 0.01
        %v1280 = vmul.f32 %v823, 0.01
        %v1281 = vmul.f32 %v936, 0.01
        %v1282 = vmul.f32 %v1049, 0.01
        %v1283 = vmul.f32 %v713, 0.01
        %v1284 = vmul.f32 %v826, 0.01
        %v1285 = vmul.f32 %v939, 0.01
        %v1286 = vmul.f32 %v1052, 0.01
        %v1287 = vmul.f32 %v716, 0.01
        %v1288 = vmul.f32 %v829, 0.01
        %v1289 = vmul.f32 %v942, 0.01
        %v1290 = vmul.f32 %v1055, 0.01
        %v1291 = vmul.f32 %v719, 0.01
        %v1292 = vmul.f32 %v832, 0.01
        %v1293 = vmul.f32 %v945, 0.01
        %v1294 = vmul.f32 %v1058, 0.01
        %v1295 = vmul.f32 %v722, 0.01
        %v1296 = vmul.f32 %v835, 0.01
        %v1297 = vmul.f32 %v948, 0.01
        %v1298 = vmul.f32 %v1061, 0.01
        %v1299 = vmul.f32 %v725, 0.01
        %v1300 = vmul.f32 %v838, 0.01
        %v1301 = vmul.f32 %v951, 0.01
        %v1302 = vmul.f32 %v1064, 0.01
        %v1303 = vmul.f32 %v728, 0.01
        %v1304 = vmul.f32 %v841, 0.01
        %v1305 = vmul.f32 %v954, 0.01
        %v1306 = vmul.f32 %v1067, 0.01
        %v1307 = vmul.f32 %v731, 0.01
        %v1308 = vmul.f32 %v844, 0.01
        %v1309 = vmul.f32 %v957, 0.01
        %v1310 = vmul.f32 %v1070, 0.01
        %v1311 = vmul.f32 %v734, 0.01
        %v1312 = vmul.f32 %v847, 0.01
        %v1313 = vmul.f32 %v960, 0.01
        %v1314 = vmul.f32 %v1073, 0.01
        %v1315 = vmul.f32 %v737, 0.01
        %v1316 = vmul.f32 %v850, 0.01
        %v1317 = vmul.f32 %v963, 0.01
        %v1318 = vmul.f32 %v1076, 0.01
        %v1319 = vmul.f32 %v740, 0.01
        %v1320 = vmul.f32 %v853, 0.01
        %v1321 = vmul.f32 %v966, 0.01
        %v1322 = vmul.f32 %v1079, 0.01
        %v1323 = vmul.f32 %v743, 0.01
        %v1324 = vmul.f32 %v856, 0.01
        %v1325 = vmul.f32 %v969, 0.01
        %v1326 = vmul.f32 %v1082, 0.01
        %v1327 = vmul.f32 %v746, 0.01
        %v1328 = vmul.f32 %v859, 0.01
        %v1329 = vmul.f32 %v972, 0.01
        %v1330 = vmul.f32 %v1085, 0.01
        %v1331 = vmul.f32 %v749, 0.01
        %v1332 = vmul.f32 %v862, 0.01
        %v1333 = vmul.f32 %v975, 0.01
        %v1334 = vmul.f32 %v1088, 0.01
        %v1335 = vmul.f32 %v752, 0.01
        %v1336 = vmul.f32 %v865, 0.01
        %v1337 = vmul.f32 %v978, 0.01
        %v1338 = vmul.f32 %v1091, 0.01
        %v1339 = vmul.f32 %v755, 0.01
        %v1340 = vmul.f32 %v868, 0.01
        %v1341 = vmul.f32 %v981, 0.01
        %v1342 = vmul.f32 %v1094, 0.01
        %v1343 = vmul.f32 %v758, 0.01
        %v1344 = vmul.f32 %v871, 0.01
        %v1345 = vmul.f32 %v984, 0.01
        %v1346 = vmul.f32 %v1097, 0.01
        %v1347 = vmul.f32 %v761, 0.01
        %v1348 = vmul.f32 %v874, 0.01
        %v1349 = vmul.f32 %v987, 0.01
        %v1350 = vmul.f32 %v1100, 0.01
        %v1351 = vmul.f32 %v764, 0.01
        %v1352 = vmul.f32 %v877, 0.01
        %v1353 = vmul.f32 %v990, 0.01
        %v1354 = vmul.f32 %v1103, 0.01
        %v1355 = vmul.f32 %v767, 0.01
        %v1356 = vmul.f32 %v880, 0.01
        %v1357 = vmul.f32 %v993, 0.01
        %v1358 = vmul.f32 %v1106, 0.01
        %v1359 = vmul.f32 %v770, 0.01
        %v1360 = vmul.f32 %v883, 0.01
        %v1361 = vmul.f32 %v996, 0.01
        %v1362 = vmul.f32 %v1109, 0.01
        %v1363 = vmul.f32 %v773, 0.01
        %v1364 = vmul.f32 %v886, 0.01
        %v1365 = vmul.f32 %v999, 0.01
        %v1366 = vmul.f32 %v1112, 0.01
        %v1367 = vmul.f32 %v776, 0.01
        %v1368 = vmul.f32 %v889, 0.01
        %v1369 = vmul.f32 %v1002, 0.01
        %v1370 = vmul.f32 %v1115, 0.01
        %v1371 = vmul.f32 %v779, 0.01
        %v1372 = vmul.f32 %v892, 0.01
        %v1373 = vmul.f32 %v1005, 0.01
        %v1374 = vmul.f32 %v1118, 0.01
        %v1375 = vmul.f32 %v782, 0.01
        %v1376 = vmul.f32 %v895, 0.01
        %v1377 = vmul.f32 %v1008, 0.01
        %v1378 = vmul.f32 %v1121, 0.01
        %v1379 = vsel %vm1123, %v689, %v1251
        %v1380 = vsel %vm1124, %v802, %v1252
        %v1381 = vsel %vm1125, %v915, %v1253
        %v1382 = vsel %vm1126, %v1028, %v1254
        %v1383 = vsel %vm1127, %v692, %v1255
        %v1384 = vsel %vm1128, %v805, %v1256
        %v1385 = vsel %vm1129, %v918, %v1257
        %v1386 = vsel %vm1130, %v1031, %v1258
        %v1387 = vsel %vm1131, %v695, %v1259
        %v1388 = vsel %vm1132, %v808, %v1260
        %v1389 = vsel %vm1133, %v921, %v1261
        %v1390 = vsel %vm1134, %v1034, %v1262
        %v1391 = vsel %vm1135, %v698, %v1263
        %v1392 = vsel %vm1136, %v811, %v1264
        %v1393 = vsel %vm1137, %v924, %v1265
        %v1394 = vsel %vm1138, %v1037, %v1266
        %v1395 = vsel %vm1139, %v701, %v1267
        %v1396 = vsel %vm1140, %v814, %v1268
        %v1397 = vsel %vm1141, %v927, %v1269
        %v1398 = vsel %vm1142, %v1040, %v1270
        %v1399 = vsel %vm1143, %v704, %v1271
        %v1400 = vsel %vm1144, %v817, %v1272
        %v1401 = vsel %vm1145, %v930, %v1273
        %v1402 = vsel %vm1146, %v1043, %v1274
        %v1403 = vsel %vm1147, %v707, %v1275
        %v1404 = vsel %vm1148, %v820, %v1276
        %v1405 = vsel %vm1149, %v933, %v1277
        %v1406 = vsel %vm1150, %v1046, %v1278
        %v1407 = vsel %vm1151, %v710, %v1279
        %v1408 = vsel %vm1152, %v823, %v1280
        %v1409 = vsel %vm1153, %v936, %v1281
        %v1410 = vsel %vm1154, %v1049, %v1282
        %v1411 = vsel %vm1155, %v713, %v1283
        %v1412 = vsel %vm1156, %v826, %v1284
        %v1413 = vsel %vm1157, %v939, %v1285
        %v1414 = vsel %vm1158, %v1052, %v1286
        %v1415 = vsel %vm1159, %v716, %v1287
        %v1416 = vsel %vm1160, %v829, %v1288
        %v1417 = vsel %vm1161, %v942, %v1289
        %v1418 = vsel %vm1162, %v1055, %v1290
        %v1419 = vsel %vm1163, %v719, %v1291
        %v1420 = vsel %vm1164, %v832, %v1292
        %v1421 = vsel %vm1165, %v945, %v1293
        %v1422 = vsel %vm1166, %v1058, %v1294
        %v1423 = vsel %vm1167, %v722, %v1295
        %v1424 = vsel %vm1168, %v835, %v1296
        %v1425 = vsel %vm1169, %v948, %v1297
        %v1426 = vsel %vm1170, %v1061, %v1298
        %v1427 = vsel %vm1171, %v725, %v1299
        %v1428 = vsel %vm1172, %v838, %v1300
        %v1429 = vsel %vm1173, %v951, %v1301
        %v1430 = vsel %vm1174, %v1064, %v1302
        %v1431 = vsel %vm1175, %v728, %v1303
        %v1432 = vsel %vm1176, %v841, %v1304
        %v1433 = vsel %vm1177, %v954, %v1305
        %v1434 = vsel %vm1178, %v1067, %v1306
        %v1435 = vsel %vm1179, %v731, %v1307
        %v1436 = vsel %vm1180, %v844, %v1308
        %v1437 = vsel %vm1181, %v957, %v1309
        %v1438 = vsel %vm1182, %v1070, %v1310
        %v1439 = vsel %vm1183, %v734, %v1311
        %v1440 = vsel %vm1184, %v847, %v1312
        %v1441 = vsel %vm1185, %v960, %v1313
        %v1442 = vsel %vm1186, %v1073, %v1314
        %v1443 = vsel %vm1187, %v737, %v1315
        %v1444 = vsel %vm1188, %v850, %v1316
        %v1445 = vsel %vm1189, %v963, %v1317
        %v1446 = vsel %vm1190, %v1076, %v1318
        %v1447 = vsel %vm1191, %v740, %v1319
        %v1448 = vsel %vm1192, %v853, %v1320
        %v1449 = vsel %vm1193, %v966, %v1321
        %v1450 = vsel %vm1194, %v1079, %v1322
        %v1451 = vsel %vm1195, %v743, %v1323
        %v1452 = vsel %vm1196, %v856, %v1324
        %v1453 = vsel %vm1197, %v969, %v1325
        %v1454 = vsel %vm1198, %v1082, %v1326
        %v1455 = vsel %vm1199, %v746, %v1327
        %v1456 = vsel %vm1200, %v859, %v1328
        %v1457 = vsel %vm1201, %v972, %v1329
        %v1458 = vsel %vm1202, %v1085, %v1330
        %v1459 = vsel %vm1203, %v749, %v1331
        %v1460 = vsel %vm1204, %v862, %v1332
        %v1461 = vsel %vm1205, %v975, %v1333
        %v1462 = vsel %vm1206, %v1088, %v1334
        %v1463 = vsel %vm1207, %v752, %v1335
        %v1464 = vsel %vm1208, %v865, %v1336
        %v1465 = vsel %vm1209, %v978, %v1337
        %v1466 = vsel %vm1210, %v1091, %v1338
        %v1467 = vsel %vm1211, %v755, %v1339
        %v1468 = vsel %vm1212, %v868, %v1340
        %v1469 = vsel %vm1213, %v981, %v1341
        %v1470 = vsel %vm1214, %v1094, %v1342
        %v1471 = vsel %vm1215, %v758, %v1343
        %v1472 = vsel %vm1216, %v871, %v1344
        %v1473 = vsel %vm1217, %v984, %v1345
        %v1474 = vsel %vm1218, %v1097, %v1346
        %v1475 = vsel %vm1219, %v761, %v1347
        %v1476 = vsel %vm1220, %v874, %v1348
        %v1477 = vsel %vm1221, %v987, %v1349
        %v1478 = vsel %vm1222, %v1100, %v1350
        %v1479 = vsel %vm1223, %v764, %v1351
        %v1480 = vsel %vm1224, %v877, %v1352
        %v1481 = vsel %vm1225, %v990, %v1353
        %v1482 = vsel %vm1226, %v1103, %v1354
        %v1483 = vsel %vm1227, %v767, %v1355
        %v1484 = vsel %vm1228, %v880, %v1356
        %v1485 = vsel %vm1229, %v993, %v1357
        %v1486 = vsel %vm1230, %v1106, %v1358
        %v1487 = vsel %vm1231, %v770, %v1359
        %v1488 = vsel %vm1232, %v883, %v1360
        %v1489 = vsel %vm1233, %v996, %v1361
        %v1490 = vsel %vm1234, %v1109, %v1362
        %v1491 = vsel %vm1235, %v773, %v1363
        %v1492 = vsel %vm1236, %v886, %v1364
        %v1493 = vsel %vm1237, %v999, %v1365
        %v1494 = vsel %vm1238, %v1112, %v1366
        %v1495 = vsel %vm1239, %v776, %v1367
        %v1496 = vsel %vm1240, %v889, %v1368
        %v1497 = vsel %vm1241, %v1002, %v1369
        %v1498 = vsel %vm1242, %v1115, %v1370
        %v1499 = vsel %vm1243, %v779, %v1371
        %v1500 = vsel %vm1244, %v892, %v1372
        %v1501 = vsel %vm1245, %v1005, %v1373
        %v1502 = vsel %vm1246, %v1118, %v1374
        %v1503 = vsel %vm1247, %v782, %v1375
        %v1504 = vsel %vm1248, %v895, %v1376
        %v1505 = vsel %vm1249, %v1008, %v1377
        %v1506 = vsel %vm1250, %v1121, %v1378
        %v1507 = vpack.c.bf16 %v1383, %v1379
        %v1508 = vpack.c.bf16 %v1384, %v1380
        %v1509 = vpack.c.bf16 %v1385, %v1381
        %v1510 = vpack.c.bf16 %v1386, %v1382
        %v1511 = vpack.c.bf16 %v1391, %v1387
        %v1512 = vpack.c.bf16 %v1392, %v1388
        %v1513 = vpack.c.bf16 %v1393, %v1389
        %v1514 = vpack.c.bf16 %v1394, %v1390
        %v1515 = vpack.c.bf16 %v1399, %v1395
        %v1516 = vpack.c.bf16 %v1400, %v1396
        %v1517 = vpack.c.bf16 %v1401, %v1397
        %v1518 = vpack.c.bf16 %v1402, %v1398
        %v1519 = vpack.c.bf16 %v1407, %v1403
        %v1520 = vpack.c.bf16 %v1408, %v1404
        %v1521 = vpack.c.bf16 %v1409, %v1405
        %v1522 = vpack.c.bf16 %v1410, %v1406
        %v1523 = vpack.c.bf16 %v1415, %v1411
        %v1524 = vpack.c.bf16 %v1416, %v1412
        %v1525 = vpack.c.bf16 %v1417, %v1413
        %v1526 = vpack.c.bf16 %v1418, %v1414
        %v1527 = vpack.c.bf16 %v1423, %v1419
        %v1528 = vpack.c.bf16 %v1424, %v1420
        %v1529 = vpack.c.bf16 %v1425, %v1421
        %v1530 = vpack.c.bf16 %v1426, %v1422
        %v1531 = vpack.c.bf16 %v1431, %v1427
        %v1532 = vpack.c.bf16 %v1432, %v1428
        %v1533 = vpack.c.bf16 %v1433, %v1429
        %v1534 = vpack.c.bf16 %v1434, %v1430
        %v1535 = vpack.c.bf16 %v1439, %v1435
        %v1536 = vpack.c.bf16 %v1440, %v1436
        %v1537 = vpack.c.bf16 %v1441, %v1437
        %v1538 = vpack.c.bf16 %v1442, %v1438
        %v1539 = vpack.c.bf16 %v1447, %v1443
        %v1540 = vpack.c.bf16 %v1448, %v1444
        %v1541 = vpack.c.bf16 %v1449, %v1445
        %v1542 = vpack.c.bf16 %v1450, %v1446
        %v1543 = vpack.c.bf16 %v1455, %v1451
        %v1544 = vpack.c.bf16 %v1456, %v1452
        %v1545 = vpack.c.bf16 %v1457, %v1453
        %v1546 = vpack.c.bf16 %v1458, %v1454
        %v1547 = vpack.c.bf16 %v1463, %v1459
        %v1548 = vpack.c.bf16 %v1464, %v1460
        %v1549 = vpack.c.bf16 %v1465, %v1461
        %v1550 = vpack.c.bf16 %v1466, %v1462
        %v1551 = vpack.c.bf16 %v1471, %v1467
        %v1552 = vpack.c.bf16 %v1472, %v1468
        %v1553 = vpack.c.bf16 %v1473, %v1469
        %v1554 = vpack.c.bf16 %v1474, %v1470
        %v1555 = vpack.c.bf16 %v1479, %v1475
        %v1556 = vpack.c.bf16 %v1480, %v1476
        %v1557 = vpack.c.bf16 %v1481, %v1477
        %v1558 = vpack.c.bf16 %v1482, %v1478
        %v1559 = vpack.c.bf16 %v1487, %v1483
        %v1560 = vpack.c.bf16 %v1488, %v1484
        %v1561 = vpack.c.bf16 %v1489, %v1485
        %v1562 = vpack.c.bf16 %v1490, %v1486
        %v1563 = vpack.c.bf16 %v1495, %v1491
        %v1564 = vpack.c.bf16 %v1496, %v1492
        %v1565 = vpack.c.bf16 %v1497, %v1493
        %v1566 = vpack.c.bf16 %v1498, %v1494
        %v1567 = vpack.c.bf16 %v1503, %v1499
        %v1568 = vpack.c.bf16 %v1504, %v1500
        %v1569 = vpack.c.bf16 %v1505, %v1501
        %v1570 = vpack.c.bf16 %v1506, %v1502
        %v1571 = vld [vmem:[%s3] sm:$0xff]
        %v1572 = vld [vmem:[%s3 + $0x8] sm:$0xff]
        %v1573 = vld [vmem:[%s3 + $0x10] sm:$0xff]
        %v1574 = vld [vmem:[%s3 + $0x18] sm:$0xff]
        %v1575 = vld [vmem:[%s3 + $0x20] sm:$0xff]
        %v1576 = vld [vmem:[%s3 + $0x28] sm:$0xff]
        %v1577 = vld [vmem:[%s3 + $0x30] sm:$0xff]
        %v1578 = vld [vmem:[%s3 + $0x38] sm:$0xff]
        %v1579 = vld [vmem:[%s3 + $0x40] sm:$0xff]
        %v1580 = vld [vmem:[%s3 + $0x48] sm:$0xff]
        %v1581 = vld [vmem:[%s3 + $0x50] sm:$0xff]
        %v1582 = vld [vmem:[%s3 + $0x58] sm:$0xff]
        %v1583 = vld [vmem:[%s3 + $0x60] sm:$0xff]
        %v1584 = vld [vmem:[%s3 + $0x68] sm:$0xff]
        %v1585 = vld [vmem:[%s3 + $0x70] sm:$0xff]
        %v1586 = vld [vmem:[%s3 + $0x78] sm:$0xff]
        %v1587 = vld [vmem:[%s3 + $0x80] sm:$0xff]
        %v1588 = vld [vmem:[%s3 + $0x88] sm:$0xff]
        %v1589 = vld [vmem:[%s3 + $0x90] sm:$0xff]
        %v1590 = vld [vmem:[%s3 + $0x98] sm:$0xff]
        %v1591 = vld [vmem:[%s3 + $0xa0] sm:$0xff]
        %v1592 = vld [vmem:[%s3 + $0xa8] sm:$0xff]
        %v1593 = vld [vmem:[%s3 + $0xb0] sm:$0xff]
        %v1594 = vld [vmem:[%s3 + $0xb8] sm:$0xff]
        %v1595 = vld [vmem:[%s3 + $0xc0] sm:$0xff]
        %v1596 = vld [vmem:[%s3 + $0xc8] sm:$0xff]
        %v1597 = vld [vmem:[%s3 + $0xd0] sm:$0xff]
        %v1598 = vld [vmem:[%s3 + $0xd8] sm:$0xff]
        %v1599 = vld [vmem:[%s3 + $0xe0] sm:$0xff]
        %v1600 = vld [vmem:[%s3 + $0xe8] sm:$0xff]
        %v1601 = vld [vmem:[%s3 + $0xf0] sm:$0xff]
        %v1602 = vld [vmem:[%s3 + $0xf8] sm:$0xff]
        %v1603 = vld [vmem:[%s3 + $0x100] sm:$0xff]
        %v1604 = vld [vmem:[%s3 + $0x108] sm:$0xff]
        %v1605 = vld [vmem:[%s3 + $0x110] sm:$0xff]
        %v1606 = vld [vmem:[%s3 + $0x118] sm:$0xff]
        %v1607 = vld [vmem:[%s3 + $0x120] sm:$0xff]
        %v1608 = vld [vmem:[%s3 + $0x128] sm:$0xff]
        %v1609 = vld [vmem:[%s3 + $0x130] sm:$0xff]
        %v1610 = vld [vmem:[%s3 + $0x138] sm:$0xff]
        %v1611 = vld [vmem:[%s3 + $0x140] sm:$0xff]
        %v1612 = vld [vmem:[%s3 + $0x148] sm:$0xff]
        %v1613 = vld [vmem:[%s3 + $0x150] sm:$0xff]
        %v1614 = vld [vmem:[%s3 + $0x158] sm:$0xff]
        %v1615 = vld [vmem:[%s3 + $0x160] sm:$0xff]
        %v1616 = vld [vmem:[%s3 + $0x168] sm:$0xff]
        %v1617 = vld [vmem:[%s3 + $0x170] sm:$0xff]
        %v1618 = vld [vmem:[%s3 + $0x178] sm:$0xff]
        %v1619 = vld [vmem:[%s3 + $0x180] sm:$0xff]
        %v1620 = vld [vmem:[%s3 + $0x188] sm:$0xff]
        %v1621 = vld [vmem:[%s3 + $0x190] sm:$0xff]
        %v1622 = vld [vmem:[%s3 + $0x198] sm:$0xff]
        %v1623 = vld [vmem:[%s3 + $0x1a0] sm:$0xff]
        %v1624 = vld [vmem:[%s3 + $0x1a8] sm:$0xff]
        %v1625 = vld [vmem:[%s3 + $0x1b0] sm:$0xff]
        %v1626 = vld [vmem:[%s3 + $0x1b8] sm:$0xff]
        %v1627 = vld [vmem:[%s3 + $0x1c0] sm:$0xff]
        %v1628 = vld [vmem:[%s3 + $0x1c8] sm:$0xff]
        %v1629 = vld [vmem:[%s3 + $0x1d0] sm:$0xff]
        %v1630 = vld [vmem:[%s3 + $0x1d8] sm:$0xff]
        %v1631 = vld [vmem:[%s3 + $0x1e0] sm:$0xff]
        %v1632 = vld [vmem:[%s3 + $0x1e8] sm:$0xff]
        %v1633 = vld [vmem:[%s3 + $0x1f0] sm:$0xff]
        %v1634 = vld [vmem:[%s3 + $0x1f8] sm:$0xff]
        %v1635 = vld [vmem:[%s4] sm:$0x3]
        %v1637 = vperm.slane %v1635, 0
        %v1638 = vperm.slane %v1635, 1
        %v1705 = vunpack.c.l.b16 %v1571
        %v1706 = vunpack.c.h.b16 %v1571
        %v1707 = vunpack.c.l.b16 %v1572
        %v1708 = vunpack.c.h.b16 %v1572
        %v1709 = vunpack.c.l.b16 %v1573
        %v1710 = vunpack.c.h.b16 %v1573
        %v1711 = vunpack.c.l.b16 %v1574
        %v1712 = vunpack.c.h.b16 %v1574
        %v1713 = vunpack.c.l.b16 %v1575
        %v1714 = vunpack.c.h.b16 %v1575
        %v1715 = vunpack.c.l.b16 %v1576
        %v1716 = vunpack.c.h.b16 %v1576
        %v1717 = vunpack.c.l.b16 %v1577
        %v1718 = vunpack.c.h.b16 %v1577
        %v1719 = vunpack.c.l.b16 %v1578
        %v1720 = vunpack.c.h.b16 %v1578
        %v1721 = vunpack.c.l.b16 %v1579
        %v1722 = vunpack.c.h.b16 %v1579
        %v1723 = vunpack.c.l.b16 %v1580
        %v1724 = vunpack.c.h.b16 %v1580
        %v1725 = vunpack.c.l.b16 %v1581
        %v1726 = vunpack.c.h.b16 %v1581
        %v1727 = vunpack.c.l.b16 %v1582
        %v1728 = vunpack.c.h.b16 %v1582
        %v1729 = vunpack.c.l.b16 %v1583
        %v1730 = vunpack.c.h.b16 %v1583
        %v1731 = vunpack.c.l.b16 %v1584
        %v1732 = vunpack.c.h.b16 %v1584
        %v1733 = vunpack.c.l.b16 %v1585
        %v1734 = vunpack.c.h.b16 %v1585
        %v1735 = vunpack.c.l.b16 %v1586
        %v1736 = vunpack.c.h.b16 %v1586
        %v1737 = vunpack.c.l.b16 %v1587
        %v1738 = vunpack.c.h.b16 %v1587
        %v1739 = vunpack.c.l.b16 %v1588
        %v1740 = vunpack.c.h.b16 %v1588
        %v1741 = vunpack.c.l.b16 %v1589
        %v1742 = vunpack.c.h.b16 %v1589
        %v1743 = vunpack.c.l.b16 %v1590
        %v1744 = vunpack.c.h.b16 %v1590
        %v1745 = vunpack.c.l.b16 %v1591
        %v1746 = vunpack.c.h.b16 %v1591
        %v1747 = vunpack.c.l.b16 %v1592
        %v1748 = vunpack.c.h.b16 %v1592
        %v1749 = vunpack.c.l.b16 %v1593
        %v1750 = vunpack.c.h.b16 %v1593
        %v1751 = vunpack.c.l.b16 %v1594
        %v1752 = vunpack.c.h.b16 %v1594
        %v1753 = vunpack.c.l.b16 %v1595
        %v1754 = vunpack.c.h.b16 %v1595
        %v1755 = vunpack.c.l.b16 %v1596
        %v1756 = vunpack.c.h.b16 %v1596
        %v1757 = vunpack.c.l.b16 %v1597
        %v1758 = vunpack.c.h.b16 %v1597
        %v1759 = vunpack.c.l.b16 %v1598
        %v1760 = vunpack.c.h.b16 %v1598
        %v1761 = vunpack.c.l.b16 %v1599
        %v1762 = vunpack.c.h.b16 %v1599
        %v1763 = vunpack.c.l.b16 %v1600
        %v1764 = vunpack.c.h.b16 %v1600
        %v1765 = vunpack.c.l.b16 %v1601
        %v1766 = vunpack.c.h.b16 %v1601
        %v1767 = vunpack.c.l.b16 %v1602
        %v1768 = vunpack.c.h.b16 %v1602
        %v1769 = vunpack.c.l.b16 %v1603
        %v1770 = vunpack.c.h.b16 %v1603
        %v1771 = vunpack.c.l.b16 %v1604
        %v1772 = vunpack.c.h.b16 %v1604
        %v1773 = vunpack.c.l.b16 %v1605
        %v1774 = vunpack.c.h.b16 %v1605
        %v1775 = vunpack.c.l.b16 %v1606
        %v1776 = vunpack.c.h.b16 %v1606
        %v1777 = vunpack.c.l.b16 %v1607
        %v1778 = vunpack.c.h.b16 %v1607
        %v1779 = vunpack.c.l.b16 %v1608
        %v1780 = vunpack.c.h.b16 %v1608
        %v1781 = vunpack.c.l.b16 %v1609
        %v1782 = vunpack.c.h.b16 %v1609
        %v1783 = vunpack.c.l.b16 %v1610
        %v1784 = vunpack.c.h.b16 %v1610
        %v1785 = vunpack.c.l.b16 %v1611
        %v1786 = vunpack.c.h.b16 %v1611
        %v1787 = vunpack.c.l.b16 %v1612
        %v1788 = vunpack.c.h.b16 %v1612
        %v1789 = vunpack.c.l.b16 %v1613
        %v1790 = vunpack.c.h.b16 %v1613
        %v1791 = vunpack.c.l.b16 %v1614
        %v1792 = vunpack.c.h.b16 %v1614
        %v1793 = vunpack.c.l.b16 %v1615
        %v1794 = vunpack.c.h.b16 %v1615
        %v1795 = vunpack.c.l.b16 %v1616
        %v1796 = vunpack.c.h.b16 %v1616
        %v1797 = vunpack.c.l.b16 %v1617
        %v1798 = vunpack.c.h.b16 %v1617
        %v1799 = vunpack.c.l.b16 %v1618
        %v1800 = vunpack.c.h.b16 %v1618
        %v1801 = vunpack.c.l.b16 %v1619
        %v1802 = vunpack.c.h.b16 %v1619
        %v1803 = vunpack.c.l.b16 %v1620
        %v1804 = vunpack.c.h.b16 %v1620
        %v1805 = vunpack.c.l.b16 %v1621
        %v1806 = vunpack.c.h.b16 %v1621
        %v1807 = vunpack.c.l.b16 %v1622
        %v1808 = vunpack.c.h.b16 %v1622
        %v1809 = vunpack.c.l.b16 %v1623
        %v1810 = vunpack.c.h.b16 %v1623
        %v1811 = vunpack.c.l.b16 %v1624
        %v1812 = vunpack.c.h.b16 %v1624
        %v1813 = vunpack.c.l.b16 %v1625
        %v1814 = vunpack.c.h.b16 %v1625
        %v1815 = vunpack.c.l.b16 %v1626
        %v1816 = vunpack.c.h.b16 %v1626
        %v1817 = vunpack.c.l.b16 %v1627
        %v1818 = vunpack.c.h.b16 %v1627
        %v1819 = vunpack.c.l.b16 %v1628
        %v1820 = vunpack.c.h.b16 %v1628
        %v1821 = vunpack.c.l.b16 %v1629
        %v1822 = vunpack.c.h.b16 %v1629
        %v1823 = vunpack.c.l.b16 %v1630
        %v1824 = vunpack.c.h.b16 %v1630
        %v1825 = vunpack.c.l.b16 %v1631
        %v1826 = vunpack.c.h.b16 %v1631
        %v1827 = vunpack.c.l.b16 %v1632
        %v1828 = vunpack.c.h.b16 %v1632
        %v1829 = vunpack.c.l.b16 %v1633
        %v1830 = vunpack.c.h.b16 %v1633
        %v1831 = vunpack.c.l.b16 %v1634
        %v1832 = vunpack.c.h.b16 %v1634
        %v1833 = vpack.c.b16 %v1707, %v1705
        %v1834 = vpack.c.b16 %v1708, %v1706
        %v1835 = vpack.c.b16 %v1711, %v1709
        %v1836 = vpack.c.b16 %v1712, %v1710
        %v1837 = vpack.c.b16 %v1715, %v1713
        %v1838 = vpack.c.b16 %v1716, %v1714
        %v1839 = vpack.c.b16 %v1719, %v1717
        %v1840 = vpack.c.b16 %v1720, %v1718
        %v1841 = vpack.c.b16 %v1723, %v1721
        %v1842 = vpack.c.b16 %v1724, %v1722
        %v1843 = vpack.c.b16 %v1727, %v1725
        %v1844 = vpack.c.b16 %v1728, %v1726
        %v1845 = vpack.c.b16 %v1731, %v1729
        %v1846 = vpack.c.b16 %v1732, %v1730
        %v1847 = vpack.c.b16 %v1735, %v1733
        %v1848 = vpack.c.b16 %v1736, %v1734
        %v1849 = vpack.c.b16 %v1739, %v1737
        %v1850 = vpack.c.b16 %v1740, %v1738
        %v1851 = vpack.c.b16 %v1743, %v1741
        %v1852 = vpack.c.b16 %v1744, %v1742
        %v1853 = vpack.c.b16 %v1747, %v1745
        %v1854 = vpack.c.b16 %v1748, %v1746
        %v1855 = vpack.c.b16 %v1751, %v1749
        %v1856 = vpack.c.b16 %v1752, %v1750
        %v1857 = vpack.c.b16 %v1755, %v1753
        %v1858 = vpack.c.b16 %v1756, %v1754
        %v1859 = vpack.c.b16 %v1759, %v1757
        %v1860 = vpack.c.b16 %v1760, %v1758
        %v1861 = vpack.c.b16 %v1763, %v1761
        %v1862 = vpack.c.b16 %v1764, %v1762
        %v1863 = vpack.c.b16 %v1767, %v1765
        %v1864 = vpack.c.b16 %v1768, %v1766
        %v1865 = vpack.c.b16 %v1771, %v1769
        %v1866 = vpack.c.b16 %v1772, %v1770
        %v1867 = vpack.c.b16 %v1775, %v1773
        %v1868 = vpack.c.b16 %v1776, %v1774
        %v1869 = vpack.c.b16 %v1779, %v1777
        %v1870 = vpack.c.b16 %v1780, %v1778
        %v1871 = vpack.c.b16 %v1783, %v1781
        %v1872 = vpack.c.b16 %v1784, %v1782
        %v1873 = vpack.c.b16 %v1787, %v1785
        %v1874 = vpack.c.b16 %v1788, %v1786
        %v1875 = vpack.c.b16 %v1791, %v1789
        %v1876 = vpack.c.b16 %v1792, %v1790
        %v1877 = vpack.c.b16 %v1795, %v1793
        %v1878 = vpack.c.b16 %v1796, %v1794
        %v1879 = vpack.c.b16 %v1799, %v1797
        %v1880 = vpack.c.b16 %v1800, %v1798
        %v1881 = vpack.c.b16 %v1803, %v1801
        %v1882 = vpack.c.b16 %v1804, %v1802
        %v1883 = vpack.c.b16 %v1807, %v1805
        %v1884 = vpack.c.b16 %v1808, %v1806
        %v1885 = vpack.c.b16 %v1811, %v1809
        %v1886 = vpack.c.b16 %v1812, %v1810
        %v1887 = vpack.c.b16 %v1815, %v1813
        %v1888 = vpack.c.b16 %v1816, %v1814
        %v1889 = vpack.c.b16 %v1819, %v1817
        %v1890 = vpack.c.b16 %v1820, %v1818
        %v1891 = vpack.c.b16 %v1823, %v1821
        %v1892 = vpack.c.b16 %v1824, %v1822
        %v1893 = vpack.c.b16 %v1827, %v1825
        %v1894 = vpack.c.b16 %v1828, %v1826
        %v1895 = vpack.c.b16 %v1831, %v1829
        %v1896 = vpack.c.b16 %v1832, %v1830
        %1961 = vmatpush.bf16.msra.mxu0 %v1847
        %1962 = vmatpush.bf16.msra.mxu0 %v1845
        %1963 = vmatpush.bf16.msra.mxu0 %v1843
        %1964 = vmatpush.bf16.msra.mxu0 %v1841
        %1965 = vmatpush.bf16.msra.mxu0 %v1839
        %1966 = vmatpush.bf16.msra.mxu0 %v1837
        %1967 = vmatpush.bf16.msra.mxu0 %v1835
        %1968 = vmatpush.bf16.msra.mxu0 %v1833
        %1969 = vmatmul.bf16.gmra.mxu0 %v1507
        %v1970 = vpop.f32.mrf.mxu0
        %v1971 = vadd.f32 %v1637, %v1970
        %v1972 = vpop.f32.mrf.mxu0
        %v1973 = vadd.f32 %v1637, %v1972
        %1974 = vmatmul.bf16.gmra.mxu0 %v1511
        %v1975 = vpop.f32.mrf.mxu0
        %v1976 = vadd.f32 %v1637, %v1975
        %v1977 = vpop.f32.mrf.mxu0
        %v1978 = vadd.f32 %v1637, %v1977
        %1979 = vmatmul.bf16.gmra.mxu0 %v1515
        %v1980 = vpop.f32.mrf.mxu0
        %v1981 = vadd.f32 %v1637, %v1980
        %v1982 = vpop.f32.mrf.mxu0
        %v1983 = vadd.f32 %v1637, %v1982
        %1984 = vmatmul.bf16.gmra.mxu0 %v1519
        %v1985 = vpop.f32.mrf.mxu0
        %v1986 = vadd.f32 %v1637, %v1985
        %v1987 = vpop.f32.mrf.mxu0
        %v1988 = vadd.f32 %v1637, %v1987
        %1989 = vmatmul.bf16.gmra.mxu0 %v1523
        %v1990 = vpop.f32.mrf.mxu0
        %v1991 = vadd.f32 %v1637, %v1990
        %v1992 = vpop.f32.mrf.mxu0
        %v1993 = vadd.f32 %v1637, %v1992
        %1994 = vmatmul.bf16.gmra.mxu0 %v1527
        %v1995 = vpop.f32.mrf.mxu0
        %v1996 = vadd.f32 %v1637, %v1995
        %v1997 = vpop.f32.mrf.mxu0
        %v1998 = vadd.f32 %v1637, %v1997
        %1999 = vmatmul.bf16.gmra.mxu0 %v1531
        %v2000 = vpop.f32.mrf.mxu0
        %v2001 = vadd.f32 %v1637, %v2000
        %v2002 = vpop.f32.mrf.mxu0
        %v2003 = vadd.f32 %v1637, %v2002
        %2004 = vmatmul.bf16.gmra.mxu0 %v1535
        %v2005 = vpop.f32.mrf.mxu0
        %v2006 = vadd.f32 %v1637, %v2005
        %v2007 = vpop.f32.mrf.mxu0
        %v2008 = vadd.f32 %v1637, %v2007
        %2009 = vmatmul.bf16.gmra.mxu0 %v1539
        %v2010 = vpop.f32.mrf.mxu0
        %v2011 = vadd.f32 %v1637, %v2010
        %v2012 = vpop.f32.mrf.mxu0
        %v2013 = vadd.f32 %v1637, %v2012
        %2014 = vmatmul.bf16.gmra.mxu0 %v1543
        %v2015 = vpop.f32.mrf.mxu0
        %v2016 = vadd.f32 %v1637, %v2015
        %v2017 = vpop.f32.mrf.mxu0
        %v2018 = vadd.f32 %v1637, %v2017
        %2019 = vmatmul.bf16.gmra.mxu0 %v1547
        %v2020 = vpop.f32.mrf.mxu0
        %v2021 = vadd.f32 %v1637, %v2020
        %v2022 = vpop.f32.mrf.mxu0
        %v2023 = vadd.f32 %v1637, %v2022
        %2024 = vmatmul.bf16.gmra.mxu0 %v1551
        %v2025 = vpop.f32.mrf.mxu0
        %v2026 = vadd.f32 %v1637, %v2025
        %v2027 = vpop.f32.mrf.mxu0
        %v2028 = vadd.f32 %v1637, %v2027
        %2029 = vmatmul.bf16.gmra.mxu0 %v1555
        %v2030 = vpop.f32.mrf.mxu0
        %v2031 = vadd.f32 %v1637, %v2030
        %v2032 = vpop.f32.mrf.mxu0
        %v2033 = vadd.f32 %v1637, %v2032
        %2034 = vmatmul.bf16.gmra.mxu0 %v1559
        %v2035 = vpop.f32.mrf.mxu0
        %v2036 = vadd.f32 %v1637, %v2035
        %v2037 = vpop.f32.mrf.mxu0
        %v2038 = vadd.f32 %v1637, %v2037
        %2039 = vmatmul.bf16.gmra.mxu0 %v1563
        %v2040 = vpop.f32.mrf.mxu0
        %v2041 = vadd.f32 %v1637, %v2040
        %v2042 = vpop.f32.mrf.mxu0
        %v2043 = vadd.f32 %v1637, %v2042
        %2044 = vmatmul.bf16.gmra.mxu0 %v1567
        %v2045 = vpop.f32.mrf.mxu0
        %v2046 = vadd.f32 %v1637, %v2045
        %v2047 = vpop.f32.mrf.mxu0
        %v2048 = vadd.f32 %v1637, %v2047
        %2049 = vdwg.mxu0
        %2050 = vmatpush.bf16.msra.mxu0 %v1863
        %2051 = vmatpush.bf16.msra.mxu0 %v1861
        %2052 = vmatpush.bf16.msra.mxu0 %v1859
        %2053 = vmatpush.bf16.msra.mxu0 %v1857
        %2054 = vmatpush.bf16.msra.mxu0 %v1855
        %2055 = vmatpush.bf16.msra.mxu0 %v1853
        %2056 = vmatpush.bf16.msra.mxu0 %v1851
        %2057 = vmatpush.bf16.msra.mxu0 %v1849
        %2058 = vmatmul.bf16.gmra.mxu0 %v1508
        %v2059 = vpop.f32.mrf.mxu0
        %v2060 = vadd.f32 %v1971, %v2059
        %v2061 = vpop.f32.mrf.mxu0
        %v2062 = vadd.f32 %v1973, %v2061
        %2063 = vmatmul.bf16.gmra.mxu0 %v1512
        %v2064 = vpop.f32.mrf.mxu0
        %v2065 = vadd.f32 %v1976, %v2064
        %v2066 = vpop.f32.mrf.mxu0
        %v2067 = vadd.f32 %v1978, %v2066
        %2068 = vmatmul.bf16.gmra.mxu0 %v1516
        %v2069 = vpop.f32.mrf.mxu0
        %v2070 = vadd.f32 %v1981, %v2069
        %v2071 = vpop.f32.mrf.mxu0
        %v2072 = vadd.f32 %v1983, %v2071
        %2073 = vmatmul.bf16.gmra.mxu0 %v1520
        %v2074 = vpop.f32.mrf.mxu0
        %v2075 = vadd.f32 %v1986, %v2074
        %v2076 = vpop.f32.mrf.mxu0
        %v2077 = vadd.f32 %v1988, %v2076
        %2078 = vmatmul.bf16.gmra.mxu0 %v1524
        %v2079 = vpop.f32.mrf.mxu0
        %v2080 = vadd.f32 %v1991, %v2079
        %v2081 = vpop.f32.mrf.mxu0
        %v2082 = vadd.f32 %v1993, %v2081
        %2083 = vmatmul.bf16.gmra.mxu0 %v1528
        %v2084 = vpop.f32.mrf.mxu0
        %v2085 = vadd.f32 %v1996, %v2084
        %v2086 = vpop.f32.mrf.mxu0
        %v2087 = vadd.f32 %v1998, %v2086
        %2088 = vmatmul.bf16.gmra.mxu0 %v1532
        %v2089 = vpop.f32.mrf.mxu0
        %v2090 = vadd.f32 %v2001, %v2089
        %v2091 = vpop.f32.mrf.mxu0
        %v2092 = vadd.f32 %v2003, %v2091
        %2093 = vmatmul.bf16.gmra.mxu0 %v1536
        %v2094 = vpop.f32.mrf.mxu0
        %v2095 = vadd.f32 %v2006, %v2094
        %v2096 = vpop.f32.mrf.mxu0
        %v2097 = vadd.f32 %v2008, %v2096
        %2098 = vmatmul.bf16.gmra.mxu0 %v1540
        %v2099 = vpop.f32.mrf.mxu0
        %v2100 = vadd.f32 %v2011, %v2099
        %v2101 = vpop.f32.mrf.mxu0
        %v2102 = vadd.f32 %v2013, %v2101
        %2103 = vmatmul.bf16.gmra.mxu0 %v1544
        %v2104 = vpop.f32.mrf.mxu0
        %v2105 = vadd.f32 %v2016, %v2104
        %v2106 = vpop.f32.mrf.mxu0
        %v2107 = vadd.f32 %v2018, %v2106
        %2108 = vmatmul.bf16.gmra.mxu0 %v1548
        %v2109 = vpop.f32.mrf.mxu0
        %v2110 = vadd.f32 %v2021, %v2109
        %v2111 = vpop.f32.mrf.mxu0
        %v2112 = vadd.f32 %v2023, %v2111
        %2113 = vmatmul.bf16.gmra.mxu0 %v1552
        %v2114 = vpop.f32.mrf.mxu0
        %v2115 = vadd.f32 %v2026, %v2114
        %v2116 = vpop.f32.mrf.mxu0
        %v2117 = vadd.f32 %v2028, %v2116
        %2118 = vmatmul.bf16.gmra.mxu0 %v1556
        %v2119 = vpop.f32.mrf.mxu0
        %v2120 = vadd.f32 %v2031, %v2119
        %v2121 = vpop.f32.mrf.mxu0
        %v2122 = vadd.f32 %v2033, %v2121
        %2123 = vmatmul.bf16.gmra.mxu0 %v1560
        %v2124 = vpop.f32.mrf.mxu0
        %v2125 = vadd.f32 %v2036, %v2124
        %v2126 = vpop.f32.mrf.mxu0
        %v2127 = vadd.f32 %v2038, %v2126
        %2128 = vmatmul.bf16.gmra.mxu0 %v1564
        %v2129 = vpop.f32.mrf.mxu0
        %v2130 = vadd.f32 %v2041, %v2129
        %v2131 = vpop.f32.mrf.mxu0
        %v2132 = vadd.f32 %v2043, %v2131
        %2133 = vmatmul.bf16.gmra.mxu0 %v1568
        %v2134 = vpop.f32.mrf.mxu0
        %v2135 = vadd.f32 %v2046, %v2134
        %v2136 = vpop.f32.mrf.mxu0
        %v2137 = vadd.f32 %v2048, %v2136
        %2138 = vdwg.mxu0
        %2139 = vmatpush.bf16.msra.mxu0 %v1879
        %2140 = vmatpush.bf16.msra.mxu0 %v1877
        %2141 = vmatpush.bf16.msra.mxu0 %v1875
        %2142 = vmatpush.bf16.msra.mxu0 %v1873
        %2143 = vmatpush.bf16.msra.mxu0 %v1871
        %2144 = vmatpush.bf16.msra.mxu0 %v1869
        %2145 = vmatpush.bf16.msra.mxu0 %v1867
        %2146 = vmatpush.bf16.msra.mxu0 %v1865
        %2147 = vmatmul.bf16.gmra.mxu0 %v1509
        %v2148 = vpop.f32.mrf.mxu0
        %v2149 = vadd.f32 %v2060, %v2148
        %v2150 = vpop.f32.mrf.mxu0
        %v2151 = vadd.f32 %v2062, %v2150
        %2152 = vmatmul.bf16.gmra.mxu0 %v1513
        %v2153 = vpop.f32.mrf.mxu0
        %v2154 = vadd.f32 %v2065, %v2153
        %v2155 = vpop.f32.mrf.mxu0
        %v2156 = vadd.f32 %v2067, %v2155
        %2157 = vmatmul.bf16.gmra.mxu0 %v1517
        %v2158 = vpop.f32.mrf.mxu0
        %v2159 = vadd.f32 %v2070, %v2158
        %v2160 = vpop.f32.mrf.mxu0
        %v2161 = vadd.f32 %v2072, %v2160
        %2162 = vmatmul.bf16.gmra.mxu0 %v1521
        %v2163 = vpop.f32.mrf.mxu0
        %v2164 = vadd.f32 %v2075, %v2163
        %v2165 = vpop.f32.mrf.mxu0
        %v2166 = vadd.f32 %v2077, %v2165
        %2167 = vmatmul.bf16.gmra.mxu0 %v1525
        %v2168 = vpop.f32.mrf.mxu0
        %v2169 = vadd.f32 %v2080, %v2168
        %v2170 = vpop.f32.mrf.mxu0
        %v2171 = vadd.f32 %v2082, %v2170
        %2172 = vmatmul.bf16.gmra.mxu0 %v1529
        %v2173 = vpop.f32.mrf.mxu0
        %v2174 = vadd.f32 %v2085, %v2173
        %v2175 = vpop.f32.mrf.mxu0
        %v2176 = vadd.f32 %v2087, %v2175
        %2177 = vmatmul.bf16.gmra.mxu0 %v1533
        %v2178 = vpop.f32.mrf.mxu0
        %v2179 = vadd.f32 %v2090, %v2178
        %v2180 = vpop.f32.mrf.mxu0
        %v2181 = vadd.f32 %v2092, %v2180
        %2182 = vmatmul.bf16.gmra.mxu0 %v1537
        %v2183 = vpop.f32.mrf.mxu0
        %v2184 = vadd.f32 %v2095, %v2183
        %v2185 = vpop.f32.mrf.mxu0
        %v2186 = vadd.f32 %v2097, %v2185
        %2187 = vmatmul.bf16.gmra.mxu0 %v1541
        %v2188 = vpop.f32.mrf.mxu0
        %v2189 = vadd.f32 %v2100, %v2188
        %v2190 = vpop.f32.mrf.mxu0
        %v2191 = vadd.f32 %v2102, %v2190
        %2192 = vmatmul.bf16.gmra.mxu0 %v1545
        %v2193 = vpop.f32.mrf.mxu0
        %v2194 = vadd.f32 %v2105, %v2193
        %v2195 = vpop.f32.mrf.mxu0
        %v2196 = vadd.f32 %v2107, %v2195
        %2197 = vmatmul.bf16.gmra.mxu0 %v1549
        %v2198 = vpop.f32.mrf.mxu0
        %v2199 = vadd.f32 %v2110, %v2198
        %v2200 = vpop.f32.mrf.mxu0
        %v2201 = vadd.f32 %v2112, %v2200
        %2202 = vmatmul.bf16.gmra.mxu0 %v1553
        %v2203 = vpop.f32.mrf.mxu0
        %v2204 = vadd.f32 %v2115, %v2203
        %v2205 = vpop.f32.mrf.mxu0
        %v2206 = vadd.f32 %v2117, %v2205
        %2207 = vmatmul.bf16.gmra.mxu0 %v1557
        %v2208 = vpop.f32.mrf.mxu0
        %v2209 = vadd.f32 %v2120, %v2208
        %v2210 = vpop.f32.mrf.mxu0
        %v2211 = vadd.f32 %v2122, %v2210
        %2212 = vmatmul.bf16.gmra.mxu0 %v1561
        %v2213 = vpop.f32.mrf.mxu0
        %v2214 = vadd.f32 %v2125, %v2213
        %v2215 = vpop.f32.mrf.mxu0
        %v2216 = vadd.f32 %v2127, %v2215
        %2217 = vmatmul.bf16.gmra.mxu0 %v1565
        %v2218 = vpop.f32.mrf.mxu0
        %v2219 = vadd.f32 %v2130, %v2218
        %v2220 = vpop.f32.mrf.mxu0
        %v2221 = vadd.f32 %v2132, %v2220
        %2222 = vmatmul.bf16.gmra.mxu0 %v1569
        %v2223 = vpop.f32.mrf.mxu0
        %v2224 = vadd.f32 %v2135, %v2223
        %v2225 = vpop.f32.mrf.mxu0
        %v2226 = vadd.f32 %v2137, %v2225
        %2227 = vdwg.mxu0
        %2228 = vmatpush.bf16.msra.mxu0 %v1895
        %2229 = vmatpush.bf16.msra.mxu0 %v1893
        %2230 = vmatpush.bf16.msra.mxu0 %v1891
        %2231 = vmatpush.bf16.msra.mxu0 %v1889
        %2232 = vmatpush.bf16.msra.mxu0 %v1887
        %2233 = vmatpush.bf16.msra.mxu0 %v1885
        %2234 = vmatpush.bf16.msra.mxu0 %v1883
        %2235 = vmatpush.bf16.msra.mxu0 %v1881
        %2236 = vmatmul.bf16.gmra.mxu0 %v1510
        %v2237 = vpop.f32.mrf.mxu0
        %v2238 = vadd.f32 %v2149, %v2237
        %v2239 = vpop.f32.mrf.mxu0
        %v2240 = vadd.f32 %v2151, %v2239
        %2241 = vmatmul.bf16.gmra.mxu0 %v1514
        %v2242 = vpop.f32.mrf.mxu0
        %v2243 = vadd.f32 %v2154, %v2242
        %v2244 = vpop.f32.mrf.mxu0
        %v2245 = vadd.f32 %v2156, %v2244
        %2246 = vmatmul.bf16.gmra.mxu0 %v1518
        %v2247 = vpop.f32.mrf.mxu0
        %v2248 = vadd.f32 %v2159, %v2247
        %v2249 = vpop.f32.mrf.mxu0
        %v2250 = vadd.f32 %v2161, %v2249
        %2251 = vmatmul.bf16.gmra.mxu0 %v1522
        %v2252 = vpop.f32.mrf.mxu0
        %v2253 = vadd.f32 %v2164, %v2252
        %v2254 = vpop.f32.mrf.mxu0
        %v2255 = vadd.f32 %v2166, %v2254
        %2256 = vmatmul.bf16.gmra.mxu0 %v1526
        %v2257 = vpop.f32.mrf.mxu0
        %v2258 = vadd.f32 %v2169, %v2257
        %v2259 = vpop.f32.mrf.mxu0
        %v2260 = vadd.f32 %v2171, %v2259
        %2261 = vmatmul.bf16.gmra.mxu0 %v1530
        %v2262 = vpop.f32.mrf.mxu0
        %v2263 = vadd.f32 %v2174, %v2262
        %v2264 = vpop.f32.mrf.mxu0
        %v2265 = vadd.f32 %v2176, %v2264
        %2266 = vmatmul.bf16.gmra.mxu0 %v1534
        %v2267 = vpop.f32.mrf.mxu0
        %v2268 = vadd.f32 %v2179, %v2267
        %v2269 = vpop.f32.mrf.mxu0
        %v2270 = vadd.f32 %v2181, %v2269
        %2271 = vmatmul.bf16.gmra.mxu0 %v1538
        %v2272 = vpop.f32.mrf.mxu0
        %v2273 = vadd.f32 %v2184, %v2272
        %v2274 = vpop.f32.mrf.mxu0
        %v2275 = vadd.f32 %v2186, %v2274
        %2276 = vmatmul.bf16.gmra.mxu0 %v1542
        %v2277 = vpop.f32.mrf.mxu0
        %v2278 = vadd.f32 %v2189, %v2277
        %v2279 = vpop.f32.mrf.mxu0
        %v2280 = vadd.f32 %v2191, %v2279
        %2281 = vmatmul.bf16.gmra.mxu0 %v1546
        %v2282 = vpop.f32.mrf.mxu0
        %v2283 = vadd.f32 %v2194, %v2282
        %v2284 = vpop.f32.mrf.mxu0
        %v2285 = vadd.f32 %v2196, %v2284
        %2286 = vmatmul.bf16.gmra.mxu0 %v1550
        %v2287 = vpop.f32.mrf.mxu0
        %v2288 = vadd.f32 %v2199, %v2287
        %v2289 = vpop.f32.mrf.mxu0
        %v2290 = vadd.f32 %v2201, %v2289
        %2291 = vmatmul.bf16.gmra.mxu0 %v1554
        %v2292 = vpop.f32.mrf.mxu0
        %v2293 = vadd.f32 %v2204, %v2292
        %v2294 = vpop.f32.mrf.mxu0
        %v2295 = vadd.f32 %v2206, %v2294
        %2296 = vmatmul.bf16.gmra.mxu0 %v1558
        %v2297 = vpop.f32.mrf.mxu0
        %v2298 = vadd.f32 %v2209, %v2297
        %v2299 = vpop.f32.mrf.mxu0
        %v2300 = vadd.f32 %v2211, %v2299
        %2301 = vmatmul.bf16.gmra.mxu0 %v1562
        %v2302 = vpop.f32.mrf.mxu0
        %v2303 = vadd.f32 %v2214, %v2302
        %v2304 = vpop.f32.mrf.mxu0
        %v2305 = vadd.f32 %v2216, %v2304
        %2306 = vmatmul.bf16.gmra.mxu0 %v1566
        %v2307 = vpop.f32.mrf.mxu0
        %v2308 = vadd.f32 %v2219, %v2307
        %v2309 = vpop.f32.mrf.mxu0
        %v2310 = vadd.f32 %v2221, %v2309
        %2311 = vmatmul.bf16.gmra.mxu0 %v1570
        %v2312 = vpop.f32.mrf.mxu0
        %v2313 = vadd.f32 %v2224, %v2312
        %v2314 = vpop.f32.mrf.mxu0
        %v2315 = vadd.f32 %v2226, %v2314
        %2316 = vdwg.mxu0
        %2317 = vmatpush.bf16.msra.mxu0 %v1848
        %2318 = vmatpush.bf16.msra.mxu0 %v1846
        %2319 = vmatpush.bf16.msra.mxu0 %v1844
        %2320 = vmatpush.bf16.msra.mxu0 %v1842
        %2321 = vmatpush.bf16.msra.mxu0 %v1840
        %2322 = vmatpush.bf16.msra.mxu0 %v1838
        %2323 = vmatpush.bf16.msra.mxu0 %v1836
        %2324 = vmatpush.bf16.msra.mxu0 %v1834
        %2325 = vmatmul.bf16.gmra.mxu0 %v1507
        %v2326 = vpop.f32.mrf.mxu0
        %v2327 = vadd.f32 %v1638, %v2326
        %v2328 = vpop.f32.mrf.mxu0
        %v2329 = vadd.f32 %v1638, %v2328
        %2330 = vmatmul.bf16.gmra.mxu0 %v1511
        %v2331 = vpop.f32.mrf.mxu0
        %v2332 = vadd.f32 %v1638, %v2331
        %v2333 = vpop.f32.mrf.mxu0
        %v2334 = vadd.f32 %v1638, %v2333
        %2335 = vmatmul.bf16.gmra.mxu0 %v1515
        %v2336 = vpop.f32.mrf.mxu0
        %v2337 = vadd.f32 %v1638, %v2336
        %v2338 = vpop.f32.mrf.mxu0
        %v2339 = vadd.f32 %v1638, %v2338
        %2340 = vmatmul.bf16.gmra.mxu0 %v1519
        %v2341 = vpop.f32.mrf.mxu0
        %v2342 = vadd.f32 %v1638, %v2341
        %v2343 = vpop.f32.mrf.mxu0
        %v2344 = vadd.f32 %v1638, %v2343
        %2345 = vmatmul.bf16.gmra.mxu0 %v1523
        %v2346 = vpop.f32.mrf.mxu0
        %v2347 = vadd.f32 %v1638, %v2346
        %v2348 = vpop.f32.mrf.mxu0
        %v2349 = vadd.f32 %v1638, %v2348
        %2350 = vmatmul.bf16.gmra.mxu0 %v1527
        %v2351 = vpop.f32.mrf.mxu0
        %v2352 = vadd.f32 %v1638, %v2351
        %v2353 = vpop.f32.mrf.mxu0
        %v2354 = vadd.f32 %v1638, %v2353
        %2355 = vmatmul.bf16.gmra.mxu0 %v1531
        %v2356 = vpop.f32.mrf.mxu0
        %v2357 = vadd.f32 %v1638, %v2356
        %v2358 = vpop.f32.mrf.mxu0
        %v2359 = vadd.f32 %v1638, %v2358
        %2360 = vmatmul.bf16.gmra.mxu0 %v1535
        %v2361 = vpop.f32.mrf.mxu0
        %v2362 = vadd.f32 %v1638, %v2361
        %v2363 = vpop.f32.mrf.mxu0
        %v2364 = vadd.f32 %v1638, %v2363
        %2365 = vmatmul.bf16.gmra.mxu0 %v1539
        %v2366 = vpop.f32.mrf.mxu0
        %v2367 = vadd.f32 %v1638, %v2366
        %v2368 = vpop.f32.mrf.mxu0
        %v2369 = vadd.f32 %v1638, %v2368
        %2370 = vmatmul.bf16.gmra.mxu0 %v1543
        %v2371 = vpop.f32.mrf.mxu0
        %v2372 = vadd.f32 %v1638, %v2371
        %v2373 = vpop.f32.mrf.mxu0
        %v2374 = vadd.f32 %v1638, %v2373
        %2375 = vmatmul.bf16.gmra.mxu0 %v1547
        %v2376 = vpop.f32.mrf.mxu0
        %v2377 = vadd.f32 %v1638, %v2376
        %v2378 = vpop.f32.mrf.mxu0
        %v2379 = vadd.f32 %v1638, %v2378
        %2380 = vmatmul.bf16.gmra.mxu0 %v1551
        %v2381 = vpop.f32.mrf.mxu0
        %v2382 = vadd.f32 %v1638, %v2381
        %v2383 = vpop.f32.mrf.mxu0
        %v2384 = vadd.f32 %v1638, %v2383
        %2385 = vmatmul.bf16.gmra.mxu0 %v1555
        %v2386 = vpop.f32.mrf.mxu0
        %v2387 = vadd.f32 %v1638, %v2386
        %v2388 = vpop.f32.mrf.mxu0
        %v2389 = vadd.f32 %v1638, %v2388
        %2390 = vmatmul.bf16.gmra.mxu0 %v1559
        %v2391 = vpop.f32.mrf.mxu0
        %v2392 = vadd.f32 %v1638, %v2391
        %v2393 = vpop.f32.mrf.mxu0
        %v2394 = vadd.f32 %v1638, %v2393
        %2395 = vmatmul.bf16.gmra.mxu0 %v1563
        %v2396 = vpop.f32.mrf.mxu0
        %v2397 = vadd.f32 %v1638, %v2396
        %v2398 = vpop.f32.mrf.mxu0
        %v2399 = vadd.f32 %v1638, %v2398
        %2400 = vmatmul.bf16.gmra.mxu0 %v1567
        %v2401 = vpop.f32.mrf.mxu0
        %v2402 = vadd.f32 %v1638, %v2401
        %v2403 = vpop.f32.mrf.mxu0
        %v2404 = vadd.f32 %v1638, %v2403
        %2405 = vdwg.mxu0
        %2406 = vmatpush.bf16.msra.mxu0 %v1864
        %2407 = vmatpush.bf16.msra.mxu0 %v1862
        %2408 = vmatpush.bf16.msra.mxu0 %v1860
        %2409 = vmatpush.bf16.msra.mxu0 %v1858
        %2410 = vmatpush.bf16.msra.mxu0 %v1856
        %2411 = vmatpush.bf16.msra.mxu0 %v1854
        %2412 = vmatpush.bf16.msra.mxu0 %v1852
        %2413 = vmatpush.bf16.msra.mxu0 %v1850
        %2414 = vmatmul.bf16.gmra.mxu0 %v1508
        %v2415 = vpop.f32.mrf.mxu0
        %v2416 = vadd.f32 %v2327, %v2415
        %v2417 = vpop.f32.mrf.mxu0
        %v2418 = vadd.f32 %v2329, %v2417
        %2419 = vmatmul.bf16.gmra.mxu0 %v1512
        %v2420 = vpop.f32.mrf.mxu0
        %v2421 = vadd.f32 %v2332, %v2420
        %v2422 = vpop.f32.mrf.mxu0
        %v2423 = vadd.f32 %v2334, %v2422
        %2424 = vmatmul.bf16.gmra.mxu0 %v1516
        %v2425 = vpop.f32.mrf.mxu0
        %v2426 = vadd.f32 %v2337, %v2425
        %v2427 = vpop.f32.mrf.mxu0
        %v2428 = vadd.f32 %v2339, %v2427
        %2429 = vmatmul.bf16.gmra.mxu0 %v1520
        %v2430 = vpop.f32.mrf.mxu0
        %v2431 = vadd.f32 %v2342, %v2430
        %v2432 = vpop.f32.mrf.mxu0
        %v2433 = vadd.f32 %v2344, %v2432
        %2434 = vmatmul.bf16.gmra.mxu0 %v1524
        %v2435 = vpop.f32.mrf.mxu0
        %v2436 = vadd.f32 %v2347, %v2435
        %v2437 = vpop.f32.mrf.mxu0
        %v2438 = vadd.f32 %v2349, %v2437
        %2439 = vmatmul.bf16.gmra.mxu0 %v1528
        %v2440 = vpop.f32.mrf.mxu0
        %v2441 = vadd.f32 %v2352, %v2440
        %v2442 = vpop.f32.mrf.mxu0
        %v2443 = vadd.f32 %v2354, %v2442
        %2444 = vmatmul.bf16.gmra.mxu0 %v1532
        %v2445 = vpop.f32.mrf.mxu0
        %v2446 = vadd.f32 %v2357, %v2445
        %v2447 = vpop.f32.mrf.mxu0
        %v2448 = vadd.f32 %v2359, %v2447
        %2449 = vmatmul.bf16.gmra.mxu0 %v1536
        %v2450 = vpop.f32.mrf.mxu0
        %v2451 = vadd.f32 %v2362, %v2450
        %v2452 = vpop.f32.mrf.mxu0
        %v2453 = vadd.f32 %v2364, %v2452
        %2454 = vmatmul.bf16.gmra.mxu0 %v1540
        %v2455 = vpop.f32.mrf.mxu0
        %v2456 = vadd.f32 %v2367, %v2455
        %v2457 = vpop.f32.mrf.mxu0
        %v2458 = vadd.f32 %v2369, %v2457
        %2459 = vmatmul.bf16.gmra.mxu0 %v1544
        %v2460 = vpop.f32.mrf.mxu0
        %v2461 = vadd.f32 %v2372, %v2460
        %v2462 = vpop.f32.mrf.mxu0
        %v2463 = vadd.f32 %v2374, %v2462
        %2464 = vmatmul.bf16.gmra.mxu0 %v1548
        %v2465 = vpop.f32.mrf.mxu0
        %v2466 = vadd.f32 %v2377, %v2465
        %v2467 = vpop.f32.mrf.mxu0
        %v2468 = vadd.f32 %v2379, %v2467
        %2469 = vmatmul.bf16.gmra.mxu0 %v1552
        %v2470 = vpop.f32.mrf.mxu0
        %v2471 = vadd.f32 %v2382, %v2470
        %v2472 = vpop.f32.mrf.mxu0
        %v2473 = vadd.f32 %v2384, %v2472
        %2474 = vmatmul.bf16.gmra.mxu0 %v1556
        %v2475 = vpop.f32.mrf.mxu0
        %v2476 = vadd.f32 %v2387, %v2475
        %v2477 = vpop.f32.mrf.mxu0
        %v2478 = vadd.f32 %v2389, %v2477
        %2479 = vmatmul.bf16.gmra.mxu0 %v1560
        %v2480 = vpop.f32.mrf.mxu0
        %v2481 = vadd.f32 %v2392, %v2480
        %v2482 = vpop.f32.mrf.mxu0
        %v2483 = vadd.f32 %v2394, %v2482
        %2484 = vmatmul.bf16.gmra.mxu0 %v1564
        %v2485 = vpop.f32.mrf.mxu0
        %v2486 = vadd.f32 %v2397, %v2485
        %v2487 = vpop.f32.mrf.mxu0
        %v2488 = vadd.f32 %v2399, %v2487
        %2489 = vmatmul.bf16.gmra.mxu0 %v1568
        %v2490 = vpop.f32.mrf.mxu0
        %v2491 = vadd.f32 %v2402, %v2490
        %v2492 = vpop.f32.mrf.mxu0
        %v2493 = vadd.f32 %v2404, %v2492
        %2494 = vdwg.mxu0
        %2495 = vmatpush.bf16.msra.mxu0 %v1880
        %2496 = vmatpush.bf16.msra.mxu0 %v1878
        %2497 = vmatpush.bf16.msra.mxu0 %v1876
        %2498 = vmatpush.bf16.msra.mxu0 %v1874
        %2499 = vmatpush.bf16.msra.mxu0 %v1872
        %2500 = vmatpush.bf16.msra.mxu0 %v1870
        %2501 = vmatpush.bf16.msra.mxu0 %v1868
        %2502 = vmatpush.bf16.msra.mxu0 %v1866
        %2503 = vmatmul.bf16.gmra.mxu0 %v1509
        %v2504 = vpop.f32.mrf.mxu0
        %v2505 = vadd.f32 %v2416, %v2504
        %v2506 = vpop.f32.mrf.mxu0
        %v2507 = vadd.f32 %v2418, %v2506
        %2508 = vmatmul.bf16.gmra.mxu0 %v1513
        %v2509 = vpop.f32.mrf.mxu0
        %v2510 = vadd.f32 %v2421, %v2509
        %v2511 = vpop.f32.mrf.mxu0
        %v2512 = vadd.f32 %v2423, %v2511
        %2513 = vmatmul.bf16.gmra.mxu0 %v1517
        %v2514 = vpop.f32.mrf.mxu0
        %v2515 = vadd.f32 %v2426, %v2514
        %v2516 = vpop.f32.mrf.mxu0
        %v2517 = vadd.f32 %v2428, %v2516
        %2518 = vmatmul.bf16.gmra.mxu0 %v1521
        %v2519 = vpop.f32.mrf.mxu0
        %v2520 = vadd.f32 %v2431, %v2519
        %v2521 = vpop.f32.mrf.mxu0
        %v2522 = vadd.f32 %v2433, %v2521
        %2523 = vmatmul.bf16.gmra.mxu0 %v1525
        %v2524 = vpop.f32.mrf.mxu0
        %v2525 = vadd.f32 %v2436, %v2524
        %v2526 = vpop.f32.mrf.mxu0
        %v2527 = vadd.f32 %v2438, %v2526
        %2528 = vmatmul.bf16.gmra.mxu0 %v1529
        %v2529 = vpop.f32.mrf.mxu0
        %v2530 = vadd.f32 %v2441, %v2529
        %v2531 = vpop.f32.mrf.mxu0
        %v2532 = vadd.f32 %v2443, %v2531
        %2533 = vmatmul.bf16.gmra.mxu0 %v1533
        %v2534 = vpop.f32.mrf.mxu0
        %v2535 = vadd.f32 %v2446, %v2534
        %v2536 = vpop.f32.mrf.mxu0
        %v2537 = vadd.f32 %v2448, %v2536
        %2538 = vmatmul.bf16.gmra.mxu0 %v1537
        %v2539 = vpop.f32.mrf.mxu0
        %v2540 = vadd.f32 %v2451, %v2539
        %v2541 = vpop.f32.mrf.mxu0
        %v2542 = vadd.f32 %v2453, %v2541
        %2543 = vmatmul.bf16.gmra.mxu0 %v1541
        %v2544 = vpop.f32.mrf.mxu0
        %v2545 = vadd.f32 %v2456, %v2544
        %v2546 = vpop.f32.mrf.mxu0
        %v2547 = vadd.f32 %v2458, %v2546
        %2548 = vmatmul.bf16.gmra.mxu0 %v1545
        %v2549 = vpop.f32.mrf.mxu0
        %v2550 = vadd.f32 %v2461, %v2549
        %v2551 = vpop.f32.mrf.mxu0
        %v2552 = vadd.f32 %v2463, %v2551
        %2553 = vmatmul.bf16.gmra.mxu0 %v1549
        %v2554 = vpop.f32.mrf.mxu0
        %v2555 = vadd.f32 %v2466, %v2554
        %v2556 = vpop.f32.mrf.mxu0
        %v2557 = vadd.f32 %v2468, %v2556
        %2558 = vmatmul.bf16.gmra.mxu0 %v1553
        %v2559 = vpop.f32.mrf.mxu0
        %v2560 = vadd.f32 %v2471, %v2559
        %v2561 = vpop.f32.mrf.mxu0
        %v2562 = vadd.f32 %v2473, %v2561
        %2563 = vmatmul.bf16.gmra.mxu0 %v1557
        %v2564 = vpop.f32.mrf.mxu0
        %v2565 = vadd.f32 %v2476, %v2564
        %v2566 = vpop.f32.mrf.mxu0
        %v2567 = vadd.f32 %v2478, %v2566
        %2568 = vmatmul.bf16.gmra.mxu0 %v1561
        %v2569 = vpop.f32.mrf.mxu0
        %v2570 = vadd.f32 %v2481, %v2569
        %v2571 = vpop.f32.mrf.mxu0
        %v2572 = vadd.f32 %v2483, %v2571
        %2573 = vmatmul.bf16.gmra.mxu0 %v1565
        %v2574 = vpop.f32.mrf.mxu0
        %v2575 = vadd.f32 %v2486, %v2574
        %v2576 = vpop.f32.mrf.mxu0
        %v2577 = vadd.f32 %v2488, %v2576
        %2578 = vmatmul.bf16.gmra.mxu0 %v1569
        %v2579 = vpop.f32.mrf.mxu0
        %v2580 = vadd.f32 %v2491, %v2579
        %v2581 = vpop.f32.mrf.mxu0
        %v2582 = vadd.f32 %v2493, %v2581
        %2583 = vdwg.mxu0
        %2584 = vmatpush.bf16.msra.mxu0 %v1896
        %2585 = vmatpush.bf16.msra.mxu0 %v1894
        %2586 = vmatpush.bf16.msra.mxu0 %v1892
        %2587 = vmatpush.bf16.msra.mxu0 %v1890
        %2588 = vmatpush.bf16.msra.mxu0 %v1888
        %2589 = vmatpush.bf16.msra.mxu0 %v1886
        %2590 = vmatpush.bf16.msra.mxu0 %v1884
        %2591 = vmatpush.bf16.msra.mxu0 %v1882
        %2592 = vmatmul.bf16.gmra.mxu0 %v1510
        %v2593 = vpop.f32.mrf.mxu0
        %v2594 = vadd.f32 %v2505, %v2593
        %v2595 = vpop.f32.mrf.mxu0
        %v2596 = vadd.f32 %v2507, %v2595
        %2597 = vmatmul.bf16.gmra.mxu0 %v1514
        %v2598 = vpop.f32.mrf.mxu0
        %v2599 = vadd.f32 %v2510, %v2598
        %v2600 = vpop.f32.mrf.mxu0
        %v2601 = vadd.f32 %v2512, %v2600
        %2602 = vmatmul.bf16.gmra.mxu0 %v1518
        %v2603 = vpop.f32.mrf.mxu0
        %v2604 = vadd.f32 %v2515, %v2603
        %v2605 = vpop.f32.mrf.mxu0
        %v2606 = vadd.f32 %v2517, %v2605
        %2607 = vmatmul.bf16.gmra.mxu0 %v1522
        %v2608 = vpop.f32.mrf.mxu0
        %v2609 = vadd.f32 %v2520, %v2608
        %v2610 = vpop.f32.mrf.mxu0
        %v2611 = vadd.f32 %v2522, %v2610
        %2612 = vmatmul.bf16.gmra.mxu0 %v1526
        %v2613 = vpop.f32.mrf.mxu0
        %v2614 = vadd.f32 %v2525, %v2613
        %v2615 = vpop.f32.mrf.mxu0
        %v2616 = vadd.f32 %v2527, %v2615
        %2617 = vmatmul.bf16.gmra.mxu0 %v1530
        %v2618 = vpop.f32.mrf.mxu0
        %v2619 = vadd.f32 %v2530, %v2618
        %v2620 = vpop.f32.mrf.mxu0
        %v2621 = vadd.f32 %v2532, %v2620
        %2622 = vmatmul.bf16.gmra.mxu0 %v1534
        %v2623 = vpop.f32.mrf.mxu0
        %v2624 = vadd.f32 %v2535, %v2623
        %v2625 = vpop.f32.mrf.mxu0
        %v2626 = vadd.f32 %v2537, %v2625
        %2627 = vmatmul.bf16.gmra.mxu0 %v1538
        %v2628 = vpop.f32.mrf.mxu0
        %v2629 = vadd.f32 %v2540, %v2628
        %v2630 = vpop.f32.mrf.mxu0
        %v2631 = vadd.f32 %v2542, %v2630
        %2632 = vmatmul.bf16.gmra.mxu0 %v1542
        %v2633 = vpop.f32.mrf.mxu0
        %v2634 = vadd.f32 %v2545, %v2633
        %v2635 = vpop.f32.mrf.mxu0
        %v2636 = vadd.f32 %v2547, %v2635
        %2637 = vmatmul.bf16.gmra.mxu0 %v1546
        %v2638 = vpop.f32.mrf.mxu0
        %v2639 = vadd.f32 %v2550, %v2638
        %v2640 = vpop.f32.mrf.mxu0
        %v2641 = vadd.f32 %v2552, %v2640
        %2642 = vmatmul.bf16.gmra.mxu0 %v1550
        %v2643 = vpop.f32.mrf.mxu0
        %v2644 = vadd.f32 %v2555, %v2643
        %v2645 = vpop.f32.mrf.mxu0
        %v2646 = vadd.f32 %v2557, %v2645
        %2647 = vmatmul.bf16.gmra.mxu0 %v1554
        %v2648 = vpop.f32.mrf.mxu0
        %v2649 = vadd.f32 %v2560, %v2648
        %v2650 = vpop.f32.mrf.mxu0
        %v2651 = vadd.f32 %v2562, %v2650
        %2652 = vmatmul.bf16.gmra.mxu0 %v1558
        %v2653 = vpop.f32.mrf.mxu0
        %v2654 = vadd.f32 %v2565, %v2653
        %v2655 = vpop.f32.mrf.mxu0
        %v2656 = vadd.f32 %v2567, %v2655
        %2657 = vmatmul.bf16.gmra.mxu0 %v1562
        %v2658 = vpop.f32.mrf.mxu0
        %v2659 = vadd.f32 %v2570, %v2658
        %v2660 = vpop.f32.mrf.mxu0
        %v2661 = vadd.f32 %v2572, %v2660
        %2662 = vmatmul.bf16.gmra.mxu0 %v1566
        %v2663 = vpop.f32.mrf.mxu0
        %v2664 = vadd.f32 %v2575, %v2663
        %v2665 = vpop.f32.mrf.mxu0
        %v2666 = vadd.f32 %v2577, %v2665
        %2667 = vmatmul.bf16.gmra.mxu0 %v1570
        %v2668 = vpop.f32.mrf.mxu0
        %v2669 = vadd.f32 %v2580, %v2668
        %v2670 = vpop.f32.mrf.mxu0
        %v2671 = vadd.f32 %v2582, %v2670
        %2672 = vdwg.mxu0
        %vm2673 = vcmp.gt.f32.partialorder %v2238, 0.0
        %vm2674 = vcmp.gt.f32.partialorder %v2594, 0.0
        %vm2675 = vcmp.gt.f32.partialorder %v2240, 0.0
        %vm2676 = vcmp.gt.f32.partialorder %v2596, 0.0
        %vm2677 = vcmp.gt.f32.partialorder %v2243, 0.0
        %vm2678 = vcmp.gt.f32.partialorder %v2599, 0.0
        %vm2679 = vcmp.gt.f32.partialorder %v2245, 0.0
        %vm2680 = vcmp.gt.f32.partialorder %v2601, 0.0
        %vm2681 = vcmp.gt.f32.partialorder %v2248, 0.0
        %vm2682 = vcmp.gt.f32.partialorder %v2604, 0.0
        %vm2683 = vcmp.gt.f32.partialorder %v2250, 0.0
        %vm2684 = vcmp.gt.f32.partialorder %v2606, 0.0
        %vm2685 = vcmp.gt.f32.partialorder %v2253, 0.0
        %vm2686 = vcmp.gt.f32.partialorder %v2609, 0.0
        %vm2687 = vcmp.gt.f32.partialorder %v2255, 0.0
        %vm2688 = vcmp.gt.f32.partialorder %v2611, 0.0
        %vm2689 = vcmp.gt.f32.partialorder %v2258, 0.0
        %vm2690 = vcmp.gt.f32.partialorder %v2614, 0.0
        %vm2691 = vcmp.gt.f32.partialorder %v2260, 0.0
        %vm2692 = vcmp.gt.f32.partialorder %v2616, 0.0
        %vm2693 = vcmp.gt.f32.partialorder %v2263, 0.0
        %vm2694 = vcmp.gt.f32.partialorder %v2619, 0.0
        %vm2695 = vcmp.gt.f32.partialorder %v2265, 0.0
        %vm2696 = vcmp.gt.f32.partialorder %v2621, 0.0
        %vm2697 = vcmp.gt.f32.partialorder %v2268, 0.0
        %vm2698 = vcmp.gt.f32.partialorder %v2624, 0.0
        %vm2699 = vcmp.gt.f32.partialorder %v2270, 0.0
        %vm2700 = vcmp.gt.f32.partialorder %v2626, 0.0
        %vm2701 = vcmp.gt.f32.partialorder %v2273, 0.0
        %vm2702 = vcmp.gt.f32.partialorder %v2629, 0.0
        %vm2703 = vcmp.gt.f32.partialorder %v2275, 0.0
        %vm2704 = vcmp.gt.f32.partialorder %v2631, 0.0
        %vm2705 = vcmp.gt.f32.partialorder %v2278, 0.0
        %vm2706 = vcmp.gt.f32.partialorder %v2634, 0.0
        %vm2707 = vcmp.gt.f32.partialorder %v2280, 0.0
        %vm2708 = vcmp.gt.f32.partialorder %v2636, 0.0
        %vm2709 = vcmp.gt.f32.partialorder %v2283, 0.0
        %vm2710 = vcmp.gt.f32.partialorder %v2639, 0.0
        %vm2711 = vcmp.gt.f32.partialorder %v2285, 0.0
        %vm2712 = vcmp.gt.f32.partialorder %v2641, 0.0
        %vm2713 = vcmp.gt.f32.partialorder %v2288, 0.0
        %vm2714 = vcmp.gt.f32.partialorder %v2644, 0.0
        %vm2715 = vcmp.gt.f32.partialorder %v2290, 0.0
        %vm2716 = vcmp.gt.f32.partialorder %v2646, 0.0
        %vm2717 = vcmp.gt.f32.partialorder %v2293, 0.0
        %vm2718 = vcmp.gt.f32.partialorder %v2649, 0.0
        %vm2719 = vcmp.gt.f32.partialorder %v2295, 0.0
        %vm2720 = vcmp.gt.f32.partialorder %v2651, 0.0
        %vm2721 = vcmp.gt.f32.partialorder %v2298, 0.0
        %vm2722 = vcmp.gt.f32.partialorder %v2654, 0.0
        %vm2723 = vcmp.gt.f32.partialorder %v2300, 0.0
        %vm2724 = vcmp.gt.f32.partialorder %v2656, 0.0
        %vm2725 = vcmp.gt.f32.partialorder %v2303, 0.0
        %vm2726 = vcmp.gt.f32.partialorder %v2659, 0.0
        %vm2727 = vcmp.gt.f32.partialorder %v2305, 0.0
        %vm2728 = vcmp.gt.f32.partialorder %v2661, 0.0
        %vm2729 = vcmp.gt.f32.partialorder %v2308, 0.0
        %vm2730 = vcmp.gt.f32.partialorder %v2664, 0.0
        %vm2731 = vcmp.gt.f32.partialorder %v2310, 0.0
        %vm2732 = vcmp.gt.f32.partialorder %v2666, 0.0
        %vm2733 = vcmp.gt.f32.partialorder %v2313, 0.0
        %vm2734 = vcmp.gt.f32.partialorder %v2669, 0.0
        %vm2735 = vcmp.gt.f32.partialorder %v2315, 0.0
        %vm2736 = vcmp.gt.f32.partialorder %v2671, 0.0
        %v2737 = vmul.f32 %v2238, 0.01
        %v2738 = vmul.f32 %v2594, 0.01
        %v2739 = vmul.f32 %v2240, 0.01
        %v2740 = vmul.f32 %v2596, 0.01
        %v2741 = vmul.f32 %v2243, 0.01
        %v2742 = vmul.f32 %v2599, 0.01
        %v2743 = vmul.f32 %v2245, 0.01
        %v2744 = vmul.f32 %v2601, 0.01
        %v2745 = vmul.f32 %v2248, 0.01
        %v2746 = vmul.f32 %v2604, 0.01
        %v2747 = vmul.f32 %v2250, 0.01
        %v2748 = vmul.f32 %v2606, 0.01
        %v2749 = vmul.f32 %v2253, 0.01
        %v2750 = vmul.f32 %v2609, 0.01
        %v2751 = vmul.f32 %v2255, 0.01
        %v2752 = vmul.f32 %v2611, 0.01
        %v2753 = vmul.f32 %v2258, 0.01
        %v2754 = vmul.f32 %v2614, 0.01
        %v2755 = vmul.f32 %v2260, 0.01
        %v2756 = vmul.f32 %v2616, 0.01
        %v2757 = vmul.f32 %v2263, 0.01
        %v2758 = vmul.f32 %v2619, 0.01
        %v2759 = vmul.f32 %v2265, 0.01
        %v2760 = vmul.f32 %v2621, 0.01
        %v2761 = vmul.f32 %v2268, 0.01
        %v2762 = vmul.f32 %v2624, 0.01
        %v2763 = vmul.f32 %v2270, 0.01
        %v2764 = vmul.f32 %v2626, 0.01
        %v2765 = vmul.f32 %v2273, 0.01
        %v2766 = vmul.f32 %v2629, 0.01
        %v2767 = vmul.f32 %v2275, 0.01
        %v2768 = vmul.f32 %v2631, 0.01
        %v2769 = vmul.f32 %v2278, 0.01
        %v2770 = vmul.f32 %v2634, 0.01
        %v2771 = vmul.f32 %v2280, 0.01
        %v2772 = vmul.f32 %v2636, 0.01
        %v2773 = vmul.f32 %v2283, 0.01
        %v2774 = vmul.f32 %v2639, 0.01
        %v2775 = vmul.f32 %v2285, 0.01
        %v2776 = vmul.f32 %v2641, 0.01
        %v2777 = vmul.f32 %v2288, 0.01
        %v2778 = vmul.f32 %v2644, 0.01
        %v2779 = vmul.f32 %v2290, 0.01
        %v2780 = vmul.f32 %v2646, 0.01
        %v2781 = vmul.f32 %v2293, 0.01
        %v2782 = vmul.f32 %v2649, 0.01
        %v2783 = vmul.f32 %v2295, 0.01
        %v2784 = vmul.f32 %v2651, 0.01
        %v2785 = vmul.f32 %v2298, 0.01
        %v2786 = vmul.f32 %v2654, 0.01
        %v2787 = vmul.f32 %v2300, 0.01
        %v2788 = vmul.f32 %v2656, 0.01
        %v2789 = vmul.f32 %v2303, 0.01
        %v2790 = vmul.f32 %v2659, 0.01
        %v2791 = vmul.f32 %v2305, 0.01
        %v2792 = vmul.f32 %v2661, 0.01
        %v2793 = vmul.f32 %v2308, 0.01
        %v2794 = vmul.f32 %v2664, 0.01
        %v2795 = vmul.f32 %v2310, 0.01
        %v2796 = vmul.f32 %v2666, 0.01
        %v2797 = vmul.f32 %v2313, 0.01
        %v2798 = vmul.f32 %v2669, 0.01
        %v2799 = vmul.f32 %v2315, 0.01
        %v2800 = vmul.f32 %v2671, 0.01
        %v2801 = vsel %vm2673, %v2238, %v2737
        %v2802 = vsel %vm2674, %v2594, %v2738
        %v2803 = vsel %vm2675, %v2240, %v2739
        %v2804 = vsel %vm2676, %v2596, %v2740
        %v2805 = vsel %vm2677, %v2243, %v2741
        %v2806 = vsel %vm2678, %v2599, %v2742
        %v2807 = vsel %vm2679, %v2245, %v2743
        %v2808 = vsel %vm2680, %v2601, %v2744
        %v2809 = vsel %vm2681, %v2248, %v2745
        %v2810 = vsel %vm2682, %v2604, %v2746
        %v2811 = vsel %vm2683, %v2250, %v2747
        %v2812 = vsel %vm2684, %v2606, %v2748
        %v2813 = vsel %vm2685, %v2253, %v2749
        %v2814 = vsel %vm2686, %v2609, %v2750
        %v2815 = vsel %vm2687, %v2255, %v2751
        %v2816 = vsel %vm2688, %v2611, %v2752
        %v2817 = vsel %vm2689, %v2258, %v2753
        %v2818 = vsel %vm2690, %v2614, %v2754
        %v2819 = vsel %vm2691, %v2260, %v2755
        %v2820 = vsel %vm2692, %v2616, %v2756
        %v2821 = vsel %vm2693, %v2263, %v2757
        %v2822 = vsel %vm2694, %v2619, %v2758
        %v2823 = vsel %vm2695, %v2265, %v2759
        %v2824 = vsel %vm2696, %v2621, %v2760
        %v2825 = vsel %vm2697, %v2268, %v2761
        %v2826 = vsel %vm2698, %v2624, %v2762
        %v2827 = vsel %vm2699, %v2270, %v2763
        %v2828 = vsel %vm2700, %v2626, %v2764
        %v2829 = vsel %vm2701, %v2273, %v2765
        %v2830 = vsel %vm2702, %v2629, %v2766
        %v2831 = vsel %vm2703, %v2275, %v2767
        %v2832 = vsel %vm2704, %v2631, %v2768
        %v2833 = vsel %vm2705, %v2278, %v2769
        %v2834 = vsel %vm2706, %v2634, %v2770
        %v2835 = vsel %vm2707, %v2280, %v2771
        %v2836 = vsel %vm2708, %v2636, %v2772
        %v2837 = vsel %vm2709, %v2283, %v2773
        %v2838 = vsel %vm2710, %v2639, %v2774
        %v2839 = vsel %vm2711, %v2285, %v2775
        %v2840 = vsel %vm2712, %v2641, %v2776
        %v2841 = vsel %vm2713, %v2288, %v2777
        %v2842 = vsel %vm2714, %v2644, %v2778
        %v2843 = vsel %vm2715, %v2290, %v2779
        %v2844 = vsel %vm2716, %v2646, %v2780
        %v2845 = vsel %vm2717, %v2293, %v2781
        %v2846 = vsel %vm2718, %v2649, %v2782
        %v2847 = vsel %vm2719, %v2295, %v2783
        %v2848 = vsel %vm2720, %v2651, %v2784
        %v2849 = vsel %vm2721, %v2298, %v2785
        %v2850 = vsel %vm2722, %v2654, %v2786
        %v2851 = vsel %vm2723, %v2300, %v2787
        %v2852 = vsel %vm2724, %v2656, %v2788
        %v2853 = vsel %vm2725, %v2303, %v2789
        %v2854 = vsel %vm2726, %v2659, %v2790
        %v2855 = vsel %vm2727, %v2305, %v2791
        %v2856 = vsel %vm2728, %v2661, %v2792
        %v2857 = vsel %vm2729, %v2308, %v2793
        %v2858 = vsel %vm2730, %v2664, %v2794
        %v2859 = vsel %vm2731, %v2310, %v2795
        %v2860 = vsel %vm2732, %v2666, %v2796
        %v2861 = vsel %vm2733, %v2313, %v2797
        %v2862 = vsel %vm2734, %v2669, %v2798
        %v2863 = vsel %vm2735, %v2315, %v2799
        %v2864 = vsel %vm2736, %v2671, %v2800
        %v2865 = vpack.c.bf16 %v2803, %v2801
        %v2866 = vpack.c.bf16 %v2804, %v2802
        %v2867 = vpack.c.bf16 %v2807, %v2805
        %v2868 = vpack.c.bf16 %v2808, %v2806
        %v2869 = vpack.c.bf16 %v2811, %v2809
        %v2870 = vpack.c.bf16 %v2812, %v2810
        %v2871 = vpack.c.bf16 %v2815, %v2813
        %v2872 = vpack.c.bf16 %v2816, %v2814
        %v2873 = vpack.c.bf16 %v2819, %v2817
        %v2874 = vpack.c.bf16 %v2820, %v2818
        %v2875 = vpack.c.bf16 %v2823, %v2821
        %v2876 = vpack.c.bf16 %v2824, %v2822
        %v2877 = vpack.c.bf16 %v2827, %v2825
        %v2878 = vpack.c.bf16 %v2828, %v2826
        %v2879 = vpack.c.bf16 %v2831, %v2829
        %v2880 = vpack.c.bf16 %v2832, %v2830
        %v2881 = vpack.c.bf16 %v2835, %v2833
        %v2882 = vpack.c.bf16 %v2836, %v2834
        %v2883 = vpack.c.bf16 %v2839, %v2837
        %v2884 = vpack.c.bf16 %v2840, %v2838
        %v2885 = vpack.c.bf16 %v2843, %v2841
        %v2886 = vpack.c.bf16 %v2844, %v2842
        %v2887 = vpack.c.bf16 %v2847, %v2845
        %v2888 = vpack.c.bf16 %v2848, %v2846
        %v2889 = vpack.c.bf16 %v2851, %v2849
        %v2890 = vpack.c.bf16 %v2852, %v2850
        %v2891 = vpack.c.bf16 %v2855, %v2853
        %v2892 = vpack.c.bf16 %v2856, %v2854
        %v2893 = vpack.c.bf16 %v2859, %v2857
        %v2894 = vpack.c.bf16 %v2860, %v2858
        %v2895 = vpack.c.bf16 %v2863, %v2861
        %v2896 = vpack.c.bf16 %v2864, %v2862
        %v2897 = vld [vmem:[#allocation3] sm:$0xf]
        %v2898 = vld [vmem:[#allocation3 + $0x4] sm:$0xf]
        %v2899 = vld [vmem:[#allocation3 + $0x8] sm:$0xf]
        %v2900 = vld [vmem:[#allocation3 + $0xc] sm:$0xf]
        %v2901 = vld [vmem:[#allocation3 + $0x10] sm:$0xf]
        %v2902 = vld [vmem:[#allocation3 + $0x14] sm:$0xf]
        %v2903 = vld [vmem:[#allocation3 + $0x18] sm:$0xf]
        %v2904 = vld [vmem:[#allocation3 + $0x1c] sm:$0xf]
        %v2905 = vld [vmem:[#allocation3 + $0x20] sm:$0xf]
        %v2906 = vld [vmem:[#allocation3 + $0x24] sm:$0xf]
        %v2907 = vld [vmem:[#allocation3 + $0x28] sm:$0xf]
        %v2908 = vld [vmem:[#allocation3 + $0x2c] sm:$0xf]
        %v2909 = vld [vmem:[#allocation3 + $0x30] sm:$0xf]
        %v2910 = vld [vmem:[#allocation3 + $0x34] sm:$0xf]
        %v2911 = vld [vmem:[#allocation3 + $0x38] sm:$0xf]
        %v2912 = vld [vmem:[#allocation3 + $0x3c] sm:$0xf]
        %v2913 = vld [vmem:[#allocation3 + $0x40] sm:$0xf]
        %v2914 = vld [vmem:[#allocation3 + $0x44] sm:$0xf]
        %v2915 = vld [vmem:[#allocation3 + $0x48] sm:$0xf]
        %v2916 = vld [vmem:[#allocation3 + $0x4c] sm:$0xf]
        %v2917 = vld [vmem:[#allocation3 + $0x50] sm:$0xf]
        %v2918 = vld [vmem:[#allocation3 + $0x54] sm:$0xf]
        %v2919 = vld [vmem:[#allocation3 + $0x58] sm:$0xf]
        %v2920 = vld [vmem:[#allocation3 + $0x5c] sm:$0xf]
        %v2921 = vld [vmem:[#allocation3 + $0x60] sm:$0xf]
        %v2922 = vld [vmem:[#allocation3 + $0x64] sm:$0xf]
        %v2923 = vld [vmem:[#allocation3 + $0x68] sm:$0xf]
        %v2924 = vld [vmem:[#allocation3 + $0x6c] sm:$0xf]
        %v2925 = vld [vmem:[#allocation3 + $0x70] sm:$0xf]
        %v2926 = vld [vmem:[#allocation3 + $0x74] sm:$0xf]
        %v2927 = vld [vmem:[#allocation3 + $0x78] sm:$0xf]
        %v2928 = vld [vmem:[#allocation3 + $0x7c] sm:$0xf]
        %v2929 = vld [vmem:[%s6] sm:$0x1]
        %v2931 = vperm.slane %v2929, 0
        %v2965 = vunpack.c.l.b16 %v2897
        %v2966 = vunpack.c.l.b16 %v2898
        %v2967 = vunpack.c.l.b16 %v2899
        %v2968 = vunpack.c.l.b16 %v2900
        %v2969 = vunpack.c.l.b16 %v2901
        %v2970 = vunpack.c.l.b16 %v2902
        %v2971 = vunpack.c.l.b16 %v2903
        %v2972 = vunpack.c.l.b16 %v2904
        %v2973 = vunpack.c.l.b16 %v2905
        %v2974 = vunpack.c.l.b16 %v2906
        %v2975 = vunpack.c.l.b16 %v2907
        %v2976 = vunpack.c.l.b16 %v2908
        %v2977 = vunpack.c.l.b16 %v2909
        %v2978 = vunpack.c.l.b16 %v2910
        %v2979 = vunpack.c.l.b16 %v2911
        %v2980 = vunpack.c.l.b16 %v2912
        %v2981 = vunpack.c.l.b16 %v2913
        %v2982 = vunpack.c.l.b16 %v2914
        %v2983 = vunpack.c.l.b16 %v2915
        %v2984 = vunpack.c.l.b16 %v2916
        %v2985 = vunpack.c.l.b16 %v2917
        %v2986 = vunpack.c.l.b16 %v2918
        %v2987 = vunpack.c.l.b16 %v2919
        %v2988 = vunpack.c.l.b16 %v2920
        %v2989 = vunpack.c.l.b16 %v2921
        %v2990 = vunpack.c.l.b16 %v2922
        %v2991 = vunpack.c.l.b16 %v2923
        %v2992 = vunpack.c.l.b16 %v2924
        %v2993 = vunpack.c.l.b16 %v2925
        %v2994 = vunpack.c.l.b16 %v2926
        %v2995 = vunpack.c.l.b16 %v2927
        %v2996 = vunpack.c.l.b16 %v2928
        %v2997 = vpack.c.b16 %v2966, %v2965
        %v2998 = vpack.c.b16 %v2968, %v2967
        %v2999 = vpack.c.b16 %v2970, %v2969
        %v3000 = vpack.c.b16 %v2972, %v2971
        %v3001 = vpack.c.b16 %v2974, %v2973
        %v3002 = vpack.c.b16 %v2976, %v2975
        %v3003 = vpack.c.b16 %v2978, %v2977
        %v3004 = vpack.c.b16 %v2980, %v2979
        %v3005 = vpack.c.b16 %v2982, %v2981
        %v3006 = vpack.c.b16 %v2984, %v2983
        %v3007 = vpack.c.b16 %v2986, %v2985
        %v3008 = vpack.c.b16 %v2988, %v2987
        %v3009 = vpack.c.b16 %v2990, %v2989
        %v3010 = vpack.c.b16 %v2992, %v2991
        %v3011 = vpack.c.b16 %v2994, %v2993
        %v3012 = vpack.c.b16 %v2996, %v2995
        %3029 = vmatpush.bf16.msra.mxu0 %v3004
        %3030 = vmatpush.bf16.msra.mxu0 %v3003
        %3031 = vmatpush.bf16.msra.mxu0 %v3002
        %3032 = vmatpush.bf16.msra.mxu0 %v3001
        %3033 = vmatpush.bf16.msra.mxu0 %v3000
        %3034 = vmatpush.bf16.msra.mxu0 %v2999
        %3035 = vmatpush.bf16.msra.mxu0 %v2998
        %3036 = vmatpush.bf16.msra.mxu0 %v2997
        %3037 = vmatmul.bf16.gmra.mxu0 %v2865
        %v3038 = vpop.f32.mrf.mxu0
        %v3039 = vadd.f32 %v2931, %v3038
        %v3040 = vpop.f32.mrf.mxu0
        %v3041 = vadd.f32 %v2931, %v3040
        %3042 = vmatmul.bf16.gmra.mxu0 %v2867
        %v3043 = vpop.f32.mrf.mxu0
        %v3044 = vadd.f32 %v2931, %v3043
        %v3045 = vpop.f32.mrf.mxu0
        %v3046 = vadd.f32 %v2931, %v3045
        %3047 = vmatmul.bf16.gmra.mxu0 %v2869
        %v3048 = vpop.f32.mrf.mxu0
        %v3049 = vadd.f32 %v2931, %v3048
        %v3050 = vpop.f32.mrf.mxu0
        %v3051 = vadd.f32 %v2931, %v3050
        %3052 = vmatmul.bf16.gmra.mxu0 %v2871
        %v3053 = vpop.f32.mrf.mxu0
        %v3054 = vadd.f32 %v2931, %v3053
        %v3055 = vpop.f32.mrf.mxu0
        %v3056 = vadd.f32 %v2931, %v3055
        %3057 = vmatmul.bf16.gmra.mxu0 %v2873
        %v3058 = vpop.f32.mrf.mxu0
        %v3059 = vadd.f32 %v2931, %v3058
        %v3060 = vpop.f32.mrf.mxu0
        %v3061 = vadd.f32 %v2931, %v3060
        %3062 = vmatmul.bf16.gmra.mxu0 %v2875
        %v3063 = vpop.f32.mrf.mxu0
        %v3064 = vadd.f32 %v2931, %v3063
        %v3065 = vpop.f32.mrf.mxu0
        %v3066 = vadd.f32 %v2931, %v3065
        %3067 = vmatmul.bf16.gmra.mxu0 %v2877
        %v3068 = vpop.f32.mrf.mxu0
        %v3069 = vadd.f32 %v2931, %v3068
        %v3070 = vpop.f32.mrf.mxu0
        %v3071 = vadd.f32 %v2931, %v3070
        %3072 = vmatmul.bf16.gmra.mxu0 %v2879
        %v3073 = vpop.f32.mrf.mxu0
        %v3074 = vadd.f32 %v2931, %v3073
        %v3075 = vpop.f32.mrf.mxu0
        %v3076 = vadd.f32 %v2931, %v3075
        %3077 = vmatmul.bf16.gmra.mxu0 %v2881
        %v3078 = vpop.f32.mrf.mxu0
        %v3079 = vadd.f32 %v2931, %v3078
        %v3080 = vpop.f32.mrf.mxu0
        %v3081 = vadd.f32 %v2931, %v3080
        %3082 = vmatmul.bf16.gmra.mxu0 %v2883
        %v3083 = vpop.f32.mrf.mxu0
        %v3084 = vadd.f32 %v2931, %v3083
        %v3085 = vpop.f32.mrf.mxu0
        %v3086 = vadd.f32 %v2931, %v3085
        %3087 = vmatmul.bf16.gmra.mxu0 %v2885
        %v3088 = vpop.f32.mrf.mxu0
        %v3089 = vadd.f32 %v2931, %v3088
        %v3090 = vpop.f32.mrf.mxu0
        %v3091 = vadd.f32 %v2931, %v3090
        %3092 = vmatmul.bf16.gmra.mxu0 %v2887
        %v3093 = vpop.f32.mrf.mxu0
        %v3094 = vadd.f32 %v2931, %v3093
        %v3095 = vpop.f32.mrf.mxu0
        %v3096 = vadd.f32 %v2931, %v3095
        %3097 = vmatmul.bf16.gmra.mxu0 %v2889
        %v3098 = vpop.f32.mrf.mxu0
        %v3099 = vadd.f32 %v2931, %v3098
        %v3100 = vpop.f32.mrf.mxu0
        %v3101 = vadd.f32 %v2931, %v3100
        %3102 = vmatmul.bf16.gmra.mxu0 %v2891
        %v3103 = vpop.f32.mrf.mxu0
        %v3104 = vadd.f32 %v2931, %v3103
        %v3105 = vpop.f32.mrf.mxu0
        %v3106 = vadd.f32 %v2931, %v3105
        %3107 = vmatmul.bf16.gmra.mxu0 %v2893
        %v3108 = vpop.f32.mrf.mxu0
        %v3109 = vadd.f32 %v2931, %v3108
        %v3110 = vpop.f32.mrf.mxu0
        %v3111 = vadd.f32 %v2931, %v3110
        %3112 = vmatmul.bf16.gmra.mxu0 %v2895
        %v3113 = vpop.f32.mrf.mxu0
        %v3114 = vadd.f32 %v2931, %v3113
        %v3115 = vpop.f32.mrf.mxu0
        %v3116 = vadd.f32 %v2931, %v3115
        %3117 = vdwg.mxu0
        %3118 = vmatpush.bf16.msra.mxu0 %v3012
        %3119 = vmatpush.bf16.msra.mxu0 %v3011
        %3120 = vmatpush.bf16.msra.mxu0 %v3010
        %3121 = vmatpush.bf16.msra.mxu0 %v3009
        %3122 = vmatpush.bf16.msra.mxu0 %v3008
        %3123 = vmatpush.bf16.msra.mxu0 %v3007
        %3124 = vmatpush.bf16.msra.mxu0 %v3006
        %3125 = vmatpush.bf16.msra.mxu0 %v3005
        %3126 = vmatmul.bf16.gmra.mxu0 %v2866
        %v3127 = vpop.f32.mrf.mxu0
        %v3128 = vadd.f32 %v3039, %v3127
        %v3129 = vpop.f32.mrf.mxu0
        %v3130 = vadd.f32 %v3041, %v3129
        %3131 = vmatmul.bf16.gmra.mxu0 %v2868
        %v3132 = vpop.f32.mrf.mxu0
        %v3133 = vadd.f32 %v3044, %v3132
        %v3134 = vpop.f32.mrf.mxu0
        %v3135 = vadd.f32 %v3046, %v3134
        %3136 = vmatmul.bf16.gmra.mxu0 %v2870
        %v3137 = vpop.f32.mrf.mxu0
        %v3138 = vadd.f32 %v3049, %v3137
        %v3139 = vpop.f32.mrf.mxu0
        %v3140 = vadd.f32 %v3051, %v3139
        %3141 = vmatmul.bf16.gmra.mxu0 %v2872
        %v3142 = vpop.f32.mrf.mxu0
        %v3143 = vadd.f32 %v3054, %v3142
        %v3144 = vpop.f32.mrf.mxu0
        %v3145 = vadd.f32 %v3056, %v3144
        %3146 = vmatmul.bf16.gmra.mxu0 %v2874
        %v3147 = vpop.f32.mrf.mxu0
        %v3148 = vadd.f32 %v3059, %v3147
        %v3149 = vpop.f32.mrf.mxu0
        %v3150 = vadd.f32 %v3061, %v3149
        %3151 = vmatmul.bf16.gmra.mxu0 %v2876
        %v3152 = vpop.f32.mrf.mxu0
        %v3153 = vadd.f32 %v3064, %v3152
        %v3154 = vpop.f32.mrf.mxu0
        %v3155 = vadd.f32 %v3066, %v3154
        %3156 = vmatmul.bf16.gmra.mxu0 %v2878
        %v3157 = vpop.f32.mrf.mxu0
        %v3158 = vadd.f32 %v3069, %v3157
        %v3159 = vpop.f32.mrf.mxu0
        %v3160 = vadd.f32 %v3071, %v3159
        %3161 = vmatmul.bf16.gmra.mxu0 %v2880
        %v3162 = vpop.f32.mrf.mxu0
        %v3163 = vadd.f32 %v3074, %v3162
        %v3164 = vpop.f32.mrf.mxu0
        %v3165 = vadd.f32 %v3076, %v3164
        %3166 = vmatmul.bf16.gmra.mxu0 %v2882
        %v3167 = vpop.f32.mrf.mxu0
        %v3168 = vadd.f32 %v3079, %v3167
        %v3169 = vpop.f32.mrf.mxu0
        %v3170 = vadd.f32 %v3081, %v3169
        %3171 = vmatmul.bf16.gmra.mxu0 %v2884
        %v3172 = vpop.f32.mrf.mxu0
        %v3173 = vadd.f32 %v3084, %v3172
        %v3174 = vpop.f32.mrf.mxu0
        %v3175 = vadd.f32 %v3086, %v3174
        %3176 = vmatmul.bf16.gmra.mxu0 %v2886
        %v3177 = vpop.f32.mrf.mxu0
        %v3178 = vadd.f32 %v3089, %v3177
        %v3179 = vpop.f32.mrf.mxu0
        %v3180 = vadd.f32 %v3091, %v3179
        %3181 = vmatmul.bf16.gmra.mxu0 %v2888
        %v3182 = vpop.f32.mrf.mxu0
        %v3183 = vadd.f32 %v3094, %v3182
        %v3184 = vpop.f32.mrf.mxu0
        %v3185 = vadd.f32 %v3096, %v3184
        %3186 = vmatmul.bf16.gmra.mxu0 %v2890
        %v3187 = vpop.f32.mrf.mxu0
        %v3188 = vadd.f32 %v3099, %v3187
        %v3189 = vpop.f32.mrf.mxu0
        %v3190 = vadd.f32 %v3101, %v3189
        %3191 = vmatmul.bf16.gmra.mxu0 %v2892
        %v3192 = vpop.f32.mrf.mxu0
        %v3193 = vadd.f32 %v3104, %v3192
        %v3194 = vpop.f32.mrf.mxu0
        %v3195 = vadd.f32 %v3106, %v3194
        %3196 = vmatmul.bf16.gmra.mxu0 %v2894
        %v3197 = vpop.f32.mrf.mxu0
        %v3198 = vadd.f32 %v3109, %v3197
        %v3199 = vpop.f32.mrf.mxu0
        %v3200 = vadd.f32 %v3111, %v3199
        %3201 = vmatmul.bf16.gmra.mxu0 %v2896
        %v3202 = vpop.f32.mrf.mxu0
        %v3203 = vadd.f32 %v3114, %v3202
        %v3204 = vpop.f32.mrf.mxu0
        %v3205 = vadd.f32 %v3116, %v3204
        %3206 = vdwg.mxu0
        %vm3207 = vcmp.gt.f32.partialorder %v3128, 0.0
        %vm3208 = vcmp.gt.f32.partialorder %v3130, 0.0
        %vm3209 = vcmp.gt.f32.partialorder %v3133, 0.0
        %vm3210 = vcmp.gt.f32.partialorder %v3135, 0.0
        %vm3211 = vcmp.gt.f32.partialorder %v3138, 0.0
        %vm3212 = vcmp.gt.f32.partialorder %v3140, 0.0
        %vm3213 = vcmp.gt.f32.partialorder %v3143, 0.0
        %vm3214 = vcmp.gt.f32.partialorder %v3145, 0.0
        %vm3215 = vcmp.gt.f32.partialorder %v3148, 0.0
        %vm3216 = vcmp.gt.f32.partialorder %v3150, 0.0
        %vm3217 = vcmp.gt.f32.partialorder %v3153, 0.0
        %vm3218 = vcmp.gt.f32.partialorder %v3155, 0.0
        %vm3219 = vcmp.gt.f32.partialorder %v3158, 0.0
        %vm3220 = vcmp.gt.f32.partialorder %v3160, 0.0
        %vm3221 = vcmp.gt.f32.partialorder %v3163, 0.0
        %vm3222 = vcmp.gt.f32.partialorder %v3165, 0.0
        %vm3223 = vcmp.gt.f32.partialorder %v3168, 0.0
        %vm3224 = vcmp.gt.f32.partialorder %v3170, 0.0
        %vm3225 = vcmp.gt.f32.partialorder %v3173, 0.0
        %vm3226 = vcmp.gt.f32.partialorder %v3175, 0.0
        %vm3227 = vcmp.gt.f32.partialorder %v3178, 0.0
        %vm3228 = vcmp.gt.f32.partialorder %v3180, 0.0
        %vm3229 = vcmp.gt.f32.partialorder %v3183, 0.0
        %vm3230 = vcmp.gt.f32.partialorder %v3185, 0.0
        %vm3231 = vcmp.gt.f32.partialorder %v3188, 0.0
        %vm3232 = vcmp.gt.f32.partialorder %v3190, 0.0
        %vm3233 = vcmp.gt.f32.partialorder %v3193, 0.0
        %vm3234 = vcmp.gt.f32.partialorder %v3195, 0.0
        %vm3235 = vcmp.gt.f32.partialorder %v3198, 0.0
        %vm3236 = vcmp.gt.f32.partialorder %v3200, 0.0
        %vm3237 = vcmp.gt.f32.partialorder %v3203, 0.0
        %vm3238 = vcmp.gt.f32.partialorder %v3205, 0.0
        %v3239 = vmul.f32 %v3128, 0.01
        %v3240 = vmul.f32 %v3130, 0.01
        %v3241 = vmul.f32 %v3133, 0.01
        %v3242 = vmul.f32 %v3135, 0.01
        %v3243 = vmul.f32 %v3138, 0.01
        %v3244 = vmul.f32 %v3140, 0.01
        %v3245 = vmul.f32 %v3143, 0.01
        %v3246 = vmul.f32 %v3145, 0.01
        %v3247 = vmul.f32 %v3148, 0.01
        %v3248 = vmul.f32 %v3150, 0.01
        %v3249 = vmul.f32 %v3153, 0.01
        %v3250 = vmul.f32 %v3155, 0.01
        %v3251 = vmul.f32 %v3158, 0.01
        %v3252 = vmul.f32 %v3160, 0.01
        %v3253 = vmul.f32 %v3163, 0.01
        %v3254 = vmul.f32 %v3165, 0.01
        %v3255 = vmul.f32 %v3168, 0.01
        %v3256 = vmul.f32 %v3170, 0.01
        %v3257 = vmul.f32 %v3173, 0.01
        %v3258 = vmul.f32 %v3175, 0.01
        %v3259 = vmul.f32 %v3178, 0.01
        %v3260 = vmul.f32 %v3180, 0.01
        %v3261 = vmul.f32 %v3183, 0.01
        %v3262 = vmul.f32 %v3185, 0.01
        %v3263 = vmul.f32 %v3188, 0.01
        %v3264 = vmul.f32 %v3190, 0.01
        %v3265 = vmul.f32 %v3193, 0.01
        %v3266 = vmul.f32 %v3195, 0.01
        %v3267 = vmul.f32 %v3198, 0.01
        %v3268 = vmul.f32 %v3200, 0.01
        %v3269 = vmul.f32 %v3203, 0.01
        %v3270 = vmul.f32 %v3205, 0.01
        %v3271 = vsel %vm3207, %v3128, %v3239
        %v3272 = vsel %vm3208, %v3130, %v3240
        %v3273 = vsel %vm3209, %v3133, %v3241
        %v3274 = vsel %vm3210, %v3135, %v3242
        %v3275 = vsel %vm3211, %v3138, %v3243
        %v3276 = vsel %vm3212, %v3140, %v3244
        %v3277 = vsel %vm3213, %v3143, %v3245
        %v3278 = vsel %vm3214, %v3145, %v3246
        %v3279 = vsel %vm3215, %v3148, %v3247
        %v3280 = vsel %vm3216, %v3150, %v3248
        %v3281 = vsel %vm3217, %v3153, %v3249
        %v3282 = vsel %vm3218, %v3155, %v3250
        %v3283 = vsel %vm3219, %v3158, %v3251
        %v3284 = vsel %vm3220, %v3160, %v3252
        %v3285 = vsel %vm3221, %v3163, %v3253
        %v3286 = vsel %vm3222, %v3165, %v3254
        %v3287 = vsel %vm3223, %v3168, %v3255
        %v3288 = vsel %vm3224, %v3170, %v3256
        %v3289 = vsel %vm3225, %v3173, %v3257
        %v3290 = vsel %vm3226, %v3175, %v3258
        %v3291 = vsel %vm3227, %v3178, %v3259
        %v3292 = vsel %vm3228, %v3180, %v3260
        %v3293 = vsel %vm3229, %v3183, %v3261
        %v3294 = vsel %vm3230, %v3185, %v3262
        %v3295 = vsel %vm3231, %v3188, %v3263
        %v3296 = vsel %vm3232, %v3190, %v3264
        %v3297 = vsel %vm3233, %v3193, %v3265
        %v3298 = vsel %vm3234, %v3195, %v3266
        %v3299 = vsel %vm3235, %v3198, %v3267
        %v3300 = vsel %vm3236, %v3200, %v3268
        %v3301 = vsel %vm3237, %v3203, %v3269
        %v3302 = vsel %vm3238, %v3205, %v3270
        %v3303 = vpack.c.bf16 %v3272, %v3271
        %v3304 = vpack.c.bf16 %v3274, %v3273
        %v3305 = vpack.c.bf16 %v3276, %v3275
        %v3306 = vpack.c.bf16 %v3278, %v3277
        %v3307 = vpack.c.bf16 %v3280, %v3279
        %v3308 = vpack.c.bf16 %v3282, %v3281
        %v3309 = vpack.c.bf16 %v3284, %v3283
        %v3310 = vpack.c.bf16 %v3286, %v3285
        %v3311 = vpack.c.bf16 %v3288, %v3287
        %v3312 = vpack.c.bf16 %v3290, %v3289
        %v3313 = vpack.c.bf16 %v3292, %v3291
        %v3314 = vpack.c.bf16 %v3294, %v3293
        %v3315 = vpack.c.bf16 %v3296, %v3295
        %v3316 = vpack.c.bf16 %v3298, %v3297
        %v3317 = vpack.c.bf16 %v3300, %v3299
        %v3318 = vpack.c.bf16 %v3302, %v3301
        %v3319 = vld [vmem:[%s7] sm:$0xf]
        %v3320 = vld [vmem:[%s7 + $0x4] sm:$0xf]
        %v3321 = vld [vmem:[%s7 + $0x8] sm:$0xf]
        %v3322 = vld [vmem:[%s7 + $0xc] sm:$0xf]
        %v3323 = vld [vmem:[%s7 + $0x10] sm:$0xf]
        %v3324 = vld [vmem:[%s7 + $0x14] sm:$0xf]
        %v3325 = vld [vmem:[%s7 + $0x18] sm:$0xf]
        %v3326 = vld [vmem:[%s7 + $0x1c] sm:$0xf]
        %v3327 = vld [vmem:[%s7 + $0x20] sm:$0xf]
        %v3328 = vld [vmem:[%s7 + $0x24] sm:$0xf]
        %v3329 = vld [vmem:[%s7 + $0x28] sm:$0xf]
        %v3330 = vld [vmem:[%s7 + $0x2c] sm:$0xf]
        %v3331 = vld [vmem:[%s7 + $0x30] sm:$0xf]
        %v3332 = vld [vmem:[%s7 + $0x34] sm:$0xf]
        %v3333 = vld [vmem:[%s7 + $0x38] sm:$0xf]
        %v3334 = vld [vmem:[%s7 + $0x3c] sm:$0xf]
        %v3335 = vld [vmem:[%s8] sm:$0x1]
        %v3337 = vperm.slane %v3335, 0
        %v3355 = vunpack.c.l.b16 %v3319
        %v3356 = vunpack.c.l.b16 %v3320
        %v3357 = vunpack.c.l.b16 %v3321
        %v3358 = vunpack.c.l.b16 %v3322
        %v3359 = vunpack.c.l.b16 %v3323
        %v3360 = vunpack.c.l.b16 %v3324
        %v3361 = vunpack.c.l.b16 %v3325
        %v3362 = vunpack.c.l.b16 %v3326
        %v3363 = vunpack.c.l.b16 %v3327
        %v3364 = vunpack.c.l.b16 %v3328
        %v3365 = vunpack.c.l.b16 %v3329
        %v3366 = vunpack.c.l.b16 %v3330
        %v3367 = vunpack.c.l.b16 %v3331
        %v3368 = vunpack.c.l.b16 %v3332
        %v3369 = vunpack.c.l.b16 %v3333
        %v3370 = vunpack.c.l.b16 %v3334
        %v3371 = vpack.c.b16 %v3356, %v3355
        %v3372 = vpack.c.b16 %v3358, %v3357
        %v3373 = vpack.c.b16 %v3360, %v3359
        %v3374 = vpack.c.b16 %v3362, %v3361
        %v3375 = vpack.c.b16 %v3364, %v3363
        %v3376 = vpack.c.b16 %v3366, %v3365
        %v3377 = vpack.c.b16 %v3368, %v3367
        %v3378 = vpack.c.b16 %v3370, %v3369
        %3387 = vmatpush.bf16.msra.mxu0 %v3378
        %3388 = vmatpush.bf16.msra.mxu0 %v3377
        %3389 = vmatpush.bf16.msra.mxu0 %v3376
        %3390 = vmatpush.bf16.msra.mxu0 %v3375
        %3391 = vmatpush.bf16.msra.mxu0 %v3374
        %3392 = vmatpush.bf16.msra.mxu0 %v3373
        %3393 = vmatpush.bf16.msra.mxu0 %v3372
        %3394 = vmatpush.bf16.msra.mxu0 %v3371
        %3395 = vmatmul.bf16.gmra.mxu0 %v3303
        %v3396 = vpop.f32.mrf.mxu0
        %v3397 = vadd.f32 %v3337, %v3396
        %v3398 = vpop.f32.mrf.mxu0
        %v3399 = vadd.f32 %v3337, %v3398
        %3400 = vmatmul.bf16.gmra.mxu0 %v3304
        %v3401 = vpop.f32.mrf.mxu0
        %v3402 = vadd.f32 %v3337, %v3401
        %v3403 = vpop.f32.mrf.mxu0
        %v3404 = vadd.f32 %v3337, %v3403
        %3405 = vmatmul.bf16.gmra.mxu0 %v3305
        %v3406 = vpop.f32.mrf.mxu0
        %v3407 = vadd.f32 %v3337, %v3406
        %v3408 = vpop.f32.mrf.mxu0
        %v3409 = vadd.f32 %v3337, %v3408
        %3410 = vmatmul.bf16.gmra.mxu0 %v3306
        %v3411 = vpop.f32.mrf.mxu0
        %v3412 = vadd.f32 %v3337, %v3411
        %v3413 = vpop.f32.mrf.mxu0
        %v3414 = vadd.f32 %v3337, %v3413
        %3415 = vmatmul.bf16.gmra.mxu0 %v3307
        %v3416 = vpop.f32.mrf.mxu0
        %v3417 = vadd.f32 %v3337, %v3416
        %v3418 = vpop.f32.mrf.mxu0
        %v3419 = vadd.f32 %v3337, %v3418
        %3420 = vmatmul.bf16.gmra.mxu0 %v3308
        %v3421 = vpop.f32.mrf.mxu0
        %v3422 = vadd.f32 %v3337, %v3421
        %v3423 = vpop.f32.mrf.mxu0
        %v3424 = vadd.f32 %v3337, %v3423
        %3425 = vmatmul.bf16.gmra.mxu0 %v3309
        %v3426 = vpop.f32.mrf.mxu0
        %v3427 = vadd.f32 %v3337, %v3426
        %v3428 = vpop.f32.mrf.mxu0
        %v3429 = vadd.f32 %v3337, %v3428
        %3430 = vmatmul.bf16.gmra.mxu0 %v3310
        %v3431 = vpop.f32.mrf.mxu0
        %v3432 = vadd.f32 %v3337, %v3431
        %v3433 = vpop.f32.mrf.mxu0
        %v3434 = vadd.f32 %v3337, %v3433
        %3435 = vmatmul.bf16.gmra.mxu0 %v3311
        %v3436 = vpop.f32.mrf.mxu0
        %v3437 = vadd.f32 %v3337, %v3436
        %v3438 = vpop.f32.mrf.mxu0
        %v3439 = vadd.f32 %v3337, %v3438
        %3440 = vmatmul.bf16.gmra.mxu0 %v3312
        %v3441 = vpop.f32.mrf.mxu0
        %v3442 = vadd.f32 %v3337, %v3441
        %v3443 = vpop.f32.mrf.mxu0
        %v3444 = vadd.f32 %v3337, %v3443
        %3445 = vmatmul.bf16.gmra.mxu0 %v3313
        %v3446 = vpop.f32.mrf.mxu0
        %v3447 = vadd.f32 %v3337, %v3446
        %v3448 = vpop.f32.mrf.mxu0
        %v3449 = vadd.f32 %v3337, %v3448
        %3450 = vmatmul.bf16.gmra.mxu0 %v3314
        %v3451 = vpop.f32.mrf.mxu0
        %v3452 = vadd.f32 %v3337, %v3451
        %v3453 = vpop.f32.mrf.mxu0
        %v3454 = vadd.f32 %v3337, %v3453
        %3455 = vmatmul.bf16.gmra.mxu0 %v3315
        %v3456 = vpop.f32.mrf.mxu0
        %v3457 = vadd.f32 %v3337, %v3456
        %v3458 = vpop.f32.mrf.mxu0
        %v3459 = vadd.f32 %v3337, %v3458
        %3460 = vmatmul.bf16.gmra.mxu0 %v3316
        %v3461 = vpop.f32.mrf.mxu0
        %v3462 = vadd.f32 %v3337, %v3461
        %v3463 = vpop.f32.mrf.mxu0
        %v3464 = vadd.f32 %v3337, %v3463
        %3465 = vmatmul.bf16.gmra.mxu0 %v3317
        %v3466 = vpop.f32.mrf.mxu0
        %v3467 = vadd.f32 %v3337, %v3466
        %v3468 = vpop.f32.mrf.mxu0
        %v3469 = vadd.f32 %v3337, %v3468
        %3470 = vmatmul.bf16.gmra.mxu0 %v3318
        %v3471 = vpop.f32.mrf.mxu0
        %v3472 = vadd.f32 %v3337, %v3471
        %v3473 = vpop.f32.mrf.mxu0
        %v3474 = vadd.f32 %v3337, %v3473
        %3475 = vdwg.mxu0
        %vm3476 = vcmp.gt.f32.partialorder %v3397, 0.0
        %vm3477 = vcmp.gt.f32.partialorder %v3399, 0.0
        %vm3478 = vcmp.gt.f32.partialorder %v3402, 0.0
        %vm3479 = vcmp.gt.f32.partialorder %v3404, 0.0
        %vm3480 = vcmp.gt.f32.partialorder %v3407, 0.0
        %vm3481 = vcmp.gt.f32.partialorder %v3409, 0.0
        %vm3482 = vcmp.gt.f32.partialorder %v3412, 0.0
        %vm3483 = vcmp.gt.f32.partialorder %v3414, 0.0
        %vm3484 = vcmp.gt.f32.partialorder %v3417, 0.0
        %vm3485 = vcmp.gt.f32.partialorder %v3419, 0.0
        %vm3486 = vcmp.gt.f32.partialorder %v3422, 0.0
        %vm3487 = vcmp.gt.f32.partialorder %v3424, 0.0
        %vm3488 = vcmp.gt.f32.partialorder %v3427, 0.0
        %vm3489 = vcmp.gt.f32.partialorder %v3429, 0.0
        %vm3490 = vcmp.gt.f32.partialorder %v3432, 0.0
        %vm3491 = vcmp.gt.f32.partialorder %v3434, 0.0
        %vm3492 = vcmp.gt.f32.partialorder %v3437, 0.0
        %vm3493 = vcmp.gt.f32.partialorder %v3439, 0.0
        %vm3494 = vcmp.gt.f32.partialorder %v3442, 0.0
        %vm3495 = vcmp.gt.f32.partialorder %v3444, 0.0
        %vm3496 = vcmp.gt.f32.partialorder %v3447, 0.0
        %vm3497 = vcmp.gt.f32.partialorder %v3449, 0.0
        %vm3498 = vcmp.gt.f32.partialorder %v3452, 0.0
        %vm3499 = vcmp.gt.f32.partialorder %v3454, 0.0
        %vm3500 = vcmp.gt.f32.partialorder %v3457, 0.0
        %vm3501 = vcmp.gt.f32.partialorder %v3459, 0.0
        %vm3502 = vcmp.gt.f32.partialorder %v3462, 0.0
        %vm3503 = vcmp.gt.f32.partialorder %v3464, 0.0
        %vm3504 = vcmp.gt.f32.partialorder %v3467, 0.0
        %vm3505 = vcmp.gt.f32.partialorder %v3469, 0.0
        %vm3506 = vcmp.gt.f32.partialorder %v3472, 0.0
        %vm3507 = vcmp.gt.f32.partialorder %v3474, 0.0
        %v3508 = vmul.f32 %v3397, 0.01
        %v3509 = vmul.f32 %v3399, 0.01
        %v3510 = vmul.f32 %v3402, 0.01
        %v3511 = vmul.f32 %v3404, 0.01
        %v3512 = vmul.f32 %v3407, 0.01
        %v3513 = vmul.f32 %v3409, 0.01
        %v3514 = vmul.f32 %v3412, 0.01
        %v3515 = vmul.f32 %v3414, 0.01
        %v3516 = vmul.f32 %v3417, 0.01
        %v3517 = vmul.f32 %v3419, 0.01
        %v3518 = vmul.f32 %v3422, 0.01
        %v3519 = vmul.f32 %v3424, 0.01
        %v3520 = vmul.f32 %v3427, 0.01
        %v3521 = vmul.f32 %v3429, 0.01
        %v3522 = vmul.f32 %v3432, 0.01
        %v3523 = vmul.f32 %v3434, 0.01
        %v3524 = vmul.f32 %v3437, 0.01
        %v3525 = vmul.f32 %v3439, 0.01
        %v3526 = vmul.f32 %v3442, 0.01
        %v3527 = vmul.f32 %v3444, 0.01
        %v3528 = vmul.f32 %v3447, 0.01
        %v3529 = vmul.f32 %v3449, 0.01
        %v3530 = vmul.f32 %v3452, 0.01
        %v3531 = vmul.f32 %v3454, 0.01
        %v3532 = vmul.f32 %v3457, 0.01
        %v3533 = vmul.f32 %v3459, 0.01
        %v3534 = vmul.f32 %v3462, 0.01
        %v3535 = vmul.f32 %v3464, 0.01
        %v3536 = vmul.f32 %v3467, 0.01
        %v3537 = vmul.f32 %v3469, 0.01
        %v3538 = vmul.f32 %v3472, 0.01
        %v3539 = vmul.f32 %v3474, 0.01
        %v3540 = vsel %vm3476, %v3397, %v3508
        %v3541 = vsel %vm3477, %v3399, %v3509
        %v3542 = vsel %vm3478, %v3402, %v3510
        %v3543 = vsel %vm3479, %v3404, %v3511
        %v3544 = vsel %vm3480, %v3407, %v3512
        %v3545 = vsel %vm3481, %v3409, %v3513
        %v3546 = vsel %vm3482, %v3412, %v3514
        %v3547 = vsel %vm3483, %v3414, %v3515
        %v3548 = vsel %vm3484, %v3417, %v3516
        %v3549 = vsel %vm3485, %v3419, %v3517
        %v3550 = vsel %vm3486, %v3422, %v3518
        %v3551 = vsel %vm3487, %v3424, %v3519
        %v3552 = vsel %vm3488, %v3427, %v3520
        %v3553 = vsel %vm3489, %v3429, %v3521
        %v3554 = vsel %vm3490, %v3432, %v3522
        %v3555 = vsel %vm3491, %v3434, %v3523
        %v3556 = vsel %vm3492, %v3437, %v3524
        %v3557 = vsel %vm3493, %v3439, %v3525
        %v3558 = vsel %vm3494, %v3442, %v3526
        %v3559 = vsel %vm3495, %v3444, %v3527
        %v3560 = vsel %vm3496, %v3447, %v3528
        %v3561 = vsel %vm3497, %v3449, %v3529
        %v3562 = vsel %vm3498, %v3452, %v3530
        %v3563 = vsel %vm3499, %v3454, %v3531
        %v3564 = vsel %vm3500, %v3457, %v3532
        %v3565 = vsel %vm3501, %v3459, %v3533
        %v3566 = vsel %vm3502, %v3462, %v3534
        %v3567 = vsel %vm3503, %v3464, %v3535
        %v3568 = vsel %vm3504, %v3467, %v3536
        %v3569 = vsel %vm3505, %v3469, %v3537
        %v3570 = vsel %vm3506, %v3472, %v3538
        %v3571 = vsel %vm3507, %v3474, %v3539
        %v3572 = vpack.c.bf16 %v3541, %v3540
        %v3573 = vpack.c.bf16 %v3543, %v3542
        %v3574 = vpack.c.bf16 %v3545, %v3544
        %v3575 = vpack.c.bf16 %v3547, %v3546
        %v3576 = vpack.c.bf16 %v3549, %v3548
        %v3577 = vpack.c.bf16 %v3551, %v3550
        %v3578 = vpack.c.bf16 %v3553, %v3552
        %v3579 = vpack.c.bf16 %v3555, %v3554
        %v3580 = vpack.c.bf16 %v3557, %v3556
        %v3581 = vpack.c.bf16 %v3559, %v3558
        %v3582 = vpack.c.bf16 %v3561, %v3560
        %v3583 = vpack.c.bf16 %v3563, %v3562
        %v3584 = vpack.c.bf16 %v3565, %v3564
        %v3585 = vpack.c.bf16 %v3567, %v3566
        %v3586 = vpack.c.bf16 %v3569, %v3568
        %v3587 = vpack.c.bf16 %v3571, %v3570
        %v3588 = vld [vmem:[%s9] sm:$0xf]
        %v3589 = vld [vmem:[%s9 + $0x4] sm:$0xf]
        %v3590 = vld [vmem:[%s9 + $0x8] sm:$0xf]
        %v3591 = vld [vmem:[%s9 + $0xc] sm:$0xf]
        %v3592 = vld [vmem:[%s9 + $0x10] sm:$0xf]
        %v3593 = vld [vmem:[%s9 + $0x14] sm:$0xf]
        %v3594 = vld [vmem:[%s9 + $0x18] sm:$0xf]
        %v3595 = vld [vmem:[%s9 + $0x1c] sm:$0xf]
        %v3596 = vld [vmem:[%s10] sm:$0x1]
        %v3598 = vperm.slane %v3596, 0
        %v3608 = vunpack.c.l.b16 %v3588
        %v3609 = vunpack.c.l.b16 %v3589
        %v3610 = vunpack.c.l.b16 %v3590
        %v3611 = vunpack.c.l.b16 %v3591
        %v3612 = vunpack.c.l.b16 %v3592
        %v3613 = vunpack.c.l.b16 %v3593
        %v3614 = vunpack.c.l.b16 %v3594
        %v3615 = vunpack.c.l.b16 %v3595
        %v3616 = vpack.c.b16 %v3609, %v3608
        %v3617 = vpack.c.b16 %v3611, %v3610
        %v3618 = vpack.c.b16 %v3613, %v3612
        %v3619 = vpack.c.b16 %v3615, %v3614
        %vm3624 = vcmask 523264
        %v3626 = vsel %vm3624, %v3572, 0
        %v3629 = vsel %vm3624, %v3573, 0
        %v3632 = vsel %vm3624, %v3574, 0
        %v3635 = vsel %vm3624, %v3575, 0
        %v3638 = vsel %vm3624, %v3576, 0
        %v3641 = vsel %vm3624, %v3577, 0
        %v3644 = vsel %vm3624, %v3578, 0
        %v3647 = vsel %vm3624, %v3579, 0
        %v3650 = vsel %vm3624, %v3580, 0
        %v3653 = vsel %vm3624, %v3581, 0
        %v3656 = vsel %vm3624, %v3582, 0
        %v3659 = vsel %vm3624, %v3583, 0
        %v3662 = vsel %vm3624, %v3584, 0
        %v3665 = vsel %vm3624, %v3585, 0
        %v3668 = vsel %vm3624, %v3586, 0
        %v3671 = vsel %vm3624, %v3587, 0
        %3673 = vmatpush.bf16.msra.mxu0 0
        %3674 = vmatpush.bf16.msra.mxu0 0
        %3675 = vmatpush.bf16.msra.mxu0 0
        %3676 = vmatpush.bf16.msra.mxu0 0
        %3677 = vmatpush.bf16.msra.mxu0 %v3619
        %3678 = vmatpush.bf16.msra.mxu0 %v3618
        %3679 = vmatpush.bf16.msra.mxu0 %v3617
        %3680 = vmatpush.bf16.msra.mxu0 %v3616
        %3681 = vmatmul.bf16.gmra.mxu0 %v3626
        %v3682 = vpop.f32.mrf.mxu0
        %v3683 = vadd.f32 %v3598, %v3682
        %v3684 = vpop.f32.mrf.mxu0
        %v3685 = vadd.f32 %v3598, %v3684
        %3686 = vmatmul.bf16.gmra.mxu0 %v3629
        %v3687 = vpop.f32.mrf.mxu0
        %v3688 = vadd.f32 %v3598, %v3687
        %v3689 = vpop.f32.mrf.mxu0
        %v3690 = vadd.f32 %v3598, %v3689
        %3691 = vmatmul.bf16.gmra.mxu0 %v3632
        %v3692 = vpop.f32.mrf.mxu0
        %v3693 = vadd.f32 %v3598, %v3692
        %v3694 = vpop.f32.mrf.mxu0
        %v3695 = vadd.f32 %v3598, %v3694
        %3696 = vmatmul.bf16.gmra.mxu0 %v3635
        %v3697 = vpop.f32.mrf.mxu0
        %v3698 = vadd.f32 %v3598, %v3697
        %v3699 = vpop.f32.mrf.mxu0
        %v3700 = vadd.f32 %v3598, %v3699
        %3701 = vmatmul.bf16.gmra.mxu0 %v3638
        %v3702 = vpop.f32.mrf.mxu0
        %v3703 = vadd.f32 %v3598, %v3702
        %v3704 = vpop.f32.mrf.mxu0
        %v3705 = vadd.f32 %v3598, %v3704
        %3706 = vmatmul.bf16.gmra.mxu0 %v3641
        %v3707 = vpop.f32.mrf.mxu0
        %v3708 = vadd.f32 %v3598, %v3707
        %v3709 = vpop.f32.mrf.mxu0
        %v3710 = vadd.f32 %v3598, %v3709
        %3711 = vmatmul.bf16.gmra.mxu0 %v3644
        %v3712 = vpop.f32.mrf.mxu0
        %v3713 = vadd.f32 %v3598, %v3712
        %v3714 = vpop.f32.mrf.mxu0
        %v3715 = vadd.f32 %v3598, %v3714
        %3716 = vmatmul.bf16.gmra.mxu0 %v3647
        %v3717 = vpop.f32.mrf.mxu0
        %v3718 = vadd.f32 %v3598, %v3717
        %v3719 = vpop.f32.mrf.mxu0
        %v3720 = vadd.f32 %v3598, %v3719
        %3721 = vmatmul.bf16.gmra.mxu0 %v3650
        %v3722 = vpop.f32.mrf.mxu0
        %v3723 = vadd.f32 %v3598, %v3722
        %v3724 = vpop.f32.mrf.mxu0
        %v3725 = vadd.f32 %v3598, %v3724
        %3726 = vmatmul.bf16.gmra.mxu0 %v3653
        %v3727 = vpop.f32.mrf.mxu0
        %v3728 = vadd.f32 %v3598, %v3727
        %v3729 = vpop.f32.mrf.mxu0
        %v3730 = vadd.f32 %v3598, %v3729
        %3731 = vmatmul.bf16.gmra.mxu0 %v3656
        %v3732 = vpop.f32.mrf.mxu0
        %v3733 = vadd.f32 %v3598, %v3732
        %v3734 = vpop.f32.mrf.mxu0
        %v3735 = vadd.f32 %v3598, %v3734
        %3736 = vmatmul.bf16.gmra.mxu0 %v3659
        %v3737 = vpop.f32.mrf.mxu0
        %v3738 = vadd.f32 %v3598, %v3737
        %v3739 = vpop.f32.mrf.mxu0
        %v3740 = vadd.f32 %v3598, %v3739
        %3741 = vmatmul.bf16.gmra.mxu0 %v3662
        %v3742 = vpop.f32.mrf.mxu0
        %v3743 = vadd.f32 %v3598, %v3742
        %v3744 = vpop.f32.mrf.mxu0
        %v3745 = vadd.f32 %v3598, %v3744
        %3746 = vmatmul.bf16.gmra.mxu0 %v3665
        %v3747 = vpop.f32.mrf.mxu0
        %v3748 = vadd.f32 %v3598, %v3747
        %v3749 = vpop.f32.mrf.mxu0
        %v3750 = vadd.f32 %v3598, %v3749
        %3751 = vmatmul.bf16.gmra.mxu0 %v3668
        %v3752 = vpop.f32.mrf.mxu0
        %v3753 = vadd.f32 %v3598, %v3752
        %v3754 = vpop.f32.mrf.mxu0
        %v3755 = vadd.f32 %v3598, %v3754
        %3756 = vmatmul.bf16.gmra.mxu0 %v3671
        %v3757 = vpop.f32.mrf.mxu0
        %v3758 = vadd.f32 %v3598, %v3757
        %v3759 = vpop.f32.mrf.mxu0
        %v3760 = vadd.f32 %v3598, %v3759
        %3761 = vdwg.mxu0
        %vm3762 = vcmp.gt.f32.partialorder %v3683, 0.0
        %vm3763 = vcmp.gt.f32.partialorder %v3685, 0.0
        %vm3764 = vcmp.gt.f32.partialorder %v3688, 0.0
        %vm3765 = vcmp.gt.f32.partialorder %v3690, 0.0
        %vm3766 = vcmp.gt.f32.partialorder %v3693, 0.0
        %vm3767 = vcmp.gt.f32.partialorder %v3695, 0.0
        %vm3768 = vcmp.gt.f32.partialorder %v3698, 0.0
        %vm3769 = vcmp.gt.f32.partialorder %v3700, 0.0
        %vm3770 = vcmp.gt.f32.partialorder %v3703, 0.0
        %vm3771 = vcmp.gt.f32.partialorder %v3705, 0.0
        %vm3772 = vcmp.gt.f32.partialorder %v3708, 0.0
        %vm3773 = vcmp.gt.f32.partialorder %v3710, 0.0
        %vm3774 = vcmp.gt.f32.partialorder %v3713, 0.0
        %vm3775 = vcmp.gt.f32.partialorder %v3715, 0.0
        %vm3776 = vcmp.gt.f32.partialorder %v3718, 0.0
        %vm3777 = vcmp.gt.f32.partialorder %v3720, 0.0
        %vm3778 = vcmp.gt.f32.partialorder %v3723, 0.0
        %vm3779 = vcmp.gt.f32.partialorder %v3725, 0.0
        %vm3780 = vcmp.gt.f32.partialorder %v3728, 0.0
        %vm3781 = vcmp.gt.f32.partialorder %v3730, 0.0
        %vm3782 = vcmp.gt.f32.partialorder %v3733, 0.0
        %vm3783 = vcmp.gt.f32.partialorder %v3735, 0.0
        %vm3784 = vcmp.gt.f32.partialorder %v3738, 0.0
        %vm3785 = vcmp.gt.f32.partialorder %v3740, 0.0
        %vm3786 = vcmp.gt.f32.partialorder %v3743, 0.0
        %vm3787 = vcmp.gt.f32.partialorder %v3745, 0.0
        %vm3788 = vcmp.gt.f32.partialorder %v3748, 0.0
        %vm3789 = vcmp.gt.f32.partialorder %v3750, 0.0
        %vm3790 = vcmp.gt.f32.partialorder %v3753, 0.0
        %vm3791 = vcmp.gt.f32.partialorder %v3755, 0.0
        %vm3792 = vcmp.gt.f32.partialorder %v3758, 0.0
        %vm3793 = vcmp.gt.f32.partialorder %v3760, 0.0
        %v3794 = vmul.f32 %v3683, 0.01
        %v3795 = vmul.f32 %v3685, 0.01
        %v3796 = vmul.f32 %v3688, 0.01
        %v3797 = vmul.f32 %v3690, 0.01
        %v3798 = vmul.f32 %v3693, 0.01
        %v3799 = vmul.f32 %v3695, 0.01
        %v3800 = vmul.f32 %v3698, 0.01
        %v3801 = vmul.f32 %v3700, 0.01
        %v3802 = vmul.f32 %v3703, 0.01
        %v3803 = vmul.f32 %v3705, 0.01
        %v3804 = vmul.f32 %v3708, 0.01
        %v3805 = vmul.f32 %v3710, 0.01
        %v3806 = vmul.f32 %v3713, 0.01
        %v3807 = vmul.f32 %v3715, 0.01
        %v3808 = vmul.f32 %v3718, 0.01
        %v3809 = vmul.f32 %v3720, 0.01
        %v3810 = vmul.f32 %v3723, 0.01
        %v3811 = vmul.f32 %v3725, 0.01
        %v3812 = vmul.f32 %v3728, 0.01
        %v3813 = vmul.f32 %v3730, 0.01
        %v3814 = vmul.f32 %v3733, 0.01
        %v3815 = vmul.f32 %v3735, 0.01
        %v3816 = vmul.f32 %v3738, 0.01
        %v3817 = vmul.f32 %v3740, 0.01
        %v3818 = vmul.f32 %v3743, 0.01
        %v3819 = vmul.f32 %v3745, 0.01
        %v3820 = vmul.f32 %v3748, 0.01
        %v3821 = vmul.f32 %v3750, 0.01
        %v3822 = vmul.f32 %v3753, 0.01
        %v3823 = vmul.f32 %v3755, 0.01
        %v3824 = vmul.f32 %v3758, 0.01
        %v3825 = vmul.f32 %v3760, 0.01
        %v3826 = vsel %vm3762, %v3683, %v3794
        %v3827 = vsel %vm3763, %v3685, %v3795
        %v3828 = vsel %vm3764, %v3688, %v3796
        %v3829 = vsel %vm3765, %v3690, %v3797
        %v3830 = vsel %vm3766, %v3693, %v3798
        %v3831 = vsel %vm3767, %v3695, %v3799
        %v3832 = vsel %vm3768, %v3698, %v3800
        %v3833 = vsel %vm3769, %v3700, %v3801
        %v3834 = vsel %vm3770, %v3703, %v3802
        %v3835 = vsel %vm3771, %v3705, %v3803
        %v3836 = vsel %vm3772, %v3708, %v3804
        %v3837 = vsel %vm3773, %v3710, %v3805
        %v3838 = vsel %vm3774, %v3713, %v3806
        %v3839 = vsel %vm3775, %v3715, %v3807
        %v3840 = vsel %vm3776, %v3718, %v3808
        %v3841 = vsel %vm3777, %v3720, %v3809
        %v3842 = vsel %vm3778, %v3723, %v3810
        %v3843 = vsel %vm3779, %v3725, %v3811
        %v3844 = vsel %vm3780, %v3728, %v3812
        %v3845 = vsel %vm3781, %v3730, %v3813
        %v3846 = vsel %vm3782, %v3733, %v3814
        %v3847 = vsel %vm3783, %v3735, %v3815
        %v3848 = vsel %vm3784, %v3738, %v3816
        %v3849 = vsel %vm3785, %v3740, %v3817
        %v3850 = vsel %vm3786, %v3743, %v3818
        %v3851 = vsel %vm3787, %v3745, %v3819
        %v3852 = vsel %vm3788, %v3748, %v3820
        %v3853 = vsel %vm3789, %v3750, %v3821
        %v3854 = vsel %vm3790, %v3753, %v3822
        %v3855 = vsel %vm3791, %v3755, %v3823
        %v3856 = vsel %vm3792, %v3758, %v3824
        %v3857 = vsel %vm3793, %v3760, %v3825
        %v3858 = vpack.c.bf16 %v3827, %v3826
        %v3859 = vpack.c.bf16 %v3829, %v3828
        %v3860 = vpack.c.bf16 %v3831, %v3830
        %v3861 = vpack.c.bf16 %v3833, %v3832
        %v3862 = vpack.c.bf16 %v3835, %v3834
        %v3863 = vpack.c.bf16 %v3837, %v3836
        %v3864 = vpack.c.bf16 %v3839, %v3838
        %v3865 = vpack.c.bf16 %v3841, %v3840
        %v3866 = vpack.c.bf16 %v3843, %v3842
        %v3867 = vpack.c.bf16 %v3845, %v3844
        %v3868 = vpack.c.bf16 %v3847, %v3846
        %v3869 = vpack.c.bf16 %v3849, %v3848
        %v3870 = vpack.c.bf16 %v3851, %v3850
        %v3871 = vpack.c.bf16 %v3853, %v3852
        %v3872 = vpack.c.bf16 %v3855, %v3854
        %v3873 = vpack.c.bf16 %v3857, %v3856
        %v3874 = vld [vmem:[%s11] sm:$0xf]
        %v3875 = vld [vmem:[%s11 + $0x4] sm:$0xf]
        %v3876 = vld [vmem:[%s11 + $0x8] sm:$0xf]
        %v3877 = vld [vmem:[%s11 + $0xc] sm:$0xf]
        %v3878 = vld [vmem:[%s12] sm:$0x1]
        %v3880 = vperm.slane %v3878, 0
        %v3886 = vunpack.c.l.b16 %v3874
        %v3887 = vunpack.c.l.b16 %v3875
        %v3888 = vunpack.c.l.b16 %v3876
        %v3889 = vunpack.c.l.b16 %v3877
        %v3890 = vpack.c.b16 %v3887, %v3886
        %v3891 = vpack.c.b16 %v3889, %v3888
        %vm3894 = vcmask 261120
        %v3896 = vsel %vm3894, %v3858, 0
        %v3899 = vsel %vm3894, %v3859, 0
        %v3902 = vsel %vm3894, %v3860, 0
        %v3905 = vsel %vm3894, %v3861, 0
        %v3908 = vsel %vm3894, %v3862, 0
        %v3911 = vsel %vm3894, %v3863, 0
        %v3914 = vsel %vm3894, %v3864, 0
        %v3917 = vsel %vm3894, %v3865, 0
        %v3920 = vsel %vm3894, %v3866, 0
        %v3923 = vsel %vm3894, %v3867, 0
        %v3926 = vsel %vm3894, %v3868, 0
        %v3929 = vsel %vm3894, %v3869, 0
        %v3932 = vsel %vm3894, %v3870, 0
        %v3935 = vsel %vm3894, %v3871, 0
        %v3938 = vsel %vm3894, %v3872, 0
        %v3941 = vsel %vm3894, %v3873, 0
        %3943 = vmatpush.bf16.msra.mxu0 0
        %3944 = vmatpush.bf16.msra.mxu0 0
        %3945 = vmatpush.bf16.msra.mxu0 0
        %3946 = vmatpush.bf16.msra.mxu0 0
        %3947 = vmatpush.bf16.msra.mxu0 0
        %3948 = vmatpush.bf16.msra.mxu0 0
        %3949 = vmatpush.bf16.msra.mxu0 %v3891
        %3950 = vmatpush.bf16.msra.mxu0 %v3890
        %3951 = vmatmul.bf16.gmra.mxu0 %v3896
        %v3952 = vpop.f32.mrf.mxu0
        %v3953 = vadd.f32 %v3880, %v3952
        %v3954 = vpop.f32.mrf.mxu0
        %v3955 = vadd.f32 %v3880, %v3954
        %3956 = vmatmul.bf16.gmra.mxu0 %v3899
        %v3957 = vpop.f32.mrf.mxu0
        %v3958 = vadd.f32 %v3880, %v3957
        %v3959 = vpop.f32.mrf.mxu0
        %v3960 = vadd.f32 %v3880, %v3959
        %3961 = vmatmul.bf16.gmra.mxu0 %v3902
        %v3962 = vpop.f32.mrf.mxu0
        %v3963 = vadd.f32 %v3880, %v3962
        %v3964 = vpop.f32.mrf.mxu0
        %v3965 = vadd.f32 %v3880, %v3964
        %3966 = vmatmul.bf16.gmra.mxu0 %v3905
        %v3967 = vpop.f32.mrf.mxu0
        %v3968 = vadd.f32 %v3880, %v3967
        %v3969 = vpop.f32.mrf.mxu0
        %v3970 = vadd.f32 %v3880, %v3969
        %3971 = vmatmul.bf16.gmra.mxu0 %v3908
        %v3972 = vpop.f32.mrf.mxu0
        %v3973 = vadd.f32 %v3880, %v3972
        %v3974 = vpop.f32.mrf.mxu0
        %v3975 = vadd.f32 %v3880, %v3974
        %3976 = vmatmul.bf16.gmra.mxu0 %v3911
        %v3977 = vpop.f32.mrf.mxu0
        %v3978 = vadd.f32 %v3880, %v3977
        %v3979 = vpop.f32.mrf.mxu0
        %v3980 = vadd.f32 %v3880, %v3979
        %3981 = vmatmul.bf16.gmra.mxu0 %v3914
        %v3982 = vpop.f32.mrf.mxu0
        %v3983 = vadd.f32 %v3880, %v3982
        %v3984 = vpop.f32.mrf.mxu0
        %v3985 = vadd.f32 %v3880, %v3984
        %3986 = vmatmul.bf16.gmra.mxu0 %v3917
        %v3987 = vpop.f32.mrf.mxu0
        %v3988 = vadd.f32 %v3880, %v3987
        %v3989 = vpop.f32.mrf.mxu0
        %v3990 = vadd.f32 %v3880, %v3989
        %3991 = vmatmul.bf16.gmra.mxu0 %v3920
        %v3992 = vpop.f32.mrf.mxu0
        %v3993 = vadd.f32 %v3880, %v3992
        %v3994 = vpop.f32.mrf.mxu0
        %v3995 = vadd.f32 %v3880, %v3994
        %3996 = vmatmul.bf16.gmra.mxu0 %v3923
        %v3997 = vpop.f32.mrf.mxu0
        %v3998 = vadd.f32 %v3880, %v3997
        %v3999 = vpop.f32.mrf.mxu0
        %v4000 = vadd.f32 %v3880, %v3999
        %4001 = vmatmul.bf16.gmra.mxu0 %v3926
        %v4002 = vpop.f32.mrf.mxu0
        %v4003 = vadd.f32 %v3880, %v4002
        %v4004 = vpop.f32.mrf.mxu0
        %v4005 = vadd.f32 %v3880, %v4004
        %4006 = vmatmul.bf16.gmra.mxu0 %v3929
        %v4007 = vpop.f32.mrf.mxu0
        %v4008 = vadd.f32 %v3880, %v4007
        %v4009 = vpop.f32.mrf.mxu0
        %v4010 = vadd.f32 %v3880, %v4009
        %4011 = vmatmul.bf16.gmra.mxu0 %v3932
        %v4012 = vpop.f32.mrf.mxu0
        %v4013 = vadd.f32 %v3880, %v4012
        %v4014 = vpop.f32.mrf.mxu0
        %v4015 = vadd.f32 %v3880, %v4014
        %4016 = vmatmul.bf16.gmra.mxu0 %v3935
        %v4017 = vpop.f32.mrf.mxu0
        %v4018 = vadd.f32 %v3880, %v4017
        %v4019 = vpop.f32.mrf.mxu0
        %v4020 = vadd.f32 %v3880, %v4019
        %4021 = vmatmul.bf16.gmra.mxu0 %v3938
        %v4022 = vpop.f32.mrf.mxu0
        %v4023 = vadd.f32 %v3880, %v4022
        %v4024 = vpop.f32.mrf.mxu0
        %v4025 = vadd.f32 %v3880, %v4024
        %4026 = vmatmul.bf16.gmra.mxu0 %v3941
        %v4027 = vpop.f32.mrf.mxu0
        %v4028 = vadd.f32 %v3880, %v4027
        %v4029 = vpop.f32.mrf.mxu0
        %v4030 = vadd.f32 %v3880, %v4029
        %4031 = vdwg.mxu0
        %vm4032 = vcmp.gt.f32.partialorder %v3953, 0.0
        %vm4033 = vcmp.gt.f32.partialorder %v3955, 0.0
        %vm4034 = vcmp.gt.f32.partialorder %v3958, 0.0
        %vm4035 = vcmp.gt.f32.partialorder %v3960, 0.0
        %vm4036 = vcmp.gt.f32.partialorder %v3963, 0.0
        %vm4037 = vcmp.gt.f32.partialorder %v3965, 0.0
        %vm4038 = vcmp.gt.f32.partialorder %v3968, 0.0
        %vm4039 = vcmp.gt.f32.partialorder %v3970, 0.0
        %vm4040 = vcmp.gt.f32.partialorder %v3973, 0.0
        %vm4041 = vcmp.gt.f32.partialorder %v3975, 0.0
        %vm4042 = vcmp.gt.f32.partialorder %v3978, 0.0
        %vm4043 = vcmp.gt.f32.partialorder %v3980, 0.0
        %vm4044 = vcmp.gt.f32.partialorder %v3983, 0.0
        %vm4045 = vcmp.gt.f32.partialorder %v3985, 0.0
        %vm4046 = vcmp.gt.f32.partialorder %v3988, 0.0
        %vm4047 = vcmp.gt.f32.partialorder %v3990, 0.0
        %vm4048 = vcmp.gt.f32.partialorder %v3993, 0.0
        %vm4049 = vcmp.gt.f32.partialorder %v3995, 0.0
        %vm4050 = vcmp.gt.f32.partialorder %v3998, 0.0
        %vm4051 = vcmp.gt.f32.partialorder %v4000, 0.0
        %vm4052 = vcmp.gt.f32.partialorder %v4003, 0.0
        %vm4053 = vcmp.gt.f32.partialorder %v4005, 0.0
        %vm4054 = vcmp.gt.f32.partialorder %v4008, 0.0
        %vm4055 = vcmp.gt.f32.partialorder %v4010, 0.0
        %vm4056 = vcmp.gt.f32.partialorder %v4013, 0.0
        %vm4057 = vcmp.gt.f32.partialorder %v4015, 0.0
        %vm4058 = vcmp.gt.f32.partialorder %v4018, 0.0
        %vm4059 = vcmp.gt.f32.partialorder %v4020, 0.0
        %vm4060 = vcmp.gt.f32.partialorder %v4023, 0.0
        %vm4061 = vcmp.gt.f32.partialorder %v4025, 0.0
        %vm4062 = vcmp.gt.f32.partialorder %v4028, 0.0
        %vm4063 = vcmp.gt.f32.partialorder %v4030, 0.0
        %v4064 = vmul.f32 %v3953, 0.01
        %v4065 = vmul.f32 %v3955, 0.01
        %v4066 = vmul.f32 %v3958, 0.01
        %v4067 = vmul.f32 %v3960, 0.01
        %v4068 = vmul.f32 %v3963, 0.01
        %v4069 = vmul.f32 %v3965, 0.01
        %v4070 = vmul.f32 %v3968, 0.01
        %v4071 = vmul.f32 %v3970, 0.01
        %v4072 = vmul.f32 %v3973, 0.01
        %v4073 = vmul.f32 %v3975, 0.01
        %v4074 = vmul.f32 %v3978, 0.01
        %v4075 = vmul.f32 %v3980, 0.01
        %v4076 = vmul.f32 %v3983, 0.01
        %v4077 = vmul.f32 %v3985, 0.01
        %v4078 = vmul.f32 %v3988, 0.01
        %v4079 = vmul.f32 %v3990, 0.01
        %v4080 = vmul.f32 %v3993, 0.01
        %v4081 = vmul.f32 %v3995, 0.01
        %v4082 = vmul.f32 %v3998, 0.01
        %v4083 = vmul.f32 %v4000, 0.01
        %v4084 = vmul.f32 %v4003, 0.01
        %v4085 = vmul.f32 %v4005, 0.01
        %v4086 = vmul.f32 %v4008, 0.01
        %v4087 = vmul.f32 %v4010, 0.01
        %v4088 = vmul.f32 %v4013, 0.01
        %v4089 = vmul.f32 %v4015, 0.01
        %v4090 = vmul.f32 %v4018, 0.01
        %v4091 = vmul.f32 %v4020, 0.01
        %v4092 = vmul.f32 %v4023, 0.01
        %v4093 = vmul.f32 %v4025, 0.01
        %v4094 = vmul.f32 %v4028, 0.01
        %v4095 = vmul.f32 %v4030, 0.01
        %v4096 = vsel %vm4032, %v3953, %v4064
        %v4097 = vsel %vm4033, %v3955, %v4065
        %v4098 = vsel %vm4034, %v3958, %v4066
        %v4099 = vsel %vm4035, %v3960, %v4067
        %v4100 = vsel %vm4036, %v3963, %v4068
        %v4101 = vsel %vm4037, %v3965, %v4069
        %v4102 = vsel %vm4038, %v3968, %v4070
        %v4103 = vsel %vm4039, %v3970, %v4071
        %v4104 = vsel %vm4040, %v3973, %v4072
        %v4105 = vsel %vm4041, %v3975, %v4073
        %v4106 = vsel %vm4042, %v3978, %v4074
        %v4107 = vsel %vm4043, %v3980, %v4075
        %v4108 = vsel %vm4044, %v3983, %v4076
        %v4109 = vsel %vm4045, %v3985, %v4077
        %v4110 = vsel %vm4046, %v3988, %v4078
        %v4111 = vsel %vm4047, %v3990, %v4079
        %v4112 = vsel %vm4048, %v3993, %v4080
        %v4113 = vsel %vm4049, %v3995, %v4081
        %v4114 = vsel %vm4050, %v3998, %v4082
        %v4115 = vsel %vm4051, %v4000, %v4083
        %v4116 = vsel %vm4052, %v4003, %v4084
        %v4117 = vsel %vm4053, %v4005, %v4085
        %v4118 = vsel %vm4054, %v4008, %v4086
        %v4119 = vsel %vm4055, %v4010, %v4087
        %v4120 = vsel %vm4056, %v4013, %v4088
        %v4121 = vsel %vm4057, %v4015, %v4089
        %v4122 = vsel %vm4058, %v4018, %v4090
        %v4123 = vsel %vm4059, %v4020, %v4091
        %v4124 = vsel %vm4060, %v4023, %v4092
        %v4125 = vsel %vm4061, %v4025, %v4093
        %v4126 = vsel %vm4062, %v4028, %v4094
        %v4127 = vsel %vm4063, %v4030, %v4095
        %4128 = vxpose.xlu0.b32.start [1/16] %v4096, 128
        %4129 = vxpose.xlu0.b32.cont [2/16] %v4097, 128
        %4130 = vxpose.xlu0.b32.cont [3/16] %v4098, 128
        %4131 = vxpose.xlu0.b32.cont [4/16] %v4099, 128
        %4132 = vxpose.xlu0.b32.cont [5/16] %v4100, 128
        %4133 = vxpose.xlu0.b32.cont [6/16] %v4101, 128
        %4134 = vxpose.xlu0.b32.cont [7/16] %v4102, 128
        %4135 = vxpose.xlu0.b32.cont [8/16] %v4103, 128
        %4136 = vxpose.xlu0.b32.cont [9/16] %v4104, 128
        %4137 = vxpose.xlu0.b32.cont [10/16] %v4105, 128
        %4138 = vxpose.xlu0.b32.cont [11/16] %v4106, 128
        %4139 = vxpose.xlu0.b32.cont [12/16] %v4107, 128
        %4140 = vxpose.xlu0.b32.cont [13/16] %v4108, 128
        %4141 = vxpose.xlu0.b32.cont [14/16] %v4109, 128
        %4142 = vxpose.xlu0.b32.cont [15/16] %v4110, 128
        %4143 = vxpose.xlu0.b32.end [16/16] %v4111, 128
        %v4144 = vpop.trf.xlu0
        %v4145 = vpop.trf.xlu0
        %v4146 = vpop.trf.xlu0
        %v4147 = vpop.trf.xlu0
        %v4148 = vpop.trf.xlu0
        %v4149 = vpop.trf.xlu0
        %v4150 = vpop.trf.xlu0
        %v4151 = vpop.trf.xlu0
        %v4152 = vpop.trf.xlu0
        %v4153 = vpop.trf.xlu0
        %v4154 = vpop.trf.xlu0
        %v4155 = vpop.trf.xlu0
        %v4156 = vpop.trf.xlu0
        %v4157 = vpop.trf.xlu0
        %v4158 = vpop.trf.xlu0
        %v4159 = vpop.trf.xlu0
        %4160 = vxpose.xlu0.b32.start [1/16] %v4112, 128
        %4161 = vxpose.xlu0.b32.cont [2/16] %v4113, 128
        %4162 = vxpose.xlu0.b32.cont [3/16] %v4114, 128
        %4163 = vxpose.xlu0.b32.cont [4/16] %v4115, 128
        %4164 = vxpose.xlu0.b32.cont [5/16] %v4116, 128
        %4165 = vxpose.xlu0.b32.cont [6/16] %v4117, 128
        %4166 = vxpose.xlu0.b32.cont [7/16] %v4118, 128
        %4167 = vxpose.xlu0.b32.cont [8/16] %v4119, 128
        %4168 = vxpose.xlu0.b32.cont [9/16] %v4120, 128
        %4169 = vxpose.xlu0.b32.cont [10/16] %v4121, 128
        %4170 = vxpose.xlu0.b32.cont [11/16] %v4122, 128
        %4171 = vxpose.xlu0.b32.cont [12/16] %v4123, 128
        %4172 = vxpose.xlu0.b32.cont [13/16] %v4124, 128
        %4173 = vxpose.xlu0.b32.cont [14/16] %v4125, 128
        %4174 = vxpose.xlu0.b32.cont [15/16] %v4126, 128
        %4175 = vxpose.xlu0.b32.end [16/16] %v4127, 128
        %v4176 = vpop.trf.xlu0
        %v4177 = vpop.trf.xlu0
        %v4178 = vpop.trf.xlu0
        %v4179 = vpop.trf.xlu0
        %v4180 = vpop.trf.xlu0
        %v4181 = vpop.trf.xlu0
        %v4182 = vpop.trf.xlu0
        %v4183 = vpop.trf.xlu0
        %v4184 = vpop.trf.xlu0
        %v4185 = vpop.trf.xlu0
        %v4186 = vpop.trf.xlu0
        %v4187 = vpop.trf.xlu0
        %v4188 = vpop.trf.xlu0
        %v4189 = vpop.trf.xlu0
        %v4190 = vpop.trf.xlu0
        %v4191 = vpop.trf.xlu0
        %v4192 = vld [vmem:[%s13] sm:$0xff]
        %v4193 = vld [vmem:[%s13 + $0x8] sm:$0xff]
        %4195 = vset.pattern.permute.xlu0 0
        %4196 = vperm.xlu0 %4195, %v4192
        %v4197 = vpop.permute.xlu0 %4196
        %4200 = vset.pattern.permute.xlu0 0
        %4201 = vperm.xlu0 %4200, %v4193
        %v4202 = vpop.permute.xlu0 %4201
        %v4204 = vmul.f32 %v4144, %v4197
        %v4205 = vmul.f32 %v4176, %v4197
        %v4206 = vmul.f32 %v4145, %v4202
        %v4207 = vmul.f32 %v4177, %v4202
        %v4208 = vadd.f32 %v4204, %v4206
        %v4209 = vrot.slane %v4208, 4
        %v4210 = vadd.f32 %v4208, %v4209
        %v4211 = vrot.slane %v4210, 2
        %v4212 = vadd.f32 %v4210, %v4211
        %v4213 = vrot.slane %v4212, 1
        %v4214 = vadd.f32 %v4212, %v4213
        %v4215 = vadd.f32 %v4205, %v4207
        %v4216 = vrot.slane %v4215, 4
        %v4217 = vadd.f32 %v4215, %v4216
        %v4218 = vrot.slane %v4217, 2
        %v4219 = vadd.f32 %v4217, %v4218
        %v4220 = vrot.slane %v4219, 1
        %v4221 = vadd.f32 %v4219, %v4220
        %v4222 = vld [vmem:[#allocation2] sm:$0x1]
        %4224 = vset.pattern.permute.xlu0 0
        %4225 = vperm.xlu0 %4224, %v4222
        %v4226 = vpop.permute.xlu0 %4225
        %v4228 = vperm.slane %v4226, 0
        %v4229 = vadd.f32 %v4214, %v4228
        %v4230 = vadd.f32 %v4221, %v4228
        %v4231 = vxor.u32 %v4229, 2147483648
        %v4232 = vxor.u32 %v4230, 2147483648
        %v4233 = vmul.f32 %v4231, 1.442695
        %v4234 = vpow.pop %v4233
        %v4235 = vmul.f32 %v4232, 1.442695
        %v4236 = vpow.pop %v4235
        %v4237 = vadd.f32 %v4234, 1.0
        %v4238 = vadd.f32 %v4236, 1.0
        %v4239 = vrcp.pop %v4237
        %v4240 = vmul.f32 %v4237, %v4239
        %v4241 = vsub.f32 1.0, %v4240
        %v4242 = vmul.f32 %v4239, %v4241
        %v4243 = vadd.f32 %v4239, %v4242
        %vm4244 = vweird.f32 %v4237
        %vm4245 = vweird.f32 %v4239
        %vm4246 = vmor %vm4244, %vm4245
        %v4247 = vsel %vm4246, %v4239, %v4243
        %v4248 = vand.u32 2147483647, %v4237
        %vm4249 = vcmp.eq.f32.partialorder %v4248, 8.507059e+37
        %v4250 = vand.u32 %v4237, 2147483648
        %v4251 = vor.u32 1.1754944e-38, %v4250
        %v4252 = vsel %vm4249, %v4251, %v4247
        %v4253 = vmul.f32 1.0, %v4252
        %v4254 = vrcp.pop %v4238
        %v4255 = vmul.f32 %v4238, %v4254
        %v4256 = vsub.f32 1.0, %v4255
        %v4257 = vmul.f32 %v4254, %v4256
        %v4258 = vadd.f32 %v4254, %v4257
        %vm4259 = vweird.f32 %v4238
        %vm4260 = vweird.f32 %v4254
        %vm4261 = vmor %vm4259, %vm4260
        %v4262 = vsel %vm4261, %v4254, %v4258
        %v4263 = vand.u32 2147483647, %v4238
        %vm4264 = vcmp.eq.f32.partialorder %v4263, 8.507059e+37
        %v4265 = vand.u32 %v4238, 2147483648
        %v4266 = vor.u32 1.1754944e-38, %v4265
        %v4267 = vsel %vm4264, %v4266, %v4262
        %v4268 = vmul.f32 1.0, %v4267
        %v4271 = vrot.slane %v4268, 7
        %vm4272 = vcmask 1040384
        %v4273 = vsel %vm4272, %v4253, %v4271
        %v4275 = vlaneseq
        %vm4276 = vcmp.ge.s32.totalorder %v4275, 0
        %vm4277 = vcmp.lt.s32.totalorder %v4275, 256
        %vm4278 = vmand %vm4276, %vm4277
        %4279 = vst.msk [vmem:[%s507] sm:$0x3] %vm4278, %v4273
        %s4280 = sand.u32 %s360, 1
        %s4281 = scalar_lea.sflag [#allocation5], %s4280
        %s4282 = sand.u32 %s360, 1
        %s4283 = smul.addr %s4282, 2
        %s4284 = scalar_lea.vmem [#allocation6], %s4283
        // Predicated region
        $region85: #{tpu_custom_call.1} parent=79 // pred_check
          %p4285 = pneg %p370
        $region86: #{tpu_custom_call.1} parent=79 // pred_check_branch
          %4287 = sbr.rel (%p4285) target = $region88
        $region87: #{tpu_custom_call.1} parent=79 // pred_region
          %s4288 = smul.u32 2, %s32
          %4290 = vsyncadd %s4281, 0
          %s4291 = scalar_lea.hbm %s15, %s4288
          %s4293 = sshll.u32 %s4284, 4
          %s4294 = int_to_ptr.vmem [resolvable:$true] %s4293
          %s4295 = sshll.u32 %s4291, 4
          %s4296 = int_to_ptr.hbm [resolvable:$true] %s4295
          %4298 = dma.vmem_to_hbm [thread:$0]  %s4294, 32, %s4296, %s4281
        $region88: #{tpu_custom_call.1} parent=79 // pred_fallthru
          _
      $region80: #{tpu_custom_call.1} parent=5 // pred_fallthru
        _
      %p4299 = scmp.le.s32.totalorder 2, %s27
      // Predicated region
      $region89: #{tpu_custom_call.1} parent=5 // pred_check
        %p4300 = pneg %p4299
      $region90: #{tpu_custom_call.1} parent=5 // pred_check_branch
        %4302 = sbr.rel (%p4300) target = $region92
      $region91: #{tpu_custom_call.1} parent=5 // pred_region
        %s4303 = ssub.s32 %s27, 2
        // Predicated region
        $region93: #{tpu_custom_call.1} parent=91 // pred_check
          %p4304 = pneg %p376
        $region94: #{tpu_custom_call.1} parent=91 // pred_check_branch
          %4306 = sbr.rel (%p4304) target = $region96
        $region95: #{tpu_custom_call.1} parent=91 // pred_region
          %s4307 = sand.u32 %s361, 1
          %s4308 = scalar_lea.sflag [#allocation5], %s4307
          %s4309 = sand.u32 %s361, 1
          %s4310 = smul.addr %s4309, 2
          %s4311 = scalar_lea.vmem [#allocation6], %s4310
          %4313 = dma.done %s4308, 32
        $region96: #{tpu_custom_call.1} parent=91 // pred_fallthru
          _
      $region92: #{tpu_custom_call.1} parent=5 // pred_fallthru
        _
    $region6: #{tpu_custom_call.1} parent=1 // loop_footer
      %s31 = sadd.s32 1, %s27
    $region7: #{tpu_custom_call.1} parent=1 // loop_footer_branch
      %26 = sbr.rel target = $region3
    $region8: #{tpu_custom_call.1} parent=1 // loop_exit
      _
    %4314 = vsyncpa [#allocation4], 1
    %s4315 = scalar_lea.sflag [#allocation4], 1
    %4316 = vsyncpa %s4315, 1
    %4317 = vsyncpa [#allocation5], 1
    %s4318 = scalar_lea.sflag [#allocation5], 1
    %4319 = vsyncpa %s4318, 1

</llo_original>
